<compile_context>
chip_gen: v6e
topology: v6e:2x2x1
jax: 0.10.0
libtpu: 0.0.40
codegen_flags: <defaults>
</compile_context>

<pallas_src>
import functools
import math

import jax
import jax.numpy as jnp
from jax import lax
from jax.experimental import pallas as pl
from jax.experimental.pallas import tpu as pltpu


def _round_up(x, m):
    return ((x + m - 1) // m) * m


def _ceil_div(a, b):
    return -(-a // b)


def _vmem_capacity_bytes():
    # Generation-aware budgets (review): ~VMEM/4 working set, ~VMEM/2 limit.
    # The 64 MiB fallback is safe on every generation (including v7x).
    try:
        return int(pltpu.get_tpu_info().vmem_capacity_bytes)
    except Exception:
        return 64 << 20


def _conv_bn_act_kernel(x_ref, w_ref, b_ref, o_ref, *, taps, wi, tr):
    """Shift-and-accumulate conv + folded BN + LeakyReLU for one row block.

    x_ref: ((tr+taps)*wi, CI) bf16  flattened, halo'd stride-1 input row block
    w_ref: (taps*taps, CI, OCt) bf16 folded conv weight (one [CI,OCt] per tap)
    b_ref: (1, OCt) f32             folded BN bias
    o_ref: (tr*wi, OCt) bf16        output tile; row t*wi + w <-> output (t, w)
    """
    r = tr * wi
    acc = jnp.zeros((r, o_ref.shape[-1]), jnp.float32)
    for qh in range(taps):
        for qw in range(taps):
            off = qh * wi + qw                     # static row offset per tap
            acc += jnp.dot(x_ref[off:off + r, :], w_ref[qh * taps + qw],
                           preferred_element_type=jnp.float32)
    y = acc + b_ref[...]
    # LeakyReLU(0.1) as a single max (one VALU op instead of compare+select).
    o_ref[...] = jnp.maximum(y, 0.1 * y).astype(o_ref.dtype)


def basic_conv_forward(x_nchw, conv_w, gamma, beta, run_mean, run_var,
                       *, stride=1, eps=1e-5, out_dtype=jnp.bfloat16,
                       compute_dtype=jnp.bfloat16, target_rows=2048):
    """BasicConv forward: Conv2d(pad=K//2, bias=False) -> BN (inference) -> LeakyReLU(0.1).

    x_nchw: [N, C, H, W]; conv_w: [OC, C, K, K] (PyTorch layouts).  Returns NCHW bf16.
    """
    N, C, H, W = x_nchw.shape
    OC, _, K, _ = conv_w.shape
    s = int(stride)
    pad = K // 2
    OH = (H + 2 * pad - K) // s + 1
    OW = (W + 2 * pad - K) // s + 1

    # Strided convs become stride-1 convs over a space-to-depth input:
    # KK = ceil(K/s) taps per axis, CI = s*s*C channels.
    KK = _ceil_div(K, s)
    Cr = _round_up(C, 8)
    CI = s * s * Cr

    # Post-s2d row width (sublane-major); CI is the lane-dense last dim.
    # NOTE: for OC << 128 layers (like the test case) OCp=128 still forces
    # output-lane padding; the bf16 output halves that write amplification.
    WI = _round_up(max(_ceil_div(W + 2 * pad, s), OW + KK - 1), 8)

    # ---- output-channel tiling: bound the resident folded-weight block ----
    OCp0 = _round_up(OC, 128)
    OCB = max(1, _ceil_div(KK * KK * CI * OCp0 * 2, 4 << 20))
    OCt = _round_up(_ceil_div(OCp0, OCB), 128)
    OCB = _ceil_div(OCp0, OCt)
    OCp = OCt * OCB

    # ---- generation-aware VMEM policy ----
    vmem_cap = _vmem_capacity_bytes()
    ws_budget = vmem_cap // 4              # ~16 MiB on v7x, ~32 MiB on v5e/v6e

    def ws_bytes(tr):
        r = tr * WI
        return (2 * (tr + KK) * WI * CI * 2    # bf16 input row blocks (double-buffered)
                + 2 * r * OCt * 2              # bf16 output tiles (double-buffered)
                + 2 * KK * KK * CI * OCt * 2   # folded weight (2 bufs, DMA'd once)
                + 2 * OCt * 4                  # bias
                + 2 * r * OCt * 4              # f32 accumulator + matmul result
                + r * CI * 2)                  # per-tap input slice

    # TR output rows per block: keep TR*WI a multiple of 128 (full MXU passes,
    # unmasked stores) when possible, target ~target_rows matmul rows per grid
    # step, and shrink until the working set fits the budget.
    talign = max(1, 128 // math.gcd(WI, 128))
    tr = max(talign, (max(1, target_rows // WI) // talign) * talign)
    tr = min(tr, _round_up(OH, talign))
    while tr > talign and ws_bytes(tr) > ws_budget:
        tr -= talign
    while tr > 1 and ws_bytes(tr) > ws_budget:
        tr -= 1
    NB = _ceil_div(OH, tr)

    # v7x dual-TensorCore balance (harmless on 1-TC parts): keep the number of
    # row blocks even by splitting rows finer -- no extra padded work.
    if (N * NB) % 2 == 1:
        if NB == 1:
            if OH >= 2:
                NB = 2
        else:
            NB += 1
        tr = _ceil_div(OH, NB)
    TR = max(1, tr)
    TRin = TR + KK                       # +1 halo row of slack for flat slices
    R = TR * WI

    # ---- glue: NCHW -> NHWC (bf16), pad, space-to-depth, halo'd row blocks ----
    HI = max(NB * TR + KK, _ceil_div(H + 2 * pad, s))
    Hp, Wq = HI * s, WI * s
    x = jnp.transpose(x_nchw, (0, 2, 3, 1)).astype(compute_dtype)      # [N,H,W,C]
    x = jnp.pad(x, ((0, 0), (pad, Hp - H - pad), (pad, Wq - W - pad), (0, Cr - C)))
    if s > 1:
        x = x.reshape(N, HI, s, WI, s, Cr)
        x = jnp.transpose(x, (0, 1, 3, 2, 4, 5)).reshape(N, HI, WI, CI)
    if NB == 1:
        xg = x[:, :TRin]
    else:
        xg = jnp.stack([x[:, b * TR:b * TR + TRin] for b in range(NB)], axis=1)
    xg = xg.reshape(N * NB, TRin * WI, CI)

    # ---- fold BN (inference) into the conv weight / per-channel bias ----
    scale = (gamma.astype(jnp.float32) /
             jnp.sqrt(run_var.astype(jnp.float32) + eps))               # [OC]
    bias = beta.astype(jnp.float32) - run_mean.astype(jnp.float32) * scale
    wf = jnp.transpose(conv_w.astype(jnp.float32), (2, 3, 1, 0)) * scale    # [K,K,C,OC]
    wf = jnp.pad(wf, ((0, KK * s - K), (0, KK * s - K), (0, Cr - C), (0, 0)))
    wf = wf.reshape(KK, s, KK, s, Cr, OC)
    wf = jnp.transpose(wf, (0, 2, 1, 3, 4, 5)).reshape(KK * KK, CI, OC)
    wf = jnp.pad(wf, ((0, 0), (0, 0), (0, OCp - OC))).astype(compute_dtype)
    biasp = jnp.pad(bias, (0, OCp - OC)).reshape(1, OCp).astype(jnp.float32)

    kernel = functools.partial(_conv_bn_act_kernel, taps=KK, wi=WI, tr=TR)
    cost = pl.CostEstimate(
        flops=2 * (N * NB) * R * CI * OCp * KK * KK,
        transcendentals=0,
        bytes_accessed=(xg.size * 2 * OCB + wf.size * 2 + biasp.size * 4
                        + (N * NB) * R * OCp * 2))

    out = pl.pallas_call(
        kernel,
        out_shape=jax.ShapeDtypeStruct((N * NB, R, OCp), out_dtype),
        grid_spec=pltpu.PrefetchScalarGridSpec(
            num_scalar_prefetch=0,
            grid=(N * NB, OCB),
            in_specs=[
                pl.BlockSpec((None, TRin * WI, CI), lambda i, j: (i, 0, 0)),
                pl.BlockSpec((KK * KK, CI, OCt), lambda i, j: (0, 0, j)),
                pl.BlockSpec((1, OCt), lambda i, j: (0, j)),
            ],
            out_specs=pl.BlockSpec((None, R, OCt), lambda i, j: (i, 0, j)),
        ),
        compiler_params=pltpu.CompilerParams(
            dimension_semantics=("parallel", "parallel"),
            vmem_limit_bytes=int(vmem_cap // 2)),
        cost_estimate=cost,
    )(xg, wf, biasp)

    # strip padded rows / garbage cols / padded channels; back to NCHW.
    out = out.reshape(N, NB * TR, WI, OCp)[:, :OH, :OW, :OC]
    return jnp.transpose(out, (0, 3, 1, 2))


def _reference(x_nchw, conv_w, gamma, beta, run_mean, run_var, *, stride=1, eps=1e-5):
    K = conv_w.shape[-1]
    y = lax.conv_general_dilated(
        x_nchw.astype(jnp.float32), conv_w.astype(jnp.float32),
        window_strides=(stride, stride),
        padding=[(K // 2, K // 2), (K // 2, K // 2)],
        dimension_numbers=("NCHW", "OIHW", "NCHW"))
    scale = (gamma / jnp.sqrt(run_var + eps)).reshape(1, -1, 1, 1)
    bias = (beta - run_mean * gamma / jnp.sqrt(run_var + eps)).reshape(1, -1, 1, 1)
    y = y * scale + bias
    return jnp.where(y > 0, y, 0.1 * y)


if __name__ == "__main__":
    # BasicConv(in_channels=4, out_channels=8, kernel_size=3, stride=1)
    N, C, H, W = 2, 4, 16, 16
    OC, K, stride = 8, 3, 1

    key = jax.random.PRNGKey(0)
    k_x, k_w, k_g, k_b, k_m, k_v = jax.random.split(key, 6)
    x = jax.random.normal(k_x, (N, C, H, W), dtype=jnp.float32)
    conv_w = jax.random.normal(k_w, (OC, C, K, K), dtype=jnp.float32) * 0.1
    gamma = jax.random.normal(k_g, (OC,), dtype=jnp.float32) * 0.1 + 1.0
    beta = jax.random.normal(k_b, (OC,), dtype=jnp.float32) * 0.1
    run_mean = jax.random.normal(k_m, (OC,), dtype=jnp.float32) * 0.1
    run_var = jax.random.uniform(k_v, (OC,), dtype=jnp.float32, minval=0.5, maxval=1.5)

    fwd = jax.jit(functools.partial(basic_conv_forward, stride=stride))
    out = jax.block_until_ready(fwd(x, conv_w, gamma, beta, run_mean, run_var))

    ref = _reference(x, conv_w, gamma, beta, run_mean, run_var, stride=stride)
    assert out.shape == (N, OC, H, W), out.shape
    out_f32 = out.astype(jnp.float32)
    max_err = float(jnp.max(jnp.abs(out_f32 - ref)))
    # bf16 matmul inputs + bf16 output (f32 accumulation) -> widened tolerance
    assert jnp.allclose(out_f32, ref, atol=5e-2, rtol=5e-2), max_err

    print("KERNEL_OK")
</pallas_src>

<mosaic_0001>
module attributes {stable_mosaic.version = 11 : i64} {
  func.func @_conv_bn_act_kernel(%arg0: i32, %arg1: i32, %arg2: memref<1x456x8xbf16, #tpu.memory_space<vmem>>, %arg3: memref<9x8x128xbf16, #tpu.memory_space<vmem>>, %arg4: memref<1x128xf32, #tpu.memory_space<vmem>>, %arg5: memref<1x384x128xbf16, #tpu.memory_space<vmem>>) attributes {dimension_semantics = [#tpu.dimension_semantics<parallel>, #tpu.dimension_semantics<parallel>], iteration_bounds = array<i64: 2, 1>, scalar_prefetch = 0 : i64, scratch_operands = 0 : i64, tpu.core_type = #tpu.core_type<tc>, window_params = [{transform_indices = @transform_0, window_bounds = array<i64: 1, 456, 8>}, {transform_indices = @transform_1, window_bounds = array<i64: 9, 8, 128>}, {transform_indices = @transform_2, window_bounds = array<i64: 1, 128>}, {transform_indices = @transform_3, window_bounds = array<i64: 1, 384, 128>}]} {
    %cst = arith.constant 0.000000e+00 : f32
    %0 = vector.broadcast %cst : f32 to vector<384x128xf32>
    %c0 = arith.constant 0 : index
    %c0_0 = arith.constant 0 : index
    %c0_1 = arith.constant 0 : index
    %1 = vector.load %arg2[%c0, %c0_0, %c0_1] : memref<1x456x8xbf16, #tpu.memory_space<vmem>>, vector<1x384x8xbf16>
    %2 = vector.shape_cast %1 : vector<1x384x8xbf16> to vector<384x8xbf16>
    %c0_2 = arith.constant 0 : index
    %c0_3 = arith.constant 0 : index
    %c0_4 = arith.constant 0 : index
    %3 = vector.load %arg3[%c0_2, %c0_3, %c0_4] : memref<9x8x128xbf16, #tpu.memory_space<vmem>>, vector<1x8x128xbf16>
    %4 = vector.shape_cast %3 : vector<1x8x128xbf16> to vector<8x128xbf16>
    %cst_5 = arith.constant dense<0.000000e+00> : vector<384x128xf32>
    %5 = tpu.matmul %2, %4, %cst_5 {dimension_numbers = #tpu.dot_dimension_numbers<[1], [0], [0], [1], [0, 0, 1, 1], [], []>} : vector<384x8xbf16>, vector<8x128xbf16>, vector<384x128xf32> -> vector<384x128xf32>
    %6 = arith.addf %0, %5 : vector<384x128xf32>
    %c0_6 = arith.constant 0 : index
    %c1 = arith.constant 1 : index
    %c0_7 = arith.constant 0 : index
    %7 = vector.load %arg2[%c0_6, %c1, %c0_7] : memref<1x456x8xbf16, #tpu.memory_space<vmem>>, vector<1x384x8xbf16>
    %8 = vector.shape_cast %7 : vector<1x384x8xbf16> to vector<384x8xbf16>
    %c1_8 = arith.constant 1 : index
    %c0_9 = arith.constant 0 : index
    %c0_10 = arith.constant 0 : index
    %9 = vector.load %arg3[%c1_8, %c0_9, %c0_10] : memref<9x8x128xbf16, #tpu.memory_space<vmem>>, vector<1x8x128xbf16>
    %10 = vector.shape_cast %9 : vector<1x8x128xbf16> to vector<8x128xbf16>
    %cst_11 = arith.constant dense<0.000000e+00> : vector<384x128xf32>
    %11 = tpu.matmul %8, %10, %cst_11 {dimension_numbers = #tpu.dot_dimension_numbers<[1], [0], [0], [1], [0, 0, 1, 1], [], []>} : vector<384x8xbf16>, vector<8x128xbf16>, vector<384x128xf32> -> vector<384x128xf32>
    %12 = arith.addf %6, %11 : vector<384x128xf32>
    %c0_12 = arith.constant 0 : index
    %c2 = arith.constant 2 : index
    %c0_13 = arith.constant 0 : index
    %13 = vector.load %arg2[%c0_12, %c2, %c0_13] : memref<1x456x8xbf16, #tpu.memory_space<vmem>>, vector<1x384x8xbf16>
    %14 = vector.shape_cast %13 : vector<1x384x8xbf16> to vector<384x8xbf16>
    %c2_14 = arith.constant 2 : index
    %c0_15 = arith.constant 0 : index
    %c0_16 = arith.constant 0 : index
    %15 = vector.load %arg3[%c2_14, %c0_15, %c0_16] : memref<9x8x128xbf16, #tpu.memory_space<vmem>>, vector<1x8x128xbf16>
    %16 = vector.shape_cast %15 : vector<1x8x128xbf16> to vector<8x128xbf16>
    %cst_17 = arith.constant dense<0.000000e+00> : vector<384x128xf32>
    %17 = tpu.matmul %14, %16, %cst_17 {dimension_numbers = #tpu.dot_dimension_numbers<[1], [0], [0], [1], [0, 0, 1, 1], [], []>} : vector<384x8xbf16>, vector<8x128xbf16>, vector<384x128xf32> -> vector<384x128xf32>
    %18 = arith.addf %12, %17 : vector<384x128xf32>
    %c0_18 = arith.constant 0 : index
    %c24 = arith.constant 24 : index
    %c0_19 = arith.constant 0 : index
    %19 = vector.load %arg2[%c0_18, %c24, %c0_19] : memref<1x456x8xbf16, #tpu.memory_space<vmem>>, vector<1x384x8xbf16>
    %20 = vector.shape_cast %19 : vector<1x384x8xbf16> to vector<384x8xbf16>
    %c3 = arith.constant 3 : index
    %c0_20 = arith.constant 0 : index
    %c0_21 = arith.constant 0 : index
    %21 = vector.load %arg3[%c3, %c0_20, %c0_21] : memref<9x8x128xbf16, #tpu.memory_space<vmem>>, vector<1x8x128xbf16>
    %22 = vector.shape_cast %21 : vector<1x8x128xbf16> to vector<8x128xbf16>
    %cst_22 = arith.constant dense<0.000000e+00> : vector<384x128xf32>
    %23 = tpu.matmul %20, %22, %cst_22 {dimension_numbers = #tpu.dot_dimension_numbers<[1], [0], [0], [1], [0, 0, 1, 1], [], []>} : vector<384x8xbf16>, vector<8x128xbf16>, vector<384x128xf32> -> vector<384x128xf32>
    %24 = arith.addf %18, %23 : vector<384x128xf32>
    %c0_23 = arith.constant 0 : index
    %c25 = arith.constant 25 : index
    %c0_24 = arith.constant 0 : index
    %25 = vector.load %arg2[%c0_23, %c25, %c0_24] : memref<1x456x8xbf16, #tpu.memory_space<vmem>>, vector<1x384x8xbf16>
    %26 = vector.shape_cast %25 : vector<1x384x8xbf16> to vector<384x8xbf16>
    %c4 = arith.constant 4 : index
    %c0_25 = arith.constant 0 : index
    %c0_26 = arith.constant 0 : index
    %27 = vector.load %arg3[%c4, %c0_25, %c0_26] : memref<9x8x128xbf16, #tpu.memory_space<vmem>>, vector<1x8x128xbf16>
    %28 = vector.shape_cast %27 : vector<1x8x128xbf16> to vector<8x128xbf16>
    %cst_27 = arith.constant dense<0.000000e+00> : vector<384x128xf32>
    %29 = tpu.matmul %26, %28, %cst_27 {dimension_numbers = #tpu.dot_dimension_numbers<[1], [0], [0], [1], [0, 0, 1, 1], [], []>} : vector<384x8xbf16>, vector<8x128xbf16>, vector<384x128xf32> -> vector<384x128xf32>
    %30 = arith.addf %24, %29 : vector<384x128xf32>
    %c0_28 = arith.constant 0 : index
    %c26 = arith.constant 26 : index
    %c0_29 = arith.constant 0 : index
    %31 = vector.load %arg2[%c0_28, %c26, %c0_29] : memref<1x456x8xbf16, #tpu.memory_space<vmem>>, vector<1x384x8xbf16>
    %32 = vector.shape_cast %31 : vector<1x384x8xbf16> to vector<384x8xbf16>
    %c5 = arith.constant 5 : index
    %c0_30 = arith.constant 0 : index
    %c0_31 = arith.constant 0 : index
    %33 = vector.load %arg3[%c5, %c0_30, %c0_31] : memref<9x8x128xbf16, #tpu.memory_space<vmem>>, vector<1x8x128xbf16>
    %34 = vector.shape_cast %33 : vector<1x8x128xbf16> to vector<8x128xbf16>
    %cst_32 = arith.constant dense<0.000000e+00> : vector<384x128xf32>
    %35 = tpu.matmul %32, %34, %cst_32 {dimension_numbers = #tpu.dot_dimension_numbers<[1], [0], [0], [1], [0, 0, 1, 1], [], []>} : vector<384x8xbf16>, vector<8x128xbf16>, vector<384x128xf32> -> vector<384x128xf32>
    %36 = arith.addf %30, %35 : vector<384x128xf32>
    %c0_33 = arith.constant 0 : index
    %c48 = arith.constant 48 : index
    %c0_34 = arith.constant 0 : index
    %37 = vector.load %arg2[%c0_33, %c48, %c0_34] : memref<1x456x8xbf16, #tpu.memory_space<vmem>>, vector<1x384x8xbf16>
    %38 = vector.shape_cast %37 : vector<1x384x8xbf16> to vector<384x8xbf16>
    %c6 = arith.constant 6 : index
    %c0_35 = arith.constant 0 : index
    %c0_36 = arith.constant 0 : index
    %39 = vector.load %arg3[%c6, %c0_35, %c0_36] : memref<9x8x128xbf16, #tpu.memory_space<vmem>>, vector<1x8x128xbf16>
    %40 = vector.shape_cast %39 : vector<1x8x128xbf16> to vector<8x128xbf16>
    %cst_37 = arith.constant dense<0.000000e+00> : vector<384x128xf32>
    %41 = tpu.matmul %38, %40, %cst_37 {dimension_numbers = #tpu.dot_dimension_numbers<[1], [0], [0], [1], [0, 0, 1, 1], [], []>} : vector<384x8xbf16>, vector<8x128xbf16>, vector<384x128xf32> -> vector<384x128xf32>
    %42 = arith.addf %36, %41 : vector<384x128xf32>
    %c0_38 = arith.constant 0 : index
    %c49 = arith.constant 49 : index
    %c0_39 = arith.constant 0 : index
    %43 = vector.load %arg2[%c0_38, %c49, %c0_39] : memref<1x456x8xbf16, #tpu.memory_space<vmem>>, vector<1x384x8xbf16>
    %44 = vector.shape_cast %43 : vector<1x384x8xbf16> to vector<384x8xbf16>
    %c7 = arith.constant 7 : index
    %c0_40 = arith.constant 0 : index
    %c0_41 = arith.constant 0 : index
    %45 = vector.load %arg3[%c7, %c0_40, %c0_41] : memref<9x8x128xbf16, #tpu.memory_space<vmem>>, vector<1x8x128xbf16>
    %46 = vector.shape_cast %45 : vector<1x8x128xbf16> to vector<8x128xbf16>
    %cst_42 = arith.constant dense<0.000000e+00> : vector<384x128xf32>
    %47 = tpu.matmul %44, %46, %cst_42 {dimension_numbers = #tpu.dot_dimension_numbers<[1], [0], [0], [1], [0, 0, 1, 1], [], []>} : vector<384x8xbf16>, vector<8x128xbf16>, vector<384x128xf32> -> vector<384x128xf32>
    %48 = arith.addf %42, %47 : vector<384x128xf32>
    %c0_43 = arith.constant 0 : index
    %c50 = arith.constant 50 : index
    %c0_44 = arith.constant 0 : index
    %49 = vector.load %arg2[%c0_43, %c50, %c0_44] : memref<1x456x8xbf16, #tpu.memory_space<vmem>>, vector<1x384x8xbf16>
    %50 = vector.shape_cast %49 : vector<1x384x8xbf16> to vector<384x8xbf16>
    %c8 = arith.constant 8 : index
    %c0_45 = arith.constant 0 : index
    %c0_46 = arith.constant 0 : index
    %51 = vector.load %arg3[%c8, %c0_45, %c0_46] : memref<9x8x128xbf16, #tpu.memory_space<vmem>>, vector<1x8x128xbf16>
    %52 = vector.shape_cast %51 : vector<1x8x128xbf16> to vector<8x128xbf16>
    %cst_47 = arith.constant dense<0.000000e+00> : vector<384x128xf32>
    %53 = tpu.matmul %50, %52, %cst_47 {dimension_numbers = #tpu.dot_dimension_numbers<[1], [0], [0], [1], [0, 0, 1, 1], [], []>} : vector<384x8xbf16>, vector<8x128xbf16>, vector<384x128xf32> -> vector<384x128xf32>
    %54 = arith.addf %48, %53 : vector<384x128xf32>
    %c0_48 = arith.constant 0 : index
    %c0_49 = arith.constant 0 : index
    %55 = vector.load %arg4[%c0_48, %c0_49] : memref<1x128xf32, #tpu.memory_space<vmem>>, vector<1x128xf32>
    %56 = vector.broadcast %55 : vector<1x128xf32> to vector<384x128xf32>
    %57 = arith.addf %54, %56 : vector<384x128xf32>
    %cst_50 = arith.constant 1.000000e-01 : f32
    %58 = vector.broadcast %cst_50 : f32 to vector<384x128xf32>
    %59 = arith.mulf %58, %57 : vector<384x128xf32>
    %60 = arith.maximumf %57, %59 : vector<384x128xf32>
    %61 = arith.truncf %60 : vector<384x128xf32> to vector<384x128xbf16>
    %c0_51 = arith.constant 0 : index
    %c0_52 = arith.constant 0 : index
    %c0_53 = arith.constant 0 : index
    %62 = vector.load %arg5[%c0_51, %c0_52, %c0_53] : memref<1x384x128xbf16, #tpu.memory_space<vmem>>, vector<1x384x128xbf16>
    %63 = vector.shape_cast %62 : vector<1x384x128xbf16> to vector<384x128xbf16>
    %64 = vector.shape_cast %61 : vector<384x128xbf16> to vector<1x384x128xbf16>
    tpu.vector_store %arg5[%c0_51, %c0_52, %c0_53], %64 {strides = array<i32>} : memref<1x384x128xbf16, #tpu.memory_space<vmem>>, vector<1x384x128xbf16>,
    return
  }
  func.func @transform_0(%arg0: i32, %arg1: i32) -> (i32, i32, i32) {
    %c0_i32 = arith.constant 0 : i32
    %c0_i32_0 = arith.constant 0 : i32
    %c0_i32_1 = arith.constant 0 : i32
    return %arg0, %c0_i32, %c0_i32_0 : i32, i32, i32
  }
  func.func @transform_1(%arg0: i32, %arg1: i32) -> (i32, i32, i32) {
    %c0_i32 = arith.constant 0 : i32
    %c0_i32_0 = arith.constant 0 : i32
    %c0_i32_1 = arith.constant 0 : i32
    return %c0_i32, %c0_i32_0, %arg1 : i32, i32, i32
  }
  func.func @transform_2(%arg0: i32, %arg1: i32) -> (i32, i32) {
    %c0_i32 = arith.constant 0 : i32
    %c0_i32_0 = arith.constant 0 : i32
    return %c0_i32, %arg1 : i32, i32
  }
  func.func @transform_3(%arg0: i32, %arg1: i32) -> (i32, i32, i32) {
    %c0_i32 = arith.constant 0 : i32
    %c0_i32_0 = arith.constant 0 : i32
    return %arg0, %c0_i32, %arg1 : i32, i32, i32
  }
}

</mosaic_0001>

<llo_original>
// kernel: basic_conv_forward.1
$region0: #{basic_conv_forward.1}
  #allocation0 [shape = 'u32[]', space=smem, size = 0x4, offset = 0x4, fixed_abs, tag = 'smem constant byte address 0x4 - core index']
  #allocation1 [shape = 'u32[144,128]{1,0:T(1,128)}', space=vmem, size = 0x12000, scoped, tag = 'internal scratch']
  %s0 = inlined_call_operand.vmem [shape: bf16[2,456,8], index: 0, kind: input, shape index: {}]
  %s1 = inlined_call_operand.vmem [shape: bf16[9,8,128], index: 1, kind: input, shape index: {}]
  %s2 = inlined_call_operand.vmem [shape: f32[1,128], index: 2, kind: input, shape index: {}]
  %s3 = inlined_call_operand.vmem [shape: bf16[2,384,128], index: 3, kind: output, shape index: {}]
  %s4 = sld [smem:[#allocation0]]
  $region45: #{basic_conv_forward.1} parent=0
    _
  %s6 = ssub.s32 1, %s4
  %s7 = scalar_select 0, %s6, %s4
  loop: start=0, step=1, limit=4
  $region2: #{basic_conv_forward.1} parent=0 // loop_pre_header
    _
  $region3: #{basic_conv_forward.1} parent=0 // loop_header
    %s9 = sphi 0, %s13
    %p10 = scmp.ge.s32.totalorder %s9, 4
    %s16 = sphi 0, %s28
    %s17 = sphi 0, %s24
    %s18 = sphi 0, %s16
    %s19 = sphi 0, %s17
    %s20 = sphi 0, %s18
    %s21 = sphi 0, %s19
    %s31 = sphi 0, %s33
    %s34 = sphi 0, %s31
    %s35 = sphi 0, %s34
    %s51 = sphi 0, %s35
    %s57 = sphi 0, %s59
    %s60 = sphi 0, %s57
    %s61 = sphi 0, %s60
    %s77 = sphi 0, %s61
    %s83 = sphi 0, %s85
    %s86 = sphi 0, %s83
    %s87 = sphi 0, %s86
    %s103 = sphi 0, %s87
    %s111 = sphi 0, %s113
    %s114 = sphi 0, %s111
    %s115 = sphi 0, %s114
    %s131 = sphi 0, %s115
  $region4: #{basic_conv_forward.1} parent=0 // loop_header_branch
    %12 = sbr.rel (%p10) target = $region8
  $region5: #{basic_conv_forward.1} parent=0 // loop_body
    %s14 = ssub.s32 %s9, 1
    %s15 = ssub.s32 %s9, 2
    %s22 = sadd.s32 1, %s17
    %p23 = scmp.ge.s32.totalorder %s22, 1
    %s24 = scalar_select %p23, 0, %s22
    %s25 = sadd.s32 1, %s16
    %s26 = scalar_select %p23, %s25, %s16
    %p27 = scmp.ge.s32.totalorder %s26, 2
    %s28 = scalar_select %p27, 0, %s26
    %s29 = ssub.s32 %s16, %s28
    %p30 = scmp.eq.s32.totalorder %s29, 0
    %s32 = sadd.s32 %s31, 1
    %s33 = scalar_select %p30, %s31, %s32
    %p36 = pneg %p30
    %p37 = scmp.eq.s32.totalorder %s9, 1
    %p38 = por %p36, %p37
    %p39 = scmp.ne.s32.totalorder %s31, %s34
    %p40 = scmp.eq.s32.totalorder %s9, 0
    %p41 = por %p39, %p40
    %p42 = scmp.ne.s32.totalorder %s31, %s34
    %p43 = scmp.eq.s32.totalorder %s14, 1
    %p44 = por %p42, %p43
    %p45 = scmp.ne.s32.totalorder %s34, %s35
    %p46 = scmp.eq.s32.totalorder %s14, 0
    %p47 = por %p45, %p46
    %p48 = scmp.ne.s32.totalorder %s34, %s35
    %p49 = scmp.eq.s32.totalorder %s15, 1
    %p50 = por %p48, %p49
    %p52 = scmp.ne.s32.totalorder %s35, %s51
    %p53 = scmp.eq.s32.totalorder %s15, 0
    %p54 = por %p52, %p53
    %s55 = ssub.s32 %s17, %s24
    %p56 = scmp.eq.s32.totalorder %s55, 0
    %s58 = sadd.s32 %s57, 1
    %s59 = scalar_select %p56, %s57, %s58
    %p62 = pneg %p56
    %p63 = scmp.eq.s32.totalorder %s9, 1
    %p64 = por %p62, %p63
    %p65 = scmp.ne.s32.totalorder %s57, %s60
    %p66 = scmp.eq.s32.totalorder %s9, 0
    %p67 = por %p65, %p66
    %p68 = scmp.ne.s32.totalorder %s57, %s60
    %p69 = scmp.eq.s32.totalorder %s14, 1
    %p70 = por %p68, %p69
    %p71 = scmp.ne.s32.totalorder %s60, %s61
    %p72 = scmp.eq.s32.totalorder %s14, 0
    %p73 = por %p71, %p72
    %p74 = scmp.ne.s32.totalorder %s60, %s61
    %p75 = scmp.eq.s32.totalorder %s15, 1
    %p76 = por %p74, %p75
    %p78 = scmp.ne.s32.totalorder %s61, %s77
    %p79 = scmp.eq.s32.totalorder %s15, 0
    %p80 = por %p78, %p79
    %s81 = ssub.s32 %s17, %s24
    %p82 = scmp.eq.s32.totalorder %s81, 0
    %s84 = sadd.s32 %s83, 1
    %s85 = scalar_select %p82, %s83, %s84
    %p88 = pneg %p82
    %p89 = scmp.eq.s32.totalorder %s9, 1
    %p90 = por %p88, %p89
    %p91 = scmp.ne.s32.totalorder %s83, %s86
    %p92 = scmp.eq.s32.totalorder %s9, 0
    %p93 = por %p91, %p92
    %p94 = scmp.ne.s32.totalorder %s83, %s86
    %p95 = scmp.eq.s32.totalorder %s14, 1
    %p96 = por %p94, %p95
    %p97 = scmp.ne.s32.totalorder %s86, %s87
    %p98 = scmp.eq.s32.totalorder %s14, 0
    %p99 = por %p97, %p98
    %p100 = scmp.ne.s32.totalorder %s86, %s87
    %p101 = scmp.eq.s32.totalorder %s15, 1
    %p102 = por %p100, %p101
    %p104 = scmp.ne.s32.totalorder %s87, %s103
    %p105 = scmp.eq.s32.totalorder %s15, 0
    %p106 = por %p104, %p105
    %s107 = ssub.s32 %s16, %s28
    %s108 = ssub.s32 %s17, %s24
    %s109 = sor.u32 %s107, %s108
    %p110 = scmp.eq.s32.totalorder %s109, 0
    %s112 = sadd.s32 %s111, 1
    %s113 = scalar_select %p110, %s111, %s112
    %p116 = pneg %p110
    %p117 = scmp.eq.s32.totalorder %s9, 1
    %p118 = por %p116, %p117
    %p119 = scmp.ne.s32.totalorder %s111, %s114
    %p120 = scmp.eq.s32.totalorder %s9, 0
    %p121 = por %p119, %p120
    %p122 = scmp.ne.s32.totalorder %s111, %s114
    %p123 = scmp.eq.s32.totalorder %s14, 1
    %p124 = por %p122, %p123
    %p125 = scmp.ne.s32.totalorder %s114, %s115
    %p126 = scmp.eq.s32.totalorder %s14, 0
    %p127 = por %p125, %p126
    %p128 = scmp.ne.s32.totalorder %s114, %s115
    %p129 = scmp.eq.s32.totalorder %s15, 1
    %p130 = por %p128, %p129
    %p132 = scmp.ne.s32.totalorder %s115, %s131
    %p133 = scmp.eq.s32.totalorder %s15, 0
    %p134 = por %p132, %p133
    %p135 = scmp.le.s32.totalorder 1, %s9
    %p136 = scmp.lt.s32.totalorder %s9, 3
    %p137 = pnand %p135, %p136
    %p138 = pneg %p137
    // Predicated region
    $region9: #{basic_conv_forward.1} parent=5 // pred_check
      _
    $region10: #{basic_conv_forward.1} parent=5 // pred_check_branch
      %140 = sbr.rel (%p137) target = $region12
    $region11: #{basic_conv_forward.1} parent=5 // pred_region
      %s141 = ssub.s32 %s9, 1
      // Predicated region
      $region13: #{basic_conv_forward.1} parent=11 // pred_check
        %p142 = pneg %p73
      $region14: #{basic_conv_forward.1} parent=11 // pred_check_branch
        %144 = sbr.rel (%p142) target = $region16
      $region15: #{basic_conv_forward.1} parent=11 // pred_region
        %p145 = scmp.lt.s32.totalorder %s19, 0
        %s146 = scalar_select %p145, %s19, 0
        %s147 = smul.addr %s146, 4
        %s148 = scalar_lea.vmem %s1, %s147
      $region16: #{basic_conv_forward.1} parent=11 // pred_fallthru
        _
      // Predicated region
      $region17: #{basic_conv_forward.1} parent=11 // pred_check
        %p149 = pneg %p99
      $region18: #{basic_conv_forward.1} parent=11 // pred_check_branch
        %151 = sbr.rel (%p149) target = $region20
      $region19: #{basic_conv_forward.1} parent=11 // pred_region
        %p152 = scmp.lt.s32.totalorder %s19, 0
        %s153 = scalar_select %p152, %s19, 0
        %s154 = scalar_lea.vmem %s2, %s153
      $region20: #{basic_conv_forward.1} parent=11 // pred_fallthru
        _
    $region12: #{basic_conv_forward.1} parent=5 // pred_fallthru
      _
    %p155 = scmp.lt.s32.totalorder %s9, 2
    // Predicated region
    $region21: #{basic_conv_forward.1} parent=5 // pred_check
      %p156 = pneg %p155
    $region22: #{basic_conv_forward.1} parent=5 // pred_check_branch
      %158 = sbr.rel (%p156) target = $region24
    $region23: #{basic_conv_forward.1} parent=5 // pred_region
      // Predicated region
      $region25: #{basic_conv_forward.1} parent=23 // pred_check
        %p159 = pneg %p41
      $region26: #{basic_conv_forward.1} parent=23 // pred_check_branch
        %161 = sbr.rel (%p159) target = $region28
      $region27: #{basic_conv_forward.1} parent=23 // pred_region
        %p162 = scmp.lt.s32.totalorder %s16, 1
        %s163 = scalar_select %p162, %s16, 1
        %s164 = smul.addr %s163, 57
        %s165 = smul.addr %s164, 4
        %s166 = scalar_lea.vmem %s0, %s165
      $region28: #{basic_conv_forward.1} parent=23 // pred_fallthru
        _
    $region24: #{basic_conv_forward.1} parent=5 // pred_fallthru
      _
    %p167 = scmp.le.s32.totalorder 1, %s9
    %p168 = scmp.lt.s32.totalorder %s9, 3
    %p169 = pnand %p167, %p168
    %p170 = pneg %p169
    // Predicated region
    $region29: #{basic_conv_forward.1} parent=5 // pred_check
      _
    $region30: #{basic_conv_forward.1} parent=5 // pred_check_branch
      %172 = sbr.rel (%p169) target = $region32
    $region31: #{basic_conv_forward.1} parent=5 // pred_region
      %s173 = ssub.s32 %s9, 1
      %p174 = scmp.lt.s32.totalorder %s18, 1
      %s175 = scalar_select %p174, %s18, 1
      %s176 = smul.addr %s175, 57
      %s177 = smul.addr %s176, 4
      %s178 = scalar_lea.vmem %s0, %s177
      %p179 = pneg %p47
      %p180 = pneg %p44
      %p181 = scmp.lt.s32.totalorder %s19, 0
      %s182 = scalar_select %p181, %s19, 0
      %s183 = smul.addr %s182, 4
      %s184 = scalar_lea.vmem %s1, %s183
      %p185 = pneg %p73
      %p186 = pneg %p70
      %p187 = scmp.lt.s32.totalorder %s19, 0
      %s188 = scalar_select %p187, %s19, 0
      %s189 = scalar_lea.vmem %s2, %s188
      %p190 = pneg %p99
      %p191 = pneg %p96
      %p192 = pneg %p127
      %p193 = pneg %p124
      %p194 = scmp.lt.s32.totalorder %s18, 1
      %s195 = scalar_select %p194, %s18, 1
      %p196 = scmp.lt.s32.totalorder %s19, 0
      %s197 = scalar_select %p196, %s19, 0
      %s198 = smul.addr %s195, 48
      %s199 = sadd.s32 %s197, %s198
      %s200 = smul.addr %s199, 4
      %s201 = scalar_lea.vmem %s3, %s200
      %p202 = scmp.lt.s32.totalorder %s18, 1
      %s203 = scalar_select %p202, %s18, 1
      %s204 = smul.addr %s203, 57
      %s205 = smul.addr %s204, 4
      %s206 = scalar_lea.vmem %s0, %s205
      %p207 = scmp.lt.s32.totalorder %s19, 0
      %s208 = scalar_select %p207, %s19, 0
      %s209 = smul.addr %s208, 4
      %s210 = scalar_lea.vmem %s1, %s209
      %p211 = scmp.lt.s32.totalorder %s19, 0
      %s212 = scalar_select %p211, %s19, 0
      %s213 = scalar_lea.vmem %s2, %s212
      %p214 = scmp.lt.s32.totalorder %s18, 1
      %s215 = scalar_select %p214, %s18, 1
      %p216 = scmp.lt.s32.totalorder %s19, 0
      %s217 = scalar_select %p216, %s19, 0
      %s218 = smul.addr %s215, 48
      %s219 = sadd.s32 %s217, %s218
      %s220 = smul.addr %s219, 4
      %s221 = scalar_lea.vmem %s3, %s220
      %v223 = vld [vmem:[%s206] sm:$0xf]
      %v224 = vld [vmem:[%s206 + $0x4] sm:$0xf]
      %v225 = vld [vmem:[%s206 + $0x8] sm:$0xf]
      %v226 = vld [vmem:[%s206 + $0xc] sm:$0xf]
      %v227 = vld [vmem:[%s206 + $0x10] sm:$0xf]
      %v228 = vld [vmem:[%s206 + $0x14] sm:$0xf]
      %v229 = vld [vmem:[%s206 + $0x18] sm:$0xf]
      %v230 = vld [vmem:[%s206 + $0x1c] sm:$0xf]
      %v231 = vld [vmem:[%s206 + $0x20] sm:$0xf]
      %v232 = vld [vmem:[%s206 + $0x24] sm:$0xf]
      %v233 = vld [vmem:[%s206 + $0x28] sm:$0xf]
      %v234 = vld [vmem:[%s206 + $0x2c] sm:$0xf]
      %v235 = vld [vmem:[%s206 + $0x30] sm:$0xf]
      %v236 = vld [vmem:[%s206 + $0x34] sm:$0xf]
      %v237 = vld [vmem:[%s206 + $0x38] sm:$0xf]
      %v238 = vld [vmem:[%s206 + $0x3c] sm:$0xf]
      %v239 = vld [vmem:[%s206 + $0x40] sm:$0xf]
      %v240 = vld [vmem:[%s206 + $0x44] sm:$0xf]
      %v241 = vld [vmem:[%s206 + $0x48] sm:$0xf]
      %v242 = vld [vmem:[%s206 + $0x4c] sm:$0xf]
      %v243 = vld [vmem:[%s206 + $0x50] sm:$0xf]
      %v244 = vld [vmem:[%s206 + $0x54] sm:$0xf]
      %v245 = vld [vmem:[%s206 + $0x58] sm:$0xf]
      %v246 = vld [vmem:[%s206 + $0x5c] sm:$0xf]
      %v247 = vld [vmem:[%s206 + $0x60] sm:$0xf]
      %v248 = vld [vmem:[%s206 + $0x64] sm:$0xf]
      %v249 = vld [vmem:[%s206 + $0x68] sm:$0xf]
      %v250 = vld [vmem:[%s206 + $0x6c] sm:$0xf]
      %v251 = vld [vmem:[%s206 + $0x70] sm:$0xf]
      %v252 = vld [vmem:[%s206 + $0x74] sm:$0xf]
      %v253 = vld [vmem:[%s206 + $0x78] sm:$0xf]
      %v254 = vld [vmem:[%s206 + $0x7c] sm:$0xf]
      %v255 = vld [vmem:[%s206 + $0x80] sm:$0xf]
      %v256 = vld [vmem:[%s206 + $0x84] sm:$0xf]
      %v257 = vld [vmem:[%s206 + $0x88] sm:$0xf]
      %v258 = vld [vmem:[%s206 + $0x8c] sm:$0xf]
      %v259 = vld [vmem:[%s206 + $0x90] sm:$0xf]
      %v260 = vld [vmem:[%s206 + $0x94] sm:$0xf]
      %v261 = vld [vmem:[%s206 + $0x98] sm:$0xf]
      %v262 = vld [vmem:[%s206 + $0x9c] sm:$0xf]
      %v263 = vld [vmem:[%s206 + $0xa0] sm:$0xf]
      %v264 = vld [vmem:[%s206 + $0xa4] sm:$0xf]
      %v265 = vld [vmem:[%s206 + $0xa8] sm:$0xf]
      %v266 = vld [vmem:[%s206 + $0xac] sm:$0xf]
      %v267 = vld [vmem:[%s206 + $0xb0] sm:$0xf]
      %v268 = vld [vmem:[%s206 + $0xb4] sm:$0xf]
      %v269 = vld [vmem:[%s206 + $0xb8] sm:$0xf]
      %v270 = vld [vmem:[%s206 + $0xbc] sm:$0xf]
      %v271 = vld [vmem:[%s210] sm:$0xf]
      %v272 = vld [vmem:[%s206 + $0xc0] sm:$0x1]
      %s273 = scalar_lea.vmem %s210, 4
      %v274 = vld [vmem:[%s273] sm:$0xf]
      %v324 = vunpack.c.l.b16 %v223
      %v325 = vunpack.c.l.b16 %v224
      %v326 = vunpack.c.l.b16 %v225
      %v327 = vunpack.c.l.b16 %v226
      %v328 = vunpack.c.l.b16 %v227
      %v329 = vunpack.c.l.b16 %v228
      %v330 = vunpack.c.l.b16 %v229
      %v331 = vunpack.c.l.b16 %v230
      %v332 = vunpack.c.l.b16 %v231
      %v333 = vunpack.c.l.b16 %v232
      %v334 = vunpack.c.l.b16 %v233
      %v335 = vunpack.c.l.b16 %v234
      %v336 = vunpack.c.l.b16 %v235
      %v337 = vunpack.c.l.b16 %v236
      %v338 = vunpack.c.l.b16 %v237
      %v339 = vunpack.c.l.b16 %v238
      %v340 = vunpack.c.l.b16 %v239
      %v341 = vunpack.c.l.b16 %v240
      %v342 = vunpack.c.l.b16 %v241
      %v343 = vunpack.c.l.b16 %v242
      %v344 = vunpack.c.l.b16 %v243
      %v345 = vunpack.c.l.b16 %v244
      %v346 = vunpack.c.l.b16 %v245
      %v347 = vunpack.c.l.b16 %v246
      %v348 = vunpack.c.l.b16 %v247
      %v349 = vunpack.c.l.b16 %v248
      %v350 = vunpack.c.l.b16 %v249
      %v351 = vunpack.c.l.b16 %v250
      %v352 = vunpack.c.l.b16 %v251
      %v353 = vunpack.c.l.b16 %v252
      %v354 = vunpack.c.l.b16 %v253
      %v355 = vunpack.c.l.b16 %v254
      %v356 = vunpack.c.l.b16 %v255
      %v357 = vunpack.c.l.b16 %v256
      %v358 = vunpack.c.l.b16 %v257
      %v359 = vunpack.c.l.b16 %v258
      %v360 = vunpack.c.l.b16 %v259
      %v361 = vunpack.c.l.b16 %v260
      %v362 = vunpack.c.l.b16 %v261
      %v363 = vunpack.c.l.b16 %v262
      %v364 = vunpack.c.l.b16 %v263
      %v365 = vunpack.c.l.b16 %v264
      %v366 = vunpack.c.l.b16 %v265
      %v367 = vunpack.c.l.b16 %v266
      %v368 = vunpack.c.l.b16 %v267
      %v369 = vunpack.c.l.b16 %v268
      %v370 = vunpack.c.l.b16 %v269
      %v371 = vunpack.c.l.b16 %v270
      %v372 = vunpack.c.l.b16 %v272
      %v373 = vpack.c.b16 %v325, %v324
      %v374 = vpack.c.b16 %v327, %v326
      %v375 = vpack.c.b16 %v329, %v328
      %v376 = vpack.c.b16 %v331, %v330
      %v377 = vpack.c.b16 %v333, %v332
      %v378 = vpack.c.b16 %v335, %v334
      %v379 = vpack.c.b16 %v337, %v336
      %v380 = vpack.c.b16 %v339, %v338
      %v381 = vpack.c.b16 %v341, %v340
      %v382 = vpack.c.b16 %v343, %v342
      %v383 = vpack.c.b16 %v345, %v344
      %v384 = vpack.c.b16 %v347, %v346
      %v385 = vpack.c.b16 %v349, %v348
      %v386 = vpack.c.b16 %v351, %v350
      %v387 = vpack.c.b16 %v353, %v352
      %v388 = vpack.c.b16 %v355, %v354
      %v389 = vpack.c.b16 %v357, %v356
      %v390 = vpack.c.b16 %v359, %v358
      %v391 = vpack.c.b16 %v361, %v360
      %v392 = vpack.c.b16 %v363, %v362
      %v393 = vpack.c.b16 %v365, %v364
      %v394 = vpack.c.b16 %v367, %v366
      %v395 = vpack.c.b16 %v369, %v368
      %v396 = vpack.c.b16 %v371, %v370
      %v397 = vpack.c.b16 %v372, %v372
      %vm398 = vsmask.f32 7424
      %v400 = vshrl.u32 %v373, 16
      %v402 = vshll.u32 %v373, 16
      %v404 = vrot.slane %v402, 1
      %v405 = vor.u32 %v400, %v404
      %v407 = vshll.u32 %v374, 16
      %v409 = vrot.slane %v407, 1
      %v410 = vsel %vm398, %v405, %v409
      %v411 = vshrl.u32 %v374, 16
      %v413 = vor.u32 %v411, %v409
      %v415 = vshll.u32 %v375, 16
      %v417 = vrot.slane %v415, 1
      %v418 = vsel %vm398, %v413, %v417
      %v419 = vshrl.u32 %v375, 16
      %v421 = vor.u32 %v419, %v417
      %v423 = vshll.u32 %v376, 16
      %v425 = vrot.slane %v423, 1
      %v426 = vsel %vm398, %v421, %v425
      %v427 = vshrl.u32 %v376, 16
      %v429 = vor.u32 %v427, %v425
      %v431 = vshll.u32 %v377, 16
      %v433 = vrot.slane %v431, 1
      %v434 = vsel %vm398, %v429, %v433
      %v435 = vshrl.u32 %v377, 16
      %v437 = vor.u32 %v435, %v433
      %v439 = vshll.u32 %v378, 16
      %v441 = vrot.slane %v439, 1
      %v442 = vsel %vm398, %v437, %v441
      %v443 = vshrl.u32 %v378, 16
      %v445 = vor.u32 %v443, %v441
      %v447 = vshll.u32 %v379, 16
      %v449 = vrot.slane %v447, 1
      %v450 = vsel %vm398, %v445, %v449
      %v451 = vshrl.u32 %v379, 16
      %v453 = vor.u32 %v451, %v449
      %v455 = vshll.u32 %v380, 16
      %v457 = vrot.slane %v455, 1
      %v458 = vsel %vm398, %v453, %v457
      %v459 = vshrl.u32 %v380, 16
      %v461 = vor.u32 %v459, %v457
      %v463 = vshll.u32 %v381, 16
      %v465 = vrot.slane %v463, 1
      %v466 = vsel %vm398, %v461, %v465
      %v467 = vshrl.u32 %v381, 16
      %v469 = vor.u32 %v467, %v465
      %v471 = vshll.u32 %v382, 16
      %v473 = vrot.slane %v471, 1
      %v474 = vsel %vm398, %v469, %v473
      %v475 = vshrl.u32 %v382, 16
      %v477 = vor.u32 %v475, %v473
      %v479 = vshll.u32 %v383, 16
      %v481 = vrot.slane %v479, 1
      %v482 = vsel %vm398, %v477, %v481
      %v483 = vshrl.u32 %v383, 16
      %v485 = vor.u32 %v483, %v481
      %v487 = vshll.u32 %v384, 16
      %v489 = vrot.slane %v487, 1
      %v490 = vsel %vm398, %v485, %v489
      %v491 = vshrl.u32 %v384, 16
      %v493 = vor.u32 %v491, %v489
      %v495 = vshll.u32 %v385, 16
      %v497 = vrot.slane %v495, 1
      %v498 = vsel %vm398, %v493, %v497
      %v499 = vshrl.u32 %v385, 16
      %v501 = vor.u32 %v499, %v497
      %v503 = vshll.u32 %v386, 16
      %v505 = vrot.slane %v503, 1
      %v506 = vsel %vm398, %v501, %v505
      %v507 = vshrl.u32 %v386, 16
      %v509 = vor.u32 %v507, %v505
      %v511 = vshll.u32 %v387, 16
      %v513 = vrot.slane %v511, 1
      %v514 = vsel %vm398, %v509, %v513
      %v515 = vshrl.u32 %v387, 16
      %v517 = vor.u32 %v515, %v513
      %v519 = vshll.u32 %v388, 16
      %v521 = vrot.slane %v519, 1
      %v522 = vsel %vm398, %v517, %v521
      %v523 = vshrl.u32 %v388, 16
      %v525 = vor.u32 %v523, %v521
      %v527 = vshll.u32 %v389, 16
      %v529 = vrot.slane %v527, 1
      %v530 = vsel %vm398, %v525, %v529
      %v531 = vshrl.u32 %v389, 16
      %v533 = vor.u32 %v531, %v529
      %v535 = vshll.u32 %v390, 16
      %v537 = vrot.slane %v535, 1
      %v538 = vsel %vm398, %v533, %v537
      %v539 = vshrl.u32 %v390, 16
      %v541 = vor.u32 %v539, %v537
      %v543 = vshll.u32 %v391, 16
      %v545 = vrot.slane %v543, 1
      %v546 = vsel %vm398, %v541, %v545
      %v547 = vshrl.u32 %v391, 16
      %v549 = vor.u32 %v547, %v545
      %v551 = vshll.u32 %v392, 16
      %v553 = vrot.slane %v551, 1
      %v554 = vsel %vm398, %v549, %v553
      %v555 = vshrl.u32 %v392, 16
      %v557 = vor.u32 %v555, %v553
      %v559 = vshll.u32 %v393, 16
      %v561 = vrot.slane %v559, 1
      %v562 = vsel %vm398, %v557, %v561
      %v563 = vshrl.u32 %v393, 16
      %v565 = vor.u32 %v563, %v561
      %v567 = vshll.u32 %v394, 16
      %v569 = vrot.slane %v567, 1
      %v570 = vsel %vm398, %v565, %v569
      %v571 = vshrl.u32 %v394, 16
      %v573 = vor.u32 %v571, %v569
      %v575 = vshll.u32 %v395, 16
      %v577 = vrot.slane %v575, 1
      %v578 = vsel %vm398, %v573, %v577
      %v579 = vshrl.u32 %v395, 16
      %v581 = vor.u32 %v579, %v577
      %v583 = vshll.u32 %v396, 16
      %v585 = vrot.slane %v583, 1
      %v586 = vsel %vm398, %v581, %v585
      %v587 = vshrl.u32 %v396, 16
      %v589 = vor.u32 %v587, %v585
      %v591 = vshll.u32 %v397, 16
      %v593 = vrot.slane %v591, 1
      %v594 = vsel %vm398, %v589, %v593
      %vm595 = vcmask 64512
      %v597 = vsel %vm595, %v410, 0
      %v600 = vsel %vm595, %v418, 0
      %v603 = vsel %vm595, %v426, 0
      %v606 = vsel %vm595, %v434, 0
      %v609 = vsel %vm595, %v442, 0
      %v612 = vsel %vm595, %v450, 0
      %v615 = vsel %vm595, %v458, 0
      %v618 = vsel %vm595, %v466, 0
      %v621 = vsel %vm595, %v474, 0
      %v624 = vsel %vm595, %v482, 0
      %v627 = vsel %vm595, %v490, 0
      %v630 = vsel %vm595, %v498, 0
      %v633 = vsel %vm595, %v506, 0
      %v636 = vsel %vm595, %v514, 0
      %v639 = vsel %vm595, %v522, 0
      %v642 = vsel %vm595, %v530, 0
      %v645 = vsel %vm595, %v538, 0
      %v648 = vsel %vm595, %v546, 0
      %v651 = vsel %vm595, %v554, 0
      %v654 = vsel %vm595, %v562, 0
      %v657 = vsel %vm595, %v570, 0
      %v660 = vsel %vm595, %v578, 0
      %v663 = vsel %vm595, %v586, 0
      %v666 = vsel %vm595, %v594, 0
      %vm668 = vcmask 1043456
      %v670 = vsel %vm668, %v274, 0
      %672 = vmatprep.subr.bf16.mxu0 0
      %673 = vmatpush1.bf16.msra.mxu0 0
      %674 = vmatprep.subr.bf16.mxu0 0
      %675 = vmatpush1.bf16.msra.mxu0 0
      %676 = vmatprep.subr.bf16.mxu0 0
      %677 = vmatpush1.bf16.msra.mxu0 0
      %678 = vmatprep.subr.bf16.mxu0 0
      %679 = vmatpush1.bf16.msra.mxu0 0
      %680 = vmatprep.subr.bf16.mxu0 0
      %681 = vmatpush1.bf16.msra.mxu0 0
      %682 = vmatprep.subr.bf16.mxu0 0
      %683 = vmatpush1.bf16.msra.mxu0 0
      %684 = vmatprep.subr.bf16.mxu0 0
      %685 = vmatpush1.bf16.msra.mxu0 0
      %686 = vmatprep.subr.bf16.mxu0 0
      %687 = vmatpush1.bf16.msra.mxu0 %v670
      %688 = vmatprep.subr.bf16.mxu0 0
      %689 = vmatpush2.bf16.msra.mxu0 0
      %690 = vmatprep.subr.bf16.mxu0 0
      %691 = vmatpush2.bf16.msra.mxu0 0
      %692 = vmatprep.subr.bf16.mxu0 0
      %693 = vmatpush2.bf16.msra.mxu0 0
      %694 = vmatprep.subr.bf16.mxu0 0
      %695 = vmatpush2.bf16.msra.mxu0 0
      %696 = vmatprep.subr.bf16.mxu0 0
      %697 = vmatpush2.bf16.msra.mxu0 0
      %698 = vmatprep.subr.bf16.mxu0 0
      %699 = vmatpush2.bf16.msra.mxu0 0
      %700 = vmatprep.subr.bf16.mxu0 0
      %701 = vmatpush2.bf16.msra.mxu0 0
      %702 = vmatprep.subr.bf16.mxu0 0
      %703 = vmatpush2.bf16.msra.mxu0 0
      %704 = vmatprep.mubr.bf16.mxu0 0
      %705 = vmatmul.mubr.bf16.gmra.mxu0 %v597
      %v706 = vpop.f32.mrf.mxu0
      %v707 = vadd.f32 0.0, %v706
      %v708 = vpop.f32.mrf.mxu0
      %v709 = vpop.f32.mrf.mxu0
      %v710 = vadd.f32 0.0, %v709
      %v711 = vpop.f32.mrf.mxu0
      %712 = vmatprep.mubr.bf16.mxu0 0
      %713 = vmatmul.mubr.bf16.gmra.mxu0 %v600
      %v714 = vpop.f32.mrf.mxu0
      %v715 = vadd.f32 0.0, %v714
      %v716 = vpop.f32.mrf.mxu0
      %v717 = vpop.f32.mrf.mxu0
      %v718 = vadd.f32 0.0, %v717
      %v719 = vpop.f32.mrf.mxu0
      %720 = vmatprep.mubr.bf16.mxu0 0
      %721 = vmatmul.mubr.bf16.gmra.mxu0 %v603
      %v722 = vpop.f32.mrf.mxu0
      %v723 = vadd.f32 0.0, %v722
      %v724 = vpop.f32.mrf.mxu0
      %v725 = vpop.f32.mrf.mxu0
      %v726 = vadd.f32 0.0, %v725
      %v727 = vpop.f32.mrf.mxu0
      %728 = vmatprep.mubr.bf16.mxu0 0
      %729 = vmatmul.mubr.bf16.gmra.mxu0 %v606
      %v730 = vpop.f32.mrf.mxu0
      %v731 = vadd.f32 0.0, %v730
      %v732 = vpop.f32.mrf.mxu0
      %v733 = vpop.f32.mrf.mxu0
      %v734 = vadd.f32 0.0, %v733
      %v735 = vpop.f32.mrf.mxu0
      %736 = vmatprep.mubr.bf16.mxu0 0
      %737 = vmatmul.mubr.bf16.gmra.mxu0 %v609
      %v738 = vpop.f32.mrf.mxu0
      %v739 = vadd.f32 0.0, %v738
      %v740 = vpop.f32.mrf.mxu0
      %v741 = vpop.f32.mrf.mxu0
      %v742 = vadd.f32 0.0, %v741
      %v743 = vpop.f32.mrf.mxu0
      %744 = vmatprep.mubr.bf16.mxu0 0
      %745 = vmatmul.mubr.bf16.gmra.mxu0 %v612
      %v746 = vpop.f32.mrf.mxu0
      %v747 = vadd.f32 0.0, %v746
      %v748 = vpop.f32.mrf.mxu0
      %v749 = vpop.f32.mrf.mxu0
      %v750 = vadd.f32 0.0, %v749
      %v751 = vpop.f32.mrf.mxu0
      %752 = vmatprep.mubr.bf16.mxu0 0
      %753 = vmatmul.mubr.bf16.gmra.mxu0 %v615
      %v754 = vpop.f32.mrf.mxu0
      %v755 = vadd.f32 0.0, %v754
      %v756 = vpop.f32.mrf.mxu0
      %v757 = vpop.f32.mrf.mxu0
      %v758 = vadd.f32 0.0, %v757
      %v759 = vpop.f32.mrf.mxu0
      %760 = vmatprep.mubr.bf16.mxu0 0
      %761 = vmatmul.mubr.bf16.gmra.mxu0 %v618
      %v762 = vpop.f32.mrf.mxu0
      %v763 = vadd.f32 0.0, %v762
      %v764 = vpop.f32.mrf.mxu0
      %v765 = vpop.f32.mrf.mxu0
      %v766 = vadd.f32 0.0, %v765
      %v767 = vpop.f32.mrf.mxu0
      %768 = vmatprep.mubr.bf16.mxu0 0
      %769 = vmatmul.mubr.bf16.gmra.mxu0 %v621
      %v770 = vpop.f32.mrf.mxu0
      %v771 = vadd.f32 0.0, %v770
      %v772 = vpop.f32.mrf.mxu0
      %v773 = vpop.f32.mrf.mxu0
      %v774 = vadd.f32 0.0, %v773
      %v775 = vpop.f32.mrf.mxu0
      %776 = vmatprep.mubr.bf16.mxu0 0
      %777 = vmatmul.mubr.bf16.gmra.mxu0 %v624
      %v778 = vpop.f32.mrf.mxu0
      %v779 = vadd.f32 0.0, %v778
      %v780 = vpop.f32.mrf.mxu0
      %v781 = vpop.f32.mrf.mxu0
      %v782 = vadd.f32 0.0, %v781
      %v783 = vpop.f32.mrf.mxu0
      %784 = vmatprep.mubr.bf16.mxu0 0
      %785 = vmatmul.mubr.bf16.gmra.mxu0 %v627
      %v786 = vpop.f32.mrf.mxu0
      %v787 = vadd.f32 0.0, %v786
      %v788 = vpop.f32.mrf.mxu0
      %v789 = vpop.f32.mrf.mxu0
      %v790 = vadd.f32 0.0, %v789
      %v791 = vpop.f32.mrf.mxu0
      %792 = vmatprep.mubr.bf16.mxu0 0
      %793 = vmatmul.mubr.bf16.gmra.mxu0 %v630
      %v794 = vpop.f32.mrf.mxu0
      %v795 = vadd.f32 0.0, %v794
      %v796 = vpop.f32.mrf.mxu0
      %v797 = vpop.f32.mrf.mxu0
      %v798 = vadd.f32 0.0, %v797
      %v799 = vpop.f32.mrf.mxu0
      %800 = vmatprep.mubr.bf16.mxu0 0
      %801 = vmatmul.mubr.bf16.gmra.mxu0 %v633
      %v802 = vpop.f32.mrf.mxu0
      %v803 = vadd.f32 0.0, %v802
      %v804 = vpop.f32.mrf.mxu0
      %v805 = vpop.f32.mrf.mxu0
      %v806 = vadd.f32 0.0, %v805
      %v807 = vpop.f32.mrf.mxu0
      %808 = vmatprep.mubr.bf16.mxu0 0
      %809 = vmatmul.mubr.bf16.gmra.mxu0 %v636
      %v810 = vpop.f32.mrf.mxu0
      %v811 = vadd.f32 0.0, %v810
      %v812 = vpop.f32.mrf.mxu0
      %v813 = vpop.f32.mrf.mxu0
      %v814 = vadd.f32 0.0, %v813
      %v815 = vpop.f32.mrf.mxu0
      %816 = vmatprep.mubr.bf16.mxu0 0
      %817 = vmatmul.mubr.bf16.gmra.mxu0 %v639
      %v818 = vpop.f32.mrf.mxu0
      %v819 = vadd.f32 0.0, %v818
      %v820 = vpop.f32.mrf.mxu0
      %v821 = vpop.f32.mrf.mxu0
      %v822 = vadd.f32 0.0, %v821
      %v823 = vpop.f32.mrf.mxu0
      %824 = vmatprep.mubr.bf16.mxu0 0
      %825 = vmatmul.mubr.bf16.gmra.mxu0 %v642
      %v826 = vpop.f32.mrf.mxu0
      %v827 = vadd.f32 0.0, %v826
      %v828 = vpop.f32.mrf.mxu0
      %v829 = vpop.f32.mrf.mxu0
      %v830 = vadd.f32 0.0, %v829
      %v831 = vpop.f32.mrf.mxu0
      %832 = vmatprep.mubr.bf16.mxu0 0
      %833 = vmatmul.mubr.bf16.gmra.mxu0 %v645
      %v834 = vpop.f32.mrf.mxu0
      %v835 = vadd.f32 0.0, %v834
      %v836 = vpop.f32.mrf.mxu0
      %v837 = vpop.f32.mrf.mxu0
      %v838 = vadd.f32 0.0, %v837
      %v839 = vpop.f32.mrf.mxu0
      %840 = vmatprep.mubr.bf16.mxu0 0
      %841 = vmatmul.mubr.bf16.gmra.mxu0 %v648
      %v842 = vpop.f32.mrf.mxu0
      %v843 = vadd.f32 0.0, %v842
      %v844 = vpop.f32.mrf.mxu0
      %v845 = vpop.f32.mrf.mxu0
      %v846 = vadd.f32 0.0, %v845
      %v847 = vpop.f32.mrf.mxu0
      %848 = vmatprep.mubr.bf16.mxu0 0
      %849 = vmatmul.mubr.bf16.gmra.mxu0 %v651
      %v850 = vpop.f32.mrf.mxu0
      %v851 = vadd.f32 0.0, %v850
      %v852 = vpop.f32.mrf.mxu0
      %v853 = vpop.f32.mrf.mxu0
      %v854 = vadd.f32 0.0, %v853
      %v855 = vpop.f32.mrf.mxu0
      %856 = vmatprep.mubr.bf16.mxu0 0
      %857 = vmatmul.mubr.bf16.gmra.mxu0 %v654
      %v858 = vpop.f32.mrf.mxu0
      %v859 = vadd.f32 0.0, %v858
      %v860 = vpop.f32.mrf.mxu0
      %v861 = vpop.f32.mrf.mxu0
      %v862 = vadd.f32 0.0, %v861
      %v863 = vpop.f32.mrf.mxu0
      %864 = vmatprep.mubr.bf16.mxu0 0
      %865 = vmatmul.mubr.bf16.gmra.mxu0 %v657
      %v866 = vpop.f32.mrf.mxu0
      %v867 = vadd.f32 0.0, %v866
      %v868 = vpop.f32.mrf.mxu0
      %v869 = vpop.f32.mrf.mxu0
      %v870 = vadd.f32 0.0, %v869
      %v871 = vpop.f32.mrf.mxu0
      %872 = vmatprep.mubr.bf16.mxu0 0
      %873 = vmatmul.mubr.bf16.gmra.mxu0 %v660
      %v874 = vpop.f32.mrf.mxu0
      %v875 = vadd.f32 0.0, %v874
      %v876 = vpop.f32.mrf.mxu0
      %v877 = vpop.f32.mrf.mxu0
      %v878 = vadd.f32 0.0, %v877
      %v879 = vpop.f32.mrf.mxu0
      %880 = vmatprep.mubr.bf16.mxu0 0
      %881 = vmatmul.mubr.bf16.gmra.mxu0 %v663
      %v882 = vpop.f32.mrf.mxu0
      %v883 = vadd.f32 0.0, %v882
      %v884 = vpop.f32.mrf.mxu0
      %v885 = vpop.f32.mrf.mxu0
      %v886 = vadd.f32 0.0, %v885
      %v887 = vpop.f32.mrf.mxu0
      %888 = vmatprep.mubr.bf16.mxu0 0
      %889 = vmatmul.mubr.bf16.gmra.mxu0 %v666
      %v890 = vpop.f32.mrf.mxu0
      %v891 = vadd.f32 0.0, %v890
      %v892 = vpop.f32.mrf.mxu0
      %v893 = vpop.f32.mrf.mxu0
      %v894 = vadd.f32 0.0, %v893
      %v895 = vpop.f32.mrf.mxu0
      %896 = vdwg.mxu0
      %v897 = vsel %vm595, %v373, 0
      %v899 = vsel %vm595, %v374, 0
      %v901 = vsel %vm595, %v375, 0
      %v903 = vsel %vm595, %v376, 0
      %v905 = vsel %vm595, %v377, 0
      %v907 = vsel %vm595, %v378, 0
      %v909 = vsel %vm595, %v379, 0
      %v911 = vsel %vm595, %v380, 0
      %v913 = vsel %vm595, %v381, 0
      %v915 = vsel %vm595, %v382, 0
      %v917 = vsel %vm595, %v383, 0
      %v919 = vsel %vm595, %v384, 0
      %v921 = vsel %vm595, %v385, 0
      %v923 = vsel %vm595, %v386, 0
      %v925 = vsel %vm595, %v387, 0
      %v927 = vsel %vm595, %v388, 0
      %v929 = vsel %vm595, %v389, 0
      %v931 = vsel %vm595, %v390, 0
      %v933 = vsel %vm595, %v391, 0
      %v935 = vsel %vm595, %v392, 0
      %v937 = vsel %vm595, %v393, 0
      %v939 = vsel %vm595, %v394, 0
      %v941 = vsel %vm595, %v395, 0
      %v943 = vsel %vm595, %v396, 0
      %v946 = vsel %vm668, %v271, 0
      %948 = vmatprep.subr.bf16.mxu0 0
      %949 = vmatpush1.bf16.msra.mxu0 0
      %950 = vmatprep.subr.bf16.mxu0 0
      %951 = vmatpush1.bf16.msra.mxu0 0
      %952 = vmatprep.subr.bf16.mxu0 0
      %953 = vmatpush1.bf16.msra.mxu0 0
      %954 = vmatprep.subr.bf16.mxu0 0
      %955 = vmatpush1.bf16.msra.mxu0 0
      %956 = vmatprep.subr.bf16.mxu0 0
      %957 = vmatpush1.bf16.msra.mxu0 0
      %958 = vmatprep.subr.bf16.mxu0 0
      %959 = vmatpush1.bf16.msra.mxu0 0
      %960 = vmatprep.subr.bf16.mxu0 0
      %961 = vmatpush1.bf16.msra.mxu0 0
      %962 = vmatprep.subr.bf16.mxu0 0
      %963 = vmatpush1.bf16.msra.mxu0 %v946
      %964 = vmatprep.subr.bf16.mxu0 0
      %965 = vmatpush2.bf16.msra.mxu0 0
      %966 = vmatprep.subr.bf16.mxu0 0
      %967 = vmatpush2.bf16.msra.mxu0 0
      %968 = vmatprep.subr.bf16.mxu0 0
      %969 = vmatpush2.bf16.msra.mxu0 0
      %970 = vmatprep.subr.bf16.mxu0 0
      %971 = vmatpush2.bf16.msra.mxu0 0
      %972 = vmatprep.subr.bf16.mxu0 0
      %973 = vmatpush2.bf16.msra.mxu0 0
      %974 = vmatprep.subr.bf16.mxu0 0
      %975 = vmatpush2.bf16.msra.mxu0 0
      %976 = vmatprep.subr.bf16.mxu0 0
      %977 = vmatpush2.bf16.msra.mxu0 0
      %978 = vmatprep.subr.bf16.mxu0 0
      %979 = vmatpush2.bf16.msra.mxu0 0
      %980 = vmatprep.mubr.bf16.mxu0 0
      %981 = vmatmul.mubr.bf16.gmra.mxu0 %v897
      %v982 = vpop.f32.mrf.mxu0
      %v983 = vadd.f32 %v707, %v982
      %v984 = vpop.f32.mrf.mxu0
      %v985 = vpop.f32.mrf.mxu0
      %v986 = vadd.f32 %v710, %v985
      %v987 = vpop.f32.mrf.mxu0
      %988 = vmatprep.mubr.bf16.mxu0 0
      %989 = vmatmul.mubr.bf16.gmra.mxu0 %v899
      %v990 = vpop.f32.mrf.mxu0
      %v991 = vadd.f32 %v715, %v990
      %v992 = vpop.f32.mrf.mxu0
      %v993 = vpop.f32.mrf.mxu0
      %v994 = vadd.f32 %v718, %v993
      %v995 = vpop.f32.mrf.mxu0
      %996 = vmatprep.mubr.bf16.mxu0 0
      %997 = vmatmul.mubr.bf16.gmra.mxu0 %v901
      %v998 = vpop.f32.mrf.mxu0
      %v999 = vadd.f32 %v723, %v998
      %v1000 = vpop.f32.mrf.mxu0
      %v1001 = vpop.f32.mrf.mxu0
      %v1002 = vadd.f32 %v726, %v1001
      %v1003 = vpop.f32.mrf.mxu0
      %1004 = vmatprep.mubr.bf16.mxu0 0
      %1005 = vmatmul.mubr.bf16.gmra.mxu0 %v903
      %v1006 = vpop.f32.mrf.mxu0
      %v1007 = vadd.f32 %v731, %v1006
      %v1008 = vpop.f32.mrf.mxu0
      %v1009 = vpop.f32.mrf.mxu0
      %v1010 = vadd.f32 %v734, %v1009
      %v1011 = vpop.f32.mrf.mxu0
      %1012 = vmatprep.mubr.bf16.mxu0 0
      %1013 = vmatmul.mubr.bf16.gmra.mxu0 %v905
      %v1014 = vpop.f32.mrf.mxu0
      %v1015 = vadd.f32 %v739, %v1014
      %v1016 = vpop.f32.mrf.mxu0
      %v1017 = vpop.f32.mrf.mxu0
      %v1018 = vadd.f32 %v742, %v1017
      %v1019 = vpop.f32.mrf.mxu0
      %1020 = vmatprep.mubr.bf16.mxu0 0
      %1021 = vmatmul.mubr.bf16.gmra.mxu0 %v907
      %v1022 = vpop.f32.mrf.mxu0
      %v1023 = vadd.f32 %v747, %v1022
      %v1024 = vpop.f32.mrf.mxu0
      %v1025 = vpop.f32.mrf.mxu0
      %v1026 = vadd.f32 %v750, %v1025
      %v1027 = vpop.f32.mrf.mxu0
      %1028 = vmatprep.mubr.bf16.mxu0 0
      %1029 = vmatmul.mubr.bf16.gmra.mxu0 %v909
      %v1030 = vpop.f32.mrf.mxu0
      %v1031 = vadd.f32 %v755, %v1030
      %v1032 = vpop.f32.mrf.mxu0
      %v1033 = vpop.f32.mrf.mxu0
      %v1034 = vadd.f32 %v758, %v1033
      %v1035 = vpop.f32.mrf.mxu0
      %1036 = vmatprep.mubr.bf16.mxu0 0
      %1037 = vmatmul.mubr.bf16.gmra.mxu0 %v911
      %v1038 = vpop.f32.mrf.mxu0
      %v1039 = vadd.f32 %v763, %v1038
      %v1040 = vpop.f32.mrf.mxu0
      %v1041 = vpop.f32.mrf.mxu0
      %v1042 = vadd.f32 %v766, %v1041
      %v1043 = vpop.f32.mrf.mxu0
      %1044 = vmatprep.mubr.bf16.mxu0 0
      %1045 = vmatmul.mubr.bf16.gmra.mxu0 %v913
      %v1046 = vpop.f32.mrf.mxu0
      %v1047 = vadd.f32 %v771, %v1046
      %v1048 = vpop.f32.mrf.mxu0
      %v1049 = vpop.f32.mrf.mxu0
      %v1050 = vadd.f32 %v774, %v1049
      %v1051 = vpop.f32.mrf.mxu0
      %1052 = vmatprep.mubr.bf16.mxu0 0
      %1053 = vmatmul.mubr.bf16.gmra.mxu0 %v915
      %v1054 = vpop.f32.mrf.mxu0
      %v1055 = vadd.f32 %v779, %v1054
      %v1056 = vpop.f32.mrf.mxu0
      %v1057 = vpop.f32.mrf.mxu0
      %v1058 = vadd.f32 %v782, %v1057
      %v1059 = vpop.f32.mrf.mxu0
      %1060 = vmatprep.mubr.bf16.mxu0 0
      %1061 = vmatmul.mubr.bf16.gmra.mxu0 %v917
      %v1062 = vpop.f32.mrf.mxu0
      %v1063 = vadd.f32 %v787, %v1062
      %v1064 = vpop.f32.mrf.mxu0
      %v1065 = vpop.f32.mrf.mxu0
      %v1066 = vadd.f32 %v790, %v1065
      %v1067 = vpop.f32.mrf.mxu0
      %1068 = vmatprep.mubr.bf16.mxu0 0
      %1069 = vmatmul.mubr.bf16.gmra.mxu0 %v919
      %v1070 = vpop.f32.mrf.mxu0
      %v1071 = vadd.f32 %v795, %v1070
      %v1072 = vpop.f32.mrf.mxu0
      %v1073 = vpop.f32.mrf.mxu0
      %v1074 = vadd.f32 %v798, %v1073
      %v1075 = vpop.f32.mrf.mxu0
      %1076 = vmatprep.mubr.bf16.mxu0 0
      %1077 = vmatmul.mubr.bf16.gmra.mxu0 %v921
      %v1078 = vpop.f32.mrf.mxu0
      %v1079 = vadd.f32 %v803, %v1078
      %v1080 = vpop.f32.mrf.mxu0
      %v1081 = vpop.f32.mrf.mxu0
      %v1082 = vadd.f32 %v806, %v1081
      %v1083 = vpop.f32.mrf.mxu0
      %1084 = vmatprep.mubr.bf16.mxu0 0
      %1085 = vmatmul.mubr.bf16.gmra.mxu0 %v923
      %v1086 = vpop.f32.mrf.mxu0
      %v1087 = vadd.f32 %v811, %v1086
      %v1088 = vpop.f32.mrf.mxu0
      %v1089 = vpop.f32.mrf.mxu0
      %v1090 = vadd.f32 %v814, %v1089
      %v1091 = vpop.f32.mrf.mxu0
      %1092 = vmatprep.mubr.bf16.mxu0 0
      %1093 = vmatmul.mubr.bf16.gmra.mxu0 %v925
      %v1094 = vpop.f32.mrf.mxu0
      %v1095 = vadd.f32 %v819, %v1094
      %v1096 = vpop.f32.mrf.mxu0
      %v1097 = vpop.f32.mrf.mxu0
      %v1098 = vadd.f32 %v822, %v1097
      %v1099 = vpop.f32.mrf.mxu0
      %1100 = vmatprep.mubr.bf16.mxu0 0
      %1101 = vmatmul.mubr.bf16.gmra.mxu0 %v927
      %v1102 = vpop.f32.mrf.mxu0
      %v1103 = vadd.f32 %v827, %v1102
      %v1104 = vpop.f32.mrf.mxu0
      %v1105 = vpop.f32.mrf.mxu0
      %v1106 = vadd.f32 %v830, %v1105
      %v1107 = vpop.f32.mrf.mxu0
      %1108 = vmatprep.mubr.bf16.mxu0 0
      %1109 = vmatmul.mubr.bf16.gmra.mxu0 %v929
      %v1110 = vpop.f32.mrf.mxu0
      %v1111 = vadd.f32 %v835, %v1110
      %v1112 = vpop.f32.mrf.mxu0
      %v1113 = vpop.f32.mrf.mxu0
      %v1114 = vadd.f32 %v838, %v1113
      %v1115 = vpop.f32.mrf.mxu0
      %1116 = vmatprep.mubr.bf16.mxu0 0
      %1117 = vmatmul.mubr.bf16.gmra.mxu0 %v931
      %v1118 = vpop.f32.mrf.mxu0
      %v1119 = vadd.f32 %v843, %v1118
      %v1120 = vpop.f32.mrf.mxu0
      %v1121 = vpop.f32.mrf.mxu0
      %v1122 = vadd.f32 %v846, %v1121
      %v1123 = vpop.f32.mrf.mxu0
      %1124 = vmatprep.mubr.bf16.mxu0 0
      %1125 = vmatmul.mubr.bf16.gmra.mxu0 %v933
      %v1126 = vpop.f32.mrf.mxu0
      %v1127 = vadd.f32 %v851, %v1126
      %v1128 = vpop.f32.mrf.mxu0
      %v1129 = vpop.f32.mrf.mxu0
      %v1130 = vadd.f32 %v854, %v1129
      %v1131 = vpop.f32.mrf.mxu0
      %1132 = vmatprep.mubr.bf16.mxu0 0
      %1133 = vmatmul.mubr.bf16.gmra.mxu0 %v935
      %v1134 = vpop.f32.mrf.mxu0
      %v1135 = vadd.f32 %v859, %v1134
      %v1136 = vpop.f32.mrf.mxu0
      %v1137 = vpop.f32.mrf.mxu0
      %v1138 = vadd.f32 %v862, %v1137
      %v1139 = vpop.f32.mrf.mxu0
      %1140 = vmatprep.mubr.bf16.mxu0 0
      %1141 = vmatmul.mubr.bf16.gmra.mxu0 %v937
      %v1142 = vpop.f32.mrf.mxu0
      %v1143 = vadd.f32 %v867, %v1142
      %v1144 = vpop.f32.mrf.mxu0
      %v1145 = vpop.f32.mrf.mxu0
      %v1146 = vadd.f32 %v870, %v1145
      %v1147 = vpop.f32.mrf.mxu0
      %1148 = vmatprep.mubr.bf16.mxu0 0
      %1149 = vmatmul.mubr.bf16.gmra.mxu0 %v939
      %v1150 = vpop.f32.mrf.mxu0
      %v1151 = vadd.f32 %v875, %v1150
      %v1152 = vpop.f32.mrf.mxu0
      %v1153 = vpop.f32.mrf.mxu0
      %v1154 = vadd.f32 %v878, %v1153
      %v1155 = vpop.f32.mrf.mxu0
      %1156 = vmatprep.mubr.bf16.mxu0 0
      %1157 = vmatmul.mubr.bf16.gmra.mxu0 %v941
      %v1158 = vpop.f32.mrf.mxu0
      %v1159 = vadd.f32 %v883, %v1158
      %v1160 = vpop.f32.mrf.mxu0
      %v1161 = vpop.f32.mrf.mxu0
      %v1162 = vadd.f32 %v886, %v1161
      %v1163 = vpop.f32.mrf.mxu0
      %1164 = vmatprep.mubr.bf16.mxu0 0
      %1165 = vmatmul.mubr.bf16.gmra.mxu0 %v943
      %v1166 = vpop.f32.mrf.mxu0
      %v1167 = vadd.f32 %v891, %v1166
      %v1168 = vpop.f32.mrf.mxu0
      %v1169 = vpop.f32.mrf.mxu0
      %v1170 = vadd.f32 %v894, %v1169
      %v1171 = vpop.f32.mrf.mxu0
      %1172 = vdwg.mxu0
      %v1173 = vld [vmem:[%s206] sm:$0xe]
      %s1174 = scalar_lea.vmem %s210, 8
      %v1175 = vld [vmem:[%s1174] sm:$0xf]
      %v1177 = vunpack.c.l.b16 %v1173
      %v1178 = vpack.c.b16 %v325, %v1177
      %vm1179 = vcmask 1046528
      %v1180 = vrot.slane %v1178, 1
      %v1181 = vrot.slane %v374, 1
      %v1182 = vsel %vm1179, %v1180, %v1181
      %v1183 = vrot.slane %v375, 1
      %v1184 = vsel %vm1179, %v1181, %v1183
      %v1185 = vrot.slane %v376, 1
      %v1186 = vsel %vm1179, %v1183, %v1185
      %v1187 = vrot.slane %v377, 1
      %v1188 = vsel %vm1179, %v1185, %v1187
      %v1189 = vrot.slane %v378, 1
      %v1190 = vsel %vm1179, %v1187, %v1189
      %v1191 = vrot.slane %v379, 1
      %v1192 = vsel %vm1179, %v1189, %v1191
      %v1193 = vrot.slane %v380, 1
      %v1194 = vsel %vm1179, %v1191, %v1193
      %v1195 = vrot.slane %v381, 1
      %v1196 = vsel %vm1179, %v1193, %v1195
      %v1197 = vrot.slane %v382, 1
      %v1198 = vsel %vm1179, %v1195, %v1197
      %v1199 = vrot.slane %v383, 1
      %v1200 = vsel %vm1179, %v1197, %v1199
      %v1201 = vrot.slane %v384, 1
      %v1202 = vsel %vm1179, %v1199, %v1201
      %v1203 = vrot.slane %v385, 1
      %v1204 = vsel %vm1179, %v1201, %v1203
      %v1205 = vrot.slane %v386, 1
      %v1206 = vsel %vm1179, %v1203, %v1205
      %v1207 = vrot.slane %v387, 1
      %v1208 = vsel %vm1179, %v1205, %v1207
      %v1209 = vrot.slane %v388, 1
      %v1210 = vsel %vm1179, %v1207, %v1209
      %v1211 = vrot.slane %v389, 1
      %v1212 = vsel %vm1179, %v1209, %v1211
      %v1213 = vrot.slane %v390, 1
      %v1214 = vsel %vm1179, %v1211, %v1213
      %v1215 = vrot.slane %v391, 1
      %v1216 = vsel %vm1179, %v1213, %v1215
      %v1217 = vrot.slane %v392, 1
      %v1218 = vsel %vm1179, %v1215, %v1217
      %v1219 = vrot.slane %v393, 1
      %v1220 = vsel %vm1179, %v1217, %v1219
      %v1221 = vrot.slane %v394, 1
      %v1222 = vsel %vm1179, %v1219, %v1221
      %v1223 = vrot.slane %v395, 1
      %v1224 = vsel %vm1179, %v1221, %v1223
      %v1225 = vrot.slane %v396, 1
      %v1226 = vsel %vm1179, %v1223, %v1225
      %v1227 = vrot.slane %v397, 1
      %v1228 = vsel %vm1179, %v1225, %v1227
      %v1230 = vsel %vm595, %v1182, 0
      %v1233 = vsel %vm595, %v1184, 0
      %v1236 = vsel %vm595, %v1186, 0
      %v1239 = vsel %vm595, %v1188, 0
      %v1242 = vsel %vm595, %v1190, 0
      %v1245 = vsel %vm595, %v1192, 0
      %v1248 = vsel %vm595, %v1194, 0
      %v1251 = vsel %vm595, %v1196, 0
      %v1254 = vsel %vm595, %v1198, 0
      %v1257 = vsel %vm595, %v1200, 0
      %v1260 = vsel %vm595, %v1202, 0
      %v1263 = vsel %vm595, %v1204, 0
      %v1266 = vsel %vm595, %v1206, 0
      %v1269 = vsel %vm595, %v1208, 0
      %v1272 = vsel %vm595, %v1210, 0
      %v1275 = vsel %vm595, %v1212, 0
      %v1278 = vsel %vm595, %v1214, 0
      %v1281 = vsel %vm595, %v1216, 0
      %v1284 = vsel %vm595, %v1218, 0
      %v1287 = vsel %vm595, %v1220, 0
      %v1290 = vsel %vm595, %v1222, 0
      %v1293 = vsel %vm595, %v1224, 0
      %v1296 = vsel %vm595, %v1226, 0
      %v1299 = vsel %vm595, %v1228, 0
      %v1302 = vsel %vm668, %v1175, 0
      %1304 = vmatprep.subr.bf16.mxu0 0
      %1305 = vmatpush1.bf16.msra.mxu0 0
      %1306 = vmatprep.subr.bf16.mxu0 0
      %1307 = vmatpush1.bf16.msra.mxu0 0
      %1308 = vmatprep.subr.bf16.mxu0 0
      %1309 = vmatpush1.bf16.msra.mxu0 0
      %1310 = vmatprep.subr.bf16.mxu0 0
      %1311 = vmatpush1.bf16.msra.mxu0 0
      %1312 = vmatprep.subr.bf16.mxu0 0
      %1313 = vmatpush1.bf16.msra.mxu0 0
      %1314 = vmatprep.subr.bf16.mxu0 0
      %1315 = vmatpush1.bf16.msra.mxu0 0
      %1316 = vmatprep.subr.bf16.mxu0 0
      %1317 = vmatpush1.bf16.msra.mxu0 0
      %1318 = vmatprep.subr.bf16.mxu0 0
      %1319 = vmatpush1.bf16.msra.mxu0 %v1302
      %1320 = vmatprep.subr.bf16.mxu0 0
      %1321 = vmatpush2.bf16.msra.mxu0 0
      %1322 = vmatprep.subr.bf16.mxu0 0
      %1323 = vmatpush2.bf16.msra.mxu0 0
      %1324 = vmatprep.subr.bf16.mxu0 0
      %1325 = vmatpush2.bf16.msra.mxu0 0
      %1326 = vmatprep.subr.bf16.mxu0 0
      %1327 = vmatpush2.bf16.msra.mxu0 0
      %1328 = vmatprep.subr.bf16.mxu0 0
      %1329 = vmatpush2.bf16.msra.mxu0 0
      %1330 = vmatprep.subr.bf16.mxu0 0
      %1331 = vmatpush2.bf16.msra.mxu0 0
      %1332 = vmatprep.subr.bf16.mxu0 0
      %1333 = vmatpush2.bf16.msra.mxu0 0
      %1334 = vmatprep.subr.bf16.mxu0 0
      %1335 = vmatpush2.bf16.msra.mxu0 0
      %1336 = vmatprep.mubr.bf16.mxu0 0
      %1337 = vmatmul.mubr.bf16.gmra.mxu0 %v1230
      %v1338 = vpop.f32.mrf.mxu0
      %v1339 = vadd.f32 0.0, %v1338
      %v1340 = vpop.f32.mrf.mxu0
      %v1341 = vpop.f32.mrf.mxu0
      %v1342 = vadd.f32 0.0, %v1341
      %v1343 = vpop.f32.mrf.mxu0
      %1344 = vmatprep.mubr.bf16.mxu0 0
      %1345 = vmatmul.mubr.bf16.gmra.mxu0 %v1233
      %v1346 = vpop.f32.mrf.mxu0
      %v1347 = vadd.f32 0.0, %v1346
      %v1348 = vpop.f32.mrf.mxu0
      %v1349 = vpop.f32.mrf.mxu0
      %v1350 = vadd.f32 0.0, %v1349
      %v1351 = vpop.f32.mrf.mxu0
      %1352 = vmatprep.mubr.bf16.mxu0 0
      %1353 = vmatmul.mubr.bf16.gmra.mxu0 %v1236
      %v1354 = vpop.f32.mrf.mxu0
      %v1355 = vadd.f32 0.0, %v1354
      %v1356 = vpop.f32.mrf.mxu0
      %v1357 = vpop.f32.mrf.mxu0
      %v1358 = vadd.f32 0.0, %v1357
      %v1359 = vpop.f32.mrf.mxu0
      %1360 = vmatprep.mubr.bf16.mxu0 0
      %1361 = vmatmul.mubr.bf16.gmra.mxu0 %v1239
      %v1362 = vpop.f32.mrf.mxu0
      %v1363 = vadd.f32 0.0, %v1362
      %v1364 = vpop.f32.mrf.mxu0
      %v1365 = vpop.f32.mrf.mxu0
      %v1366 = vadd.f32 0.0, %v1365
      %v1367 = vpop.f32.mrf.mxu0
      %1368 = vmatprep.mubr.bf16.mxu0 0
      %1369 = vmatmul.mubr.bf16.gmra.mxu0 %v1242
      %v1370 = vpop.f32.mrf.mxu0
      %v1371 = vadd.f32 0.0, %v1370
      %v1372 = vpop.f32.mrf.mxu0
      %v1373 = vpop.f32.mrf.mxu0
      %v1374 = vadd.f32 0.0, %v1373
      %v1375 = vpop.f32.mrf.mxu0
      %1376 = vmatprep.mubr.bf16.mxu0 0
      %1377 = vmatmul.mubr.bf16.gmra.mxu0 %v1245
      %v1378 = vpop.f32.mrf.mxu0
      %v1379 = vadd.f32 0.0, %v1378
      %v1380 = vpop.f32.mrf.mxu0
      %v1381 = vpop.f32.mrf.mxu0
      %v1382 = vadd.f32 0.0, %v1381
      %v1383 = vpop.f32.mrf.mxu0
      %1384 = vmatprep.mubr.bf16.mxu0 0
      %1385 = vmatmul.mubr.bf16.gmra.mxu0 %v1248
      %v1386 = vpop.f32.mrf.mxu0
      %v1387 = vadd.f32 0.0, %v1386
      %v1388 = vpop.f32.mrf.mxu0
      %v1389 = vpop.f32.mrf.mxu0
      %v1390 = vadd.f32 0.0, %v1389
      %v1391 = vpop.f32.mrf.mxu0
      %1392 = vmatprep.mubr.bf16.mxu0 0
      %1393 = vmatmul.mubr.bf16.gmra.mxu0 %v1251
      %v1394 = vpop.f32.mrf.mxu0
      %v1395 = vadd.f32 0.0, %v1394
      %v1396 = vpop.f32.mrf.mxu0
      %v1397 = vpop.f32.mrf.mxu0
      %v1398 = vadd.f32 0.0, %v1397
      %v1399 = vpop.f32.mrf.mxu0
      %1400 = vmatprep.mubr.bf16.mxu0 0
      %1401 = vmatmul.mubr.bf16.gmra.mxu0 %v1254
      %v1402 = vpop.f32.mrf.mxu0
      %v1403 = vadd.f32 0.0, %v1402
      %v1404 = vpop.f32.mrf.mxu0
      %v1405 = vpop.f32.mrf.mxu0
      %v1406 = vadd.f32 0.0, %v1405
      %v1407 = vpop.f32.mrf.mxu0
      %1408 = vmatprep.mubr.bf16.mxu0 0
      %1409 = vmatmul.mubr.bf16.gmra.mxu0 %v1257
      %v1410 = vpop.f32.mrf.mxu0
      %v1411 = vadd.f32 0.0, %v1410
      %v1412 = vpop.f32.mrf.mxu0
      %v1413 = vpop.f32.mrf.mxu0
      %v1414 = vadd.f32 0.0, %v1413
      %v1415 = vpop.f32.mrf.mxu0
      %1416 = vmatprep.mubr.bf16.mxu0 0
      %1417 = vmatmul.mubr.bf16.gmra.mxu0 %v1260
      %v1418 = vpop.f32.mrf.mxu0
      %v1419 = vadd.f32 0.0, %v1418
      %v1420 = vpop.f32.mrf.mxu0
      %v1421 = vpop.f32.mrf.mxu0
      %v1422 = vadd.f32 0.0, %v1421
      %v1423 = vpop.f32.mrf.mxu0
      %1424 = vmatprep.mubr.bf16.mxu0 0
      %1425 = vmatmul.mubr.bf16.gmra.mxu0 %v1263
      %v1426 = vpop.f32.mrf.mxu0
      %v1427 = vadd.f32 0.0, %v1426
      %v1428 = vpop.f32.mrf.mxu0
      %v1429 = vpop.f32.mrf.mxu0
      %v1430 = vadd.f32 0.0, %v1429
      %v1431 = vpop.f32.mrf.mxu0
      %1432 = vmatprep.mubr.bf16.mxu0 0
      %1433 = vmatmul.mubr.bf16.gmra.mxu0 %v1266
      %v1434 = vpop.f32.mrf.mxu0
      %v1435 = vadd.f32 0.0, %v1434
      %v1436 = vpop.f32.mrf.mxu0
      %v1437 = vpop.f32.mrf.mxu0
      %v1438 = vadd.f32 0.0, %v1437
      %v1439 = vpop.f32.mrf.mxu0
      %1440 = vmatprep.mubr.bf16.mxu0 0
      %1441 = vmatmul.mubr.bf16.gmra.mxu0 %v1269
      %v1442 = vpop.f32.mrf.mxu0
      %v1443 = vadd.f32 0.0, %v1442
      %v1444 = vpop.f32.mrf.mxu0
      %v1445 = vpop.f32.mrf.mxu0
      %v1446 = vadd.f32 0.0, %v1445
      %v1447 = vpop.f32.mrf.mxu0
      %1448 = vmatprep.mubr.bf16.mxu0 0
      %1449 = vmatmul.mubr.bf16.gmra.mxu0 %v1272
      %v1450 = vpop.f32.mrf.mxu0
      %v1451 = vadd.f32 0.0, %v1450
      %v1452 = vpop.f32.mrf.mxu0
      %v1453 = vpop.f32.mrf.mxu0
      %v1454 = vadd.f32 0.0, %v1453
      %v1455 = vpop.f32.mrf.mxu0
      %1456 = vmatprep.mubr.bf16.mxu0 0
      %1457 = vmatmul.mubr.bf16.gmra.mxu0 %v1275
      %v1458 = vpop.f32.mrf.mxu0
      %v1459 = vadd.f32 0.0, %v1458
      %v1460 = vpop.f32.mrf.mxu0
      %v1461 = vpop.f32.mrf.mxu0
      %v1462 = vadd.f32 0.0, %v1461
      %v1463 = vpop.f32.mrf.mxu0
      %1464 = vmatprep.mubr.bf16.mxu0 0
      %1465 = vmatmul.mubr.bf16.gmra.mxu0 %v1278
      %v1466 = vpop.f32.mrf.mxu0
      %v1467 = vadd.f32 0.0, %v1466
      %v1468 = vpop.f32.mrf.mxu0
      %v1469 = vpop.f32.mrf.mxu0
      %v1470 = vadd.f32 0.0, %v1469
      %v1471 = vpop.f32.mrf.mxu0
      %1472 = vmatprep.mubr.bf16.mxu0 0
      %1473 = vmatmul.mubr.bf16.gmra.mxu0 %v1281
      %v1474 = vpop.f32.mrf.mxu0
      %v1475 = vadd.f32 0.0, %v1474
      %v1476 = vpop.f32.mrf.mxu0
      %v1477 = vpop.f32.mrf.mxu0
      %v1478 = vadd.f32 0.0, %v1477
      %v1479 = vpop.f32.mrf.mxu0
      %1480 = vmatprep.mubr.bf16.mxu0 0
      %1481 = vmatmul.mubr.bf16.gmra.mxu0 %v1284
      %v1482 = vpop.f32.mrf.mxu0
      %v1483 = vadd.f32 0.0, %v1482
      %v1484 = vpop.f32.mrf.mxu0
      %v1485 = vpop.f32.mrf.mxu0
      %v1486 = vadd.f32 0.0, %v1485
      %v1487 = vpop.f32.mrf.mxu0
      %1488 = vmatprep.mubr.bf16.mxu0 0
      %1489 = vmatmul.mubr.bf16.gmra.mxu0 %v1287
      %v1490 = vpop.f32.mrf.mxu0
      %v1491 = vadd.f32 0.0, %v1490
      %v1492 = vpop.f32.mrf.mxu0
      %v1493 = vpop.f32.mrf.mxu0
      %v1494 = vadd.f32 0.0, %v1493
      %v1495 = vpop.f32.mrf.mxu0
      %1496 = vmatprep.mubr.bf16.mxu0 0
      %1497 = vmatmul.mubr.bf16.gmra.mxu0 %v1290
      %v1498 = vpop.f32.mrf.mxu0
      %v1499 = vadd.f32 0.0, %v1498
      %v1500 = vpop.f32.mrf.mxu0
      %v1501 = vpop.f32.mrf.mxu0
      %v1502 = vadd.f32 0.0, %v1501
      %v1503 = vpop.f32.mrf.mxu0
      %1504 = vmatprep.mubr.bf16.mxu0 0
      %1505 = vmatmul.mubr.bf16.gmra.mxu0 %v1293
      %v1506 = vpop.f32.mrf.mxu0
      %v1507 = vadd.f32 0.0, %v1506
      %v1508 = vpop.f32.mrf.mxu0
      %v1509 = vpop.f32.mrf.mxu0
      %v1510 = vadd.f32 0.0, %v1509
      %v1511 = vpop.f32.mrf.mxu0
      %1512 = vmatprep.mubr.bf16.mxu0 0
      %1513 = vmatmul.mubr.bf16.gmra.mxu0 %v1296
      %v1514 = vpop.f32.mrf.mxu0
      %v1515 = vadd.f32 0.0, %v1514
      %v1516 = vpop.f32.mrf.mxu0
      %v1517 = vpop.f32.mrf.mxu0
      %v1518 = vadd.f32 0.0, %v1517
      %v1519 = vpop.f32.mrf.mxu0
      %1520 = vmatprep.mubr.bf16.mxu0 0
      %1521 = vmatmul.mubr.bf16.gmra.mxu0 %v1299
      %v1522 = vpop.f32.mrf.mxu0
      %v1523 = vadd.f32 0.0, %v1522
      %v1524 = vpop.f32.mrf.mxu0
      %v1525 = vpop.f32.mrf.mxu0
      %v1526 = vadd.f32 0.0, %v1525
      %v1527 = vpop.f32.mrf.mxu0
      %1528 = vdwg.mxu0
      %v1529 = vadd.f32 %v983, %v1339
      %v1530 = vadd.f32 %v986, %v1342
      %v1531 = vadd.f32 %v991, %v1347
      %v1532 = vadd.f32 %v994, %v1350
      %v1533 = vadd.f32 %v999, %v1355
      %v1534 = vadd.f32 %v1002, %v1358
      %v1535 = vadd.f32 %v1007, %v1363
      %v1536 = vadd.f32 %v1010, %v1366
      %v1537 = vadd.f32 %v1015, %v1371
      %v1538 = vadd.f32 %v1018, %v1374
      %v1539 = vadd.f32 %v1023, %v1379
      %v1540 = vadd.f32 %v1026, %v1382
      %v1541 = vadd.f32 %v1031, %v1387
      %v1542 = vadd.f32 %v1034, %v1390
      %v1543 = vadd.f32 %v1039, %v1395
      %v1544 = vadd.f32 %v1042, %v1398
      %v1545 = vadd.f32 %v1047, %v1403
      %v1546 = vadd.f32 %v1050, %v1406
      %v1547 = vadd.f32 %v1055, %v1411
      %v1548 = vadd.f32 %v1058, %v1414
      %v1549 = vadd.f32 %v1063, %v1419
      %v1550 = vadd.f32 %v1066, %v1422
      %v1551 = vadd.f32 %v1071, %v1427
      %v1552 = vadd.f32 %v1074, %v1430
      %v1553 = vadd.f32 %v1079, %v1435
      %v1554 = vadd.f32 %v1082, %v1438
      %v1555 = vadd.f32 %v1087, %v1443
      %v1556 = vadd.f32 %v1090, %v1446
      %v1557 = vadd.f32 %v1095, %v1451
      %v1558 = vadd.f32 %v1098, %v1454
      %v1559 = vadd.f32 %v1103, %v1459
      %v1560 = vadd.f32 %v1106, %v1462
      %v1561 = vadd.f32 %v1111, %v1467
      %v1562 = vadd.f32 %v1114, %v1470
      %v1563 = vadd.f32 %v1119, %v1475
      %v1564 = vadd.f32 %v1122, %v1478
      %v1565 = vadd.f32 %v1127, %v1483
      %v1566 = vadd.f32 %v1130, %v1486
      %v1567 = vadd.f32 %v1135, %v1491
      %v1568 = vadd.f32 %v1138, %v1494
      %v1569 = vadd.f32 %v1143, %v1499
      %v1570 = vadd.f32 %v1146, %v1502
      %v1571 = vadd.f32 %v1151, %v1507
      %v1572 = vadd.f32 %v1154, %v1510
      %v1573 = vadd.f32 %v1159, %v1515
      %v1574 = vadd.f32 %v1162, %v1518
      %v1575 = vadd.f32 %v1167, %v1523
      %v1576 = vadd.f32 %v1170, %v1526
      %v1577 = vld [vmem:[%s206 + $0xc] sm:$0xf]
      %v1578 = vld [vmem:[%s206 + $0x10] sm:$0xf]
      %v1579 = vld [vmem:[%s206 + $0x14] sm:$0xf]
      %v1580 = vld [vmem:[%s206 + $0x18] sm:$0xf]
      %v1581 = vld [vmem:[%s206 + $0x1c] sm:$0xf]
      %v1582 = vld [vmem:[%s206 + $0x20] sm:$0xf]
      %v1583 = vld [vmem:[%s206 + $0x24] sm:$0xf]
      %v1584 = vld [vmem:[%s206 + $0x28] sm:$0xf]
      %v1585 = vld [vmem:[%s206 + $0x2c] sm:$0xf]
      %v1586 = vld [vmem:[%s206 + $0x30] sm:$0xf]
      %v1587 = vld [vmem:[%s206 + $0x34] sm:$0xf]
      %v1588 = vld [vmem:[%s206 + $0x38] sm:$0xf]
      %v1589 = vld [vmem:[%s206 + $0x3c] sm:$0xf]
      %v1590 = vld [vmem:[%s206 + $0x40] sm:$0xf]
      %v1591 = vld [vmem:[%s206 + $0x44] sm:$0xf]
      %v1592 = vld [vmem:[%s206 + $0x48] sm:$0xf]
      %v1593 = vld [vmem:[%s206 + $0x4c] sm:$0xf]
      %v1594 = vld [vmem:[%s206 + $0x50] sm:$0xf]
      %v1595 = vld [vmem:[%s206 + $0x54] sm:$0xf]
      %v1596 = vld [vmem:[%s206 + $0x58] sm:$0xf]
      %v1597 = vld [vmem:[%s206 + $0x5c] sm:$0xf]
      %v1598 = vld [vmem:[%s206 + $0x60] sm:$0xf]
      %v1599 = vld [vmem:[%s206 + $0x64] sm:$0xf]
      %v1600 = vld [vmem:[%s206 + $0x68] sm:$0xf]
      %v1601 = vld [vmem:[%s206 + $0x6c] sm:$0xf]
      %v1602 = vld [vmem:[%s206 + $0x70] sm:$0xf]
      %v1603 = vld [vmem:[%s206 + $0x74] sm:$0xf]
      %v1604 = vld [vmem:[%s206 + $0x78] sm:$0xf]
      %v1605 = vld [vmem:[%s206 + $0x7c] sm:$0xf]
      %v1606 = vld [vmem:[%s206 + $0x80] sm:$0xf]
      %v1607 = vld [vmem:[%s206 + $0x84] sm:$0xf]
      %v1608 = vld [vmem:[%s206 + $0x88] sm:$0xf]
      %v1609 = vld [vmem:[%s206 + $0x8c] sm:$0xf]
      %v1610 = vld [vmem:[%s206 + $0x90] sm:$0xf]
      %v1611 = vld [vmem:[%s206 + $0x94] sm:$0xf]
      %v1612 = vld [vmem:[%s206 + $0x98] sm:$0xf]
      %v1613 = vld [vmem:[%s206 + $0x9c] sm:$0xf]
      %v1614 = vld [vmem:[%s206 + $0xa0] sm:$0xf]
      %v1615 = vld [vmem:[%s206 + $0xa4] sm:$0xf]
      %v1616 = vld [vmem:[%s206 + $0xa8] sm:$0xf]
      %v1617 = vld [vmem:[%s206 + $0xac] sm:$0xf]
      %v1618 = vld [vmem:[%s206 + $0xb0] sm:$0xf]
      %v1619 = vld [vmem:[%s206 + $0xb4] sm:$0xf]
      %v1620 = vld [vmem:[%s206 + $0xb8] sm:$0xf]
      %v1621 = vld [vmem:[%s206 + $0xbc] sm:$0xf]
      %v1622 = vld [vmem:[%s206 + $0xc0] sm:$0xf]
      %v1623 = vld [vmem:[%s206 + $0xc4] sm:$0xf]
      %v1624 = vld [vmem:[%s206 + $0xc8] sm:$0xf]
      %s1625 = scalar_lea.vmem %s210, 12
      %v1626 = vld [vmem:[%s1625] sm:$0xf]
      %v1675 = vunpack.c.l.b16 %v1577
      %v1676 = vunpack.c.l.b16 %v1578
      %v1677 = vunpack.c.l.b16 %v1579
      %v1678 = vunpack.c.l.b16 %v1580
      %v1679 = vunpack.c.l.b16 %v1581
      %v1680 = vunpack.c.l.b16 %v1582
      %v1681 = vunpack.c.l.b16 %v1583
      %v1682 = vunpack.c.l.b16 %v1584
      %v1683 = vunpack.c.l.b16 %v1585
      %v1684 = vunpack.c.l.b16 %v1586
      %v1685 = vunpack.c.l.b16 %v1587
      %v1686 = vunpack.c.l.b16 %v1588
      %v1687 = vunpack.c.l.b16 %v1589
      %v1688 = vunpack.c.l.b16 %v1590
      %v1689 = vunpack.c.l.b16 %v1591
      %v1690 = vunpack.c.l.b16 %v1592
      %v1691 = vunpack.c.l.b16 %v1593
      %v1692 = vunpack.c.l.b16 %v1594
      %v1693 = vunpack.c.l.b16 %v1595
      %v1694 = vunpack.c.l.b16 %v1596
      %v1695 = vunpack.c.l.b16 %v1597
      %v1696 = vunpack.c.l.b16 %v1598
      %v1697 = vunpack.c.l.b16 %v1599
      %v1698 = vunpack.c.l.b16 %v1600
      %v1699 = vunpack.c.l.b16 %v1601
      %v1700 = vunpack.c.l.b16 %v1602
      %v1701 = vunpack.c.l.b16 %v1603
      %v1702 = vunpack.c.l.b16 %v1604
      %v1703 = vunpack.c.l.b16 %v1605
      %v1704 = vunpack.c.l.b16 %v1606
      %v1705 = vunpack.c.l.b16 %v1607
      %v1706 = vunpack.c.l.b16 %v1608
      %v1707 = vunpack.c.l.b16 %v1609
      %v1708 = vunpack.c.l.b16 %v1610
      %v1709 = vunpack.c.l.b16 %v1611
      %v1710 = vunpack.c.l.b16 %v1612
      %v1711 = vunpack.c.l.b16 %v1613
      %v1712 = vunpack.c.l.b16 %v1614
      %v1713 = vunpack.c.l.b16 %v1615
      %v1714 = vunpack.c.l.b16 %v1616
      %v1715 = vunpack.c.l.b16 %v1617
      %v1716 = vunpack.c.l.b16 %v1618
      %v1717 = vunpack.c.l.b16 %v1619
      %v1718 = vunpack.c.l.b16 %v1620
      %v1719 = vunpack.c.l.b16 %v1621
      %v1720 = vunpack.c.l.b16 %v1622
      %v1721 = vunpack.c.l.b16 %v1623
      %v1722 = vunpack.c.l.b16 %v1624
      %v1723 = vpack.c.b16 %v1676, %v1675
      %v1724 = vpack.c.b16 %v1678, %v1677
      %v1725 = vpack.c.b16 %v1680, %v1679
      %v1726 = vpack.c.b16 %v1682, %v1681
      %v1727 = vpack.c.b16 %v1684, %v1683
      %v1728 = vpack.c.b16 %v1686, %v1685
      %v1729 = vpack.c.b16 %v1688, %v1687
      %v1730 = vpack.c.b16 %v1690, %v1689
      %v1731 = vpack.c.b16 %v1692, %v1691
      %v1732 = vpack.c.b16 %v1694, %v1693
      %v1733 = vpack.c.b16 %v1696, %v1695
      %v1734 = vpack.c.b16 %v1698, %v1697
      %v1735 = vpack.c.b16 %v1700, %v1699
      %v1736 = vpack.c.b16 %v1702, %v1701
      %v1737 = vpack.c.b16 %v1704, %v1703
      %v1738 = vpack.c.b16 %v1706, %v1705
      %v1739 = vpack.c.b16 %v1708, %v1707
      %v1740 = vpack.c.b16 %v1710, %v1709
      %v1741 = vpack.c.b16 %v1712, %v1711
      %v1742 = vpack.c.b16 %v1714, %v1713
      %v1743 = vpack.c.b16 %v1716, %v1715
      %v1744 = vpack.c.b16 %v1718, %v1717
      %v1745 = vpack.c.b16 %v1720, %v1719
      %v1746 = vpack.c.b16 %v1722, %v1721
      %v1748 = vsel %vm595, %v1723, 0
      %v1751 = vsel %vm595, %v1724, 0
      %v1754 = vsel %vm595, %v1725, 0
      %v1757 = vsel %vm595, %v1726, 0
      %v1760 = vsel %vm595, %v1727, 0
      %v1763 = vsel %vm595, %v1728, 0
      %v1766 = vsel %vm595, %v1729, 0
      %v1769 = vsel %vm595, %v1730, 0
      %v1772 = vsel %vm595, %v1731, 0
      %v1775 = vsel %vm595, %v1732, 0
      %v1778 = vsel %vm595, %v1733, 0
      %v1781 = vsel %vm595, %v1734, 0
      %v1784 = vsel %vm595, %v1735, 0
      %v1787 = vsel %vm595, %v1736, 0
      %v1790 = vsel %vm595, %v1737, 0
      %v1793 = vsel %vm595, %v1738, 0
      %v1796 = vsel %vm595, %v1739, 0
      %v1799 = vsel %vm595, %v1740, 0
      %v1802 = vsel %vm595, %v1741, 0
      %v1805 = vsel %vm595, %v1742, 0
      %v1808 = vsel %vm595, %v1743, 0
      %v1811 = vsel %vm595, %v1744, 0
      %v1814 = vsel %vm595, %v1745, 0
      %v1817 = vsel %vm595, %v1746, 0
      %v1820 = vsel %vm668, %v1626, 0
      %1822 = vmatprep.subr.bf16.mxu0 0
      %1823 = vmatpush1.bf16.msra.mxu0 0
      %1824 = vmatprep.subr.bf16.mxu0 0
      %1825 = vmatpush1.bf16.msra.mxu0 0
      %1826 = vmatprep.subr.bf16.mxu0 0
      %1827 = vmatpush1.bf16.msra.mxu0 0
      %1828 = vmatprep.subr.bf16.mxu0 0
      %1829 = vmatpush1.bf16.msra.mxu0 0
      %1830 = vmatprep.subr.bf16.mxu0 0
      %1831 = vmatpush1.bf16.msra.mxu0 0
      %1832 = vmatprep.subr.bf16.mxu0 0
      %1833 = vmatpush1.bf16.msra.mxu0 0
      %1834 = vmatprep.subr.bf16.mxu0 0
      %1835 = vmatpush1.bf16.msra.mxu0 0
      %1836 = vmatprep.subr.bf16.mxu0 0
      %1837 = vmatpush1.bf16.msra.mxu0 %v1820
      %1838 = vmatprep.subr.bf16.mxu0 0
      %1839 = vmatpush2.bf16.msra.mxu0 0
      %1840 = vmatprep.subr.bf16.mxu0 0
      %1841 = vmatpush2.bf16.msra.mxu0 0
      %1842 = vmatprep.subr.bf16.mxu0 0
      %1843 = vmatpush2.bf16.msra.mxu0 0
      %1844 = vmatprep.subr.bf16.mxu0 0
      %1845 = vmatpush2.bf16.msra.mxu0 0
      %1846 = vmatprep.subr.bf16.mxu0 0
      %1847 = vmatpush2.bf16.msra.mxu0 0
      %1848 = vmatprep.subr.bf16.mxu0 0
      %1849 = vmatpush2.bf16.msra.mxu0 0
      %1850 = vmatprep.subr.bf16.mxu0 0
      %1851 = vmatpush2.bf16.msra.mxu0 0
      %1852 = vmatprep.subr.bf16.mxu0 0
      %1853 = vmatpush2.bf16.msra.mxu0 0
      %1854 = vmatprep.mubr.bf16.mxu0 0
      %1855 = vmatmul.mubr.bf16.gmra.mxu0 %v1748
      %v1856 = vpop.f32.mrf.mxu0
      %v1857 = vadd.f32 0.0, %v1856
      %v1858 = vpop.f32.mrf.mxu0
      %v1859 = vpop.f32.mrf.mxu0
      %v1860 = vadd.f32 0.0, %v1859
      %v1861 = vpop.f32.mrf.mxu0
      %1862 = vmatprep.mubr.bf16.mxu0 0
      %1863 = vmatmul.mubr.bf16.gmra.mxu0 %v1751
      %v1864 = vpop.f32.mrf.mxu0
      %v1865 = vadd.f32 0.0, %v1864
      %v1866 = vpop.f32.mrf.mxu0
      %v1867 = vpop.f32.mrf.mxu0
      %v1868 = vadd.f32 0.0, %v1867
      %v1869 = vpop.f32.mrf.mxu0
      %1870 = vmatprep.mubr.bf16.mxu0 0
      %1871 = vmatmul.mubr.bf16.gmra.mxu0 %v1754
      %v1872 = vpop.f32.mrf.mxu0
      %v1873 = vadd.f32 0.0, %v1872
      %v1874 = vpop.f32.mrf.mxu0
      %v1875 = vpop.f32.mrf.mxu0
      %v1876 = vadd.f32 0.0, %v1875
      %v1877 = vpop.f32.mrf.mxu0
      %1878 = vmatprep.mubr.bf16.mxu0 0
      %1879 = vmatmul.mubr.bf16.gmra.mxu0 %v1757
      %v1880 = vpop.f32.mrf.mxu0
      %v1881 = vadd.f32 0.0, %v1880
      %v1882 = vpop.f32.mrf.mxu0
      %v1883 = vpop.f32.mrf.mxu0
      %v1884 = vadd.f32 0.0, %v1883
      %v1885 = vpop.f32.mrf.mxu0
      %1886 = vmatprep.mubr.bf16.mxu0 0
      %1887 = vmatmul.mubr.bf16.gmra.mxu0 %v1760
      %v1888 = vpop.f32.mrf.mxu0
      %v1889 = vadd.f32 0.0, %v1888
      %v1890 = vpop.f32.mrf.mxu0
      %v1891 = vpop.f32.mrf.mxu0
      %v1892 = vadd.f32 0.0, %v1891
      %v1893 = vpop.f32.mrf.mxu0
      %1894 = vmatprep.mubr.bf16.mxu0 0
      %1895 = vmatmul.mubr.bf16.gmra.mxu0 %v1763
      %v1896 = vpop.f32.mrf.mxu0
      %v1897 = vadd.f32 0.0, %v1896
      %v1898 = vpop.f32.mrf.mxu0
      %v1899 = vpop.f32.mrf.mxu0
      %v1900 = vadd.f32 0.0, %v1899
      %v1901 = vpop.f32.mrf.mxu0
      %1902 = vmatprep.mubr.bf16.mxu0 0
      %1903 = vmatmul.mubr.bf16.gmra.mxu0 %v1766
      %v1904 = vpop.f32.mrf.mxu0
      %v1905 = vadd.f32 0.0, %v1904
      %v1906 = vpop.f32.mrf.mxu0
      %v1907 = vpop.f32.mrf.mxu0
      %v1908 = vadd.f32 0.0, %v1907
      %v1909 = vpop.f32.mrf.mxu0
      %1910 = vmatprep.mubr.bf16.mxu0 0
      %1911 = vmatmul.mubr.bf16.gmra.mxu0 %v1769
      %v1912 = vpop.f32.mrf.mxu0
      %v1913 = vadd.f32 0.0, %v1912
      %v1914 = vpop.f32.mrf.mxu0
      %v1915 = vpop.f32.mrf.mxu0
      %v1916 = vadd.f32 0.0, %v1915
      %v1917 = vpop.f32.mrf.mxu0
      %1918 = vmatprep.mubr.bf16.mxu0 0
      %1919 = vmatmul.mubr.bf16.gmra.mxu0 %v1772
      %v1920 = vpop.f32.mrf.mxu0
      %v1921 = vadd.f32 0.0, %v1920
      %v1922 = vpop.f32.mrf.mxu0
      %v1923 = vpop.f32.mrf.mxu0
      %v1924 = vadd.f32 0.0, %v1923
      %v1925 = vpop.f32.mrf.mxu0
      %1926 = vmatprep.mubr.bf16.mxu0 0
      %1927 = vmatmul.mubr.bf16.gmra.mxu0 %v1775
      %v1928 = vpop.f32.mrf.mxu0
      %v1929 = vadd.f32 0.0, %v1928
      %v1930 = vpop.f32.mrf.mxu0
      %v1931 = vpop.f32.mrf.mxu0
      %v1932 = vadd.f32 0.0, %v1931
      %v1933 = vpop.f32.mrf.mxu0
      %1934 = vmatprep.mubr.bf16.mxu0 0
      %1935 = vmatmul.mubr.bf16.gmra.mxu0 %v1778
      %v1936 = vpop.f32.mrf.mxu0
      %v1937 = vadd.f32 0.0, %v1936
      %v1938 = vpop.f32.mrf.mxu0
      %v1939 = vpop.f32.mrf.mxu0
      %v1940 = vadd.f32 0.0, %v1939
      %v1941 = vpop.f32.mrf.mxu0
      %1942 = vmatprep.mubr.bf16.mxu0 0
      %1943 = vmatmul.mubr.bf16.gmra.mxu0 %v1781
      %v1944 = vpop.f32.mrf.mxu0
      %v1945 = vadd.f32 0.0, %v1944
      %v1946 = vpop.f32.mrf.mxu0
      %v1947 = vpop.f32.mrf.mxu0
      %v1948 = vadd.f32 0.0, %v1947
      %v1949 = vpop.f32.mrf.mxu0
      %1950 = vmatprep.mubr.bf16.mxu0 0
      %1951 = vmatmul.mubr.bf16.gmra.mxu0 %v1784
      %v1952 = vpop.f32.mrf.mxu0
      %v1953 = vadd.f32 0.0, %v1952
      %v1954 = vpop.f32.mrf.mxu0
      %v1955 = vpop.f32.mrf.mxu0
      %v1956 = vadd.f32 0.0, %v1955
      %v1957 = vpop.f32.mrf.mxu0
      %1958 = vmatprep.mubr.bf16.mxu0 0
      %1959 = vmatmul.mubr.bf16.gmra.mxu0 %v1787
      %v1960 = vpop.f32.mrf.mxu0
      %v1961 = vadd.f32 0.0, %v1960
      %v1962 = vpop.f32.mrf.mxu0
      %v1963 = vpop.f32.mrf.mxu0
      %v1964 = vadd.f32 0.0, %v1963
      %v1965 = vpop.f32.mrf.mxu0
      %1966 = vmatprep.mubr.bf16.mxu0 0
      %1967 = vmatmul.mubr.bf16.gmra.mxu0 %v1790
      %v1968 = vpop.f32.mrf.mxu0
      %v1969 = vadd.f32 0.0, %v1968
      %v1970 = vpop.f32.mrf.mxu0
      %v1971 = vpop.f32.mrf.mxu0
      %v1972 = vadd.f32 0.0, %v1971
      %v1973 = vpop.f32.mrf.mxu0
      %1974 = vmatprep.mubr.bf16.mxu0 0
      %1975 = vmatmul.mubr.bf16.gmra.mxu0 %v1793
      %v1976 = vpop.f32.mrf.mxu0
      %v1977 = vadd.f32 0.0, %v1976
      %v1978 = vpop.f32.mrf.mxu0
      %v1979 = vpop.f32.mrf.mxu0
      %v1980 = vadd.f32 0.0, %v1979
      %v1981 = vpop.f32.mrf.mxu0
      %1982 = vmatprep.mubr.bf16.mxu0 0
      %1983 = vmatmul.mubr.bf16.gmra.mxu0 %v1796
      %v1984 = vpop.f32.mrf.mxu0
      %v1985 = vadd.f32 0.0, %v1984
      %v1986 = vpop.f32.mrf.mxu0
      %v1987 = vpop.f32.mrf.mxu0
      %v1988 = vadd.f32 0.0, %v1987
      %v1989 = vpop.f32.mrf.mxu0
      %1990 = vmatprep.mubr.bf16.mxu0 0
      %1991 = vmatmul.mubr.bf16.gmra.mxu0 %v1799
      %v1992 = vpop.f32.mrf.mxu0
      %v1993 = vadd.f32 0.0, %v1992
      %v1994 = vpop.f32.mrf.mxu0
      %v1995 = vpop.f32.mrf.mxu0
      %v1996 = vadd.f32 0.0, %v1995
      %v1997 = vpop.f32.mrf.mxu0
      %1998 = vmatprep.mubr.bf16.mxu0 0
      %1999 = vmatmul.mubr.bf16.gmra.mxu0 %v1802
      %v2000 = vpop.f32.mrf.mxu0
      %v2001 = vadd.f32 0.0, %v2000
      %v2002 = vpop.f32.mrf.mxu0
      %v2003 = vpop.f32.mrf.mxu0
      %v2004 = vadd.f32 0.0, %v2003
      %v2005 = vpop.f32.mrf.mxu0
      %2006 = vmatprep.mubr.bf16.mxu0 0
      %2007 = vmatmul.mubr.bf16.gmra.mxu0 %v1805
      %v2008 = vpop.f32.mrf.mxu0
      %v2009 = vadd.f32 0.0, %v2008
      %v2010 = vpop.f32.mrf.mxu0
      %v2011 = vpop.f32.mrf.mxu0
      %v2012 = vadd.f32 0.0, %v2011
      %v2013 = vpop.f32.mrf.mxu0
      %2014 = vmatprep.mubr.bf16.mxu0 0
      %2015 = vmatmul.mubr.bf16.gmra.mxu0 %v1808
      %v2016 = vpop.f32.mrf.mxu0
      %v2017 = vadd.f32 0.0, %v2016
      %v2018 = vpop.f32.mrf.mxu0
      %v2019 = vpop.f32.mrf.mxu0
      %v2020 = vadd.f32 0.0, %v2019
      %v2021 = vpop.f32.mrf.mxu0
      %2022 = vmatprep.mubr.bf16.mxu0 0
      %2023 = vmatmul.mubr.bf16.gmra.mxu0 %v1811
      %v2024 = vpop.f32.mrf.mxu0
      %v2025 = vadd.f32 0.0, %v2024
      %v2026 = vpop.f32.mrf.mxu0
      %v2027 = vpop.f32.mrf.mxu0
      %v2028 = vadd.f32 0.0, %v2027
      %v2029 = vpop.f32.mrf.mxu0
      %2030 = vmatprep.mubr.bf16.mxu0 0
      %2031 = vmatmul.mubr.bf16.gmra.mxu0 %v1814
      %v2032 = vpop.f32.mrf.mxu0
      %v2033 = vadd.f32 0.0, %v2032
      %v2034 = vpop.f32.mrf.mxu0
      %v2035 = vpop.f32.mrf.mxu0
      %v2036 = vadd.f32 0.0, %v2035
      %v2037 = vpop.f32.mrf.mxu0
      %2038 = vmatprep.mubr.bf16.mxu0 0
      %2039 = vmatmul.mubr.bf16.gmra.mxu0 %v1817
      %v2040 = vpop.f32.mrf.mxu0
      %v2041 = vadd.f32 0.0, %v2040
      %v2042 = vpop.f32.mrf.mxu0
      %v2043 = vpop.f32.mrf.mxu0
      %v2044 = vadd.f32 0.0, %v2043
      %v2045 = vpop.f32.mrf.mxu0
      %2046 = vdwg.mxu0
      %v2047 = vadd.f32 %v1529, %v1857
      %v2048 = vadd.f32 %v1530, %v1860
      %v2049 = vadd.f32 %v1531, %v1865
      %v2050 = vadd.f32 %v1532, %v1868
      %v2051 = vadd.f32 %v1533, %v1873
      %v2052 = vadd.f32 %v1534, %v1876
      %v2053 = vadd.f32 %v1535, %v1881
      %v2054 = vadd.f32 %v1536, %v1884
      %v2055 = vadd.f32 %v1537, %v1889
      %v2056 = vadd.f32 %v1538, %v1892
      %v2057 = vadd.f32 %v1539, %v1897
      %v2058 = vadd.f32 %v1540, %v1900
      %v2059 = vadd.f32 %v1541, %v1905
      %v2060 = vadd.f32 %v1542, %v1908
      %v2061 = vadd.f32 %v1543, %v1913
      %v2062 = vadd.f32 %v1544, %v1916
      %v2063 = vadd.f32 %v1545, %v1921
      %v2064 = vadd.f32 %v1546, %v1924
      %v2065 = vadd.f32 %v1547, %v1929
      %v2066 = vadd.f32 %v1548, %v1932
      %v2067 = vadd.f32 %v1549, %v1937
      %v2068 = vadd.f32 %v1550, %v1940
      %v2069 = vadd.f32 %v1551, %v1945
      %v2070 = vadd.f32 %v1552, %v1948
      %v2071 = vadd.f32 %v1553, %v1953
      %v2072 = vadd.f32 %v1554, %v1956
      %v2073 = vadd.f32 %v1555, %v1961
      %v2074 = vadd.f32 %v1556, %v1964
      %v2075 = vadd.f32 %v1557, %v1969
      %v2076 = vadd.f32 %v1558, %v1972
      %v2077 = vadd.f32 %v1559, %v1977
      %v2078 = vadd.f32 %v1560, %v1980
      %v2079 = vadd.f32 %v1561, %v1985
      %v2080 = vadd.f32 %v1562, %v1988
      %v2081 = vadd.f32 %v1563, %v1993
      %v2082 = vadd.f32 %v1564, %v1996
      %v2083 = vadd.f32 %v1565, %v2001
      %v2084 = vadd.f32 %v1566, %v2004
      %v2085 = vadd.f32 %v1567, %v2009
      %v2086 = vadd.f32 %v1568, %v2012
      %v2087 = vadd.f32 %v1569, %v2017
      %v2088 = vadd.f32 %v1570, %v2020
      %v2089 = vadd.f32 %v1571, %v2025
      %v2090 = vadd.f32 %v1572, %v2028
      %v2091 = vadd.f32 %v1573, %v2033
      %v2092 = vadd.f32 %v1574, %v2036
      %v2093 = vadd.f32 %v1575, %v2041
      %v2094 = vadd.f32 %v1576, %v2044
      %v2095 = vld [vmem:[%s206 + $0xc] sm:$0xf]
      %v2096 = vld [vmem:[%s206 + $0x10] sm:$0xf]
      %v2097 = vld [vmem:[%s206 + $0x14] sm:$0xf]
      %v2098 = vld [vmem:[%s206 + $0x18] sm:$0xf]
      %v2099 = vld [vmem:[%s206 + $0x1c] sm:$0xf]
      %v2100 = vld [vmem:[%s206 + $0x20] sm:$0xf]
      %v2101 = vld [vmem:[%s206 + $0x24] sm:$0xf]
      %v2102 = vld [vmem:[%s206 + $0x28] sm:$0xf]
      %v2103 = vld [vmem:[%s206 + $0x2c] sm:$0xf]
      %v2104 = vld [vmem:[%s206 + $0x30] sm:$0xf]
      %v2105 = vld [vmem:[%s206 + $0x34] sm:$0xf]
      %v2106 = vld [vmem:[%s206 + $0x38] sm:$0xf]
      %v2107 = vld [vmem:[%s206 + $0x3c] sm:$0xf]
      %v2108 = vld [vmem:[%s206 + $0x40] sm:$0xf]
      %v2109 = vld [vmem:[%s206 + $0x44] sm:$0xf]
      %v2110 = vld [vmem:[%s206 + $0x48] sm:$0xf]
      %v2111 = vld [vmem:[%s206 + $0x4c] sm:$0xf]
      %v2112 = vld [vmem:[%s206 + $0x50] sm:$0xf]
      %v2113 = vld [vmem:[%s206 + $0x54] sm:$0xf]
      %v2114 = vld [vmem:[%s206 + $0x58] sm:$0xf]
      %v2115 = vld [vmem:[%s206 + $0x5c] sm:$0xf]
      %v2116 = vld [vmem:[%s206 + $0x60] sm:$0xf]
      %v2117 = vld [vmem:[%s206 + $0x64] sm:$0xf]
      %v2118 = vld [vmem:[%s206 + $0x68] sm:$0xf]
      %v2119 = vld [vmem:[%s206 + $0x6c] sm:$0xf]
      %v2120 = vld [vmem:[%s206 + $0x70] sm:$0xf]
      %v2121 = vld [vmem:[%s206 + $0x74] sm:$0xf]
      %v2122 = vld [vmem:[%s206 + $0x78] sm:$0xf]
      %v2123 = vld [vmem:[%s206 + $0x7c] sm:$0xf]
      %v2124 = vld [vmem:[%s206 + $0x80] sm:$0xf]
      %v2125 = vld [vmem:[%s206 + $0x84] sm:$0xf]
      %v2126 = vld [vmem:[%s206 + $0x88] sm:$0xf]
      %v2127 = vld [vmem:[%s206 + $0x8c] sm:$0xf]
      %v2128 = vld [vmem:[%s206 + $0x90] sm:$0xf]
      %v2129 = vld [vmem:[%s206 + $0x94] sm:$0xf]
      %v2130 = vld [vmem:[%s206 + $0x98] sm:$0xf]
      %v2131 = vld [vmem:[%s206 + $0x9c] sm:$0xf]
      %v2132 = vld [vmem:[%s206 + $0xa0] sm:$0xf]
      %v2133 = vld [vmem:[%s206 + $0xa4] sm:$0xf]
      %v2134 = vld [vmem:[%s206 + $0xa8] sm:$0xf]
      %v2135 = vld [vmem:[%s206 + $0xac] sm:$0xf]
      %v2136 = vld [vmem:[%s206 + $0xb0] sm:$0xf]
      %v2137 = vld [vmem:[%s206 + $0xb4] sm:$0xf]
      %v2138 = vld [vmem:[%s206 + $0xb8] sm:$0xf]
      %v2139 = vld [vmem:[%s206 + $0xbc] sm:$0xf]
      %v2140 = vld [vmem:[%s206 + $0xc0] sm:$0xf]
      %v2141 = vld [vmem:[%s206 + $0xc4] sm:$0xf]
      %v2142 = vld [vmem:[%s206 + $0xc8] sm:$0xf]
      %v2143 = vld [vmem:[%s206 + $0xcc] sm:$0x1]
      %s2144 = scalar_lea.vmem %s210, 16
      %v2145 = vld [vmem:[%s2144] sm:$0xf]
      %v2195 = vunpack.c.l.b16 %v2095
      %v2196 = vunpack.c.l.b16 %v2096
      %v2197 = vunpack.c.l.b16 %v2097
      %v2198 = vunpack.c.l.b16 %v2098
      %v2199 = vunpack.c.l.b16 %v2099
      %v2200 = vunpack.c.l.b16 %v2100
      %v2201 = vunpack.c.l.b16 %v2101
      %v2202 = vunpack.c.l.b16 %v2102
      %v2203 = vunpack.c.l.b16 %v2103
      %v2204 = vunpack.c.l.b16 %v2104
      %v2205 = vunpack.c.l.b16 %v2105
      %v2206 = vunpack.c.l.b16 %v2106
      %v2207 = vunpack.c.l.b16 %v2107
      %v2208 = vunpack.c.l.b16 %v2108
      %v2209 = vunpack.c.l.b16 %v2109
      %v2210 = vunpack.c.l.b16 %v2110
      %v2211 = vunpack.c.l.b16 %v2111
      %v2212 = vunpack.c.l.b16 %v2112
      %v2213 = vunpack.c.l.b16 %v2113
      %v2214 = vunpack.c.l.b16 %v2114
      %v2215 = vunpack.c.l.b16 %v2115
      %v2216 = vunpack.c.l.b16 %v2116
      %v2217 = vunpack.c.l.b16 %v2117
      %v2218 = vunpack.c.l.b16 %v2118
      %v2219 = vunpack.c.l.b16 %v2119
      %v2220 = vunpack.c.l.b16 %v2120
      %v2221 = vunpack.c.l.b16 %v2121
      %v2222 = vunpack.c.l.b16 %v2122
      %v2223 = vunpack.c.l.b16 %v2123
      %v2224 = vunpack.c.l.b16 %v2124
      %v2225 = vunpack.c.l.b16 %v2125
      %v2226 = vunpack.c.l.b16 %v2126
      %v2227 = vunpack.c.l.b16 %v2127
      %v2228 = vunpack.c.l.b16 %v2128
      %v2229 = vunpack.c.l.b16 %v2129
      %v2230 = vunpack.c.l.b16 %v2130
      %v2231 = vunpack.c.l.b16 %v2131
      %v2232 = vunpack.c.l.b16 %v2132
      %v2233 = vunpack.c.l.b16 %v2133
      %v2234 = vunpack.c.l.b16 %v2134
      %v2235 = vunpack.c.l.b16 %v2135
      %v2236 = vunpack.c.l.b16 %v2136
      %v2237 = vunpack.c.l.b16 %v2137
      %v2238 = vunpack.c.l.b16 %v2138
      %v2239 = vunpack.c.l.b16 %v2139
      %v2240 = vunpack.c.l.b16 %v2140
      %v2241 = vunpack.c.l.b16 %v2141
      %v2242 = vunpack.c.l.b16 %v2142
      %v2243 = vunpack.c.l.b16 %v2143
      %v2244 = vpack.c.b16 %v2196, %v2195
      %v2245 = vpack.c.b16 %v2198, %v2197
      %v2246 = vpack.c.b16 %v2200, %v2199
      %v2247 = vpack.c.b16 %v2202, %v2201
      %v2248 = vpack.c.b16 %v2204, %v2203
      %v2249 = vpack.c.b16 %v2206, %v2205
      %v2250 = vpack.c.b16 %v2208, %v2207
      %v2251 = vpack.c.b16 %v2210, %v2209
      %v2252 = vpack.c.b16 %v2212, %v2211
      %v2253 = vpack.c.b16 %v2214, %v2213
      %v2254 = vpack.c.b16 %v2216, %v2215
      %v2255 = vpack.c.b16 %v2218, %v2217
      %v2256 = vpack.c.b16 %v2220, %v2219
      %v2257 = vpack.c.b16 %v2222, %v2221
      %v2258 = vpack.c.b16 %v2224, %v2223
      %v2259 = vpack.c.b16 %v2226, %v2225
      %v2260 = vpack.c.b16 %v2228, %v2227
      %v2261 = vpack.c.b16 %v2230, %v2229
      %v2262 = vpack.c.b16 %v2232, %v2231
      %v2263 = vpack.c.b16 %v2234, %v2233
      %v2264 = vpack.c.b16 %v2236, %v2235
      %v2265 = vpack.c.b16 %v2238, %v2237
      %v2266 = vpack.c.b16 %v2240, %v2239
      %v2267 = vpack.c.b16 %v2242, %v2241
      %v2268 = vpack.c.b16 %v2243, %v2243
      %v2270 = vshrl.u32 %v2244, 16
      %v2272 = vshll.u32 %v2244, 16
      %v2274 = vrot.slane %v2272, 1
      %v2275 = vor.u32 %v2270, %v2274
      %v2277 = vshll.u32 %v2245, 16
      %v2279 = vrot.slane %v2277, 1
      %v2280 = vsel %vm398, %v2275, %v2279
      %v2281 = vshrl.u32 %v2245, 16
      %v2283 = vor.u32 %v2281, %v2279
      %v2285 = vshll.u32 %v2246, 16
      %v2287 = vrot.slane %v2285, 1
      %v2288 = vsel %vm398, %v2283, %v2287
      %v2289 = vshrl.u32 %v2246, 16
      %v2291 = vor.u32 %v2289, %v2287
      %v2293 = vshll.u32 %v2247, 16
      %v2295 = vrot.slane %v2293, 1
      %v2296 = vsel %vm398, %v2291, %v2295
      %v2297 = vshrl.u32 %v2247, 16
      %v2299 = vor.u32 %v2297, %v2295
      %v2301 = vshll.u32 %v2248, 16
      %v2303 = vrot.slane %v2301, 1
      %v2304 = vsel %vm398, %v2299, %v2303
      %v2305 = vshrl.u32 %v2248, 16
      %v2307 = vor.u32 %v2305, %v2303
      %v2309 = vshll.u32 %v2249, 16
      %v2311 = vrot.slane %v2309, 1
      %v2312 = vsel %vm398, %v2307, %v2311
      %v2313 = vshrl.u32 %v2249, 16
      %v2315 = vor.u32 %v2313, %v2311
      %v2317 = vshll.u32 %v2250, 16
      %v2319 = vrot.slane %v2317, 1
      %v2320 = vsel %vm398, %v2315, %v2319
      %v2321 = vshrl.u32 %v2250, 16
      %v2323 = vor.u32 %v2321, %v2319
      %v2325 = vshll.u32 %v2251, 16
      %v2327 = vrot.slane %v2325, 1
      %v2328 = vsel %vm398, %v2323, %v2327
      %v2329 = vshrl.u32 %v2251, 16
      %v2331 = vor.u32 %v2329, %v2327
      %v2333 = vshll.u32 %v2252, 16
      %v2335 = vrot.slane %v2333, 1
      %v2336 = vsel %vm398, %v2331, %v2335
      %v2337 = vshrl.u32 %v2252, 16
      %v2339 = vor.u32 %v2337, %v2335
      %v2341 = vshll.u32 %v2253, 16
      %v2343 = vrot.slane %v2341, 1
      %v2344 = vsel %vm398, %v2339, %v2343
      %v2345 = vshrl.u32 %v2253, 16
      %v2347 = vor.u32 %v2345, %v2343
      %v2349 = vshll.u32 %v2254, 16
      %v2351 = vrot.slane %v2349, 1
      %v2352 = vsel %vm398, %v2347, %v2351
      %v2353 = vshrl.u32 %v2254, 16
      %v2355 = vor.u32 %v2353, %v2351
      %v2357 = vshll.u32 %v2255, 16
      %v2359 = vrot.slane %v2357, 1
      %v2360 = vsel %vm398, %v2355, %v2359
      %v2361 = vshrl.u32 %v2255, 16
      %v2363 = vor.u32 %v2361, %v2359
      %v2365 = vshll.u32 %v2256, 16
      %v2367 = vrot.slane %v2365, 1
      %v2368 = vsel %vm398, %v2363, %v2367
      %v2369 = vshrl.u32 %v2256, 16
      %v2371 = vor.u32 %v2369, %v2367
      %v2373 = vshll.u32 %v2257, 16
      %v2375 = vrot.slane %v2373, 1
      %v2376 = vsel %vm398, %v2371, %v2375
      %v2377 = vshrl.u32 %v2257, 16
      %v2379 = vor.u32 %v2377, %v2375
      %v2381 = vshll.u32 %v2258, 16
      %v2383 = vrot.slane %v2381, 1
      %v2384 = vsel %vm398, %v2379, %v2383
      %v2385 = vshrl.u32 %v2258, 16
      %v2387 = vor.u32 %v2385, %v2383
      %v2389 = vshll.u32 %v2259, 16
      %v2391 = vrot.slane %v2389, 1
      %v2392 = vsel %vm398, %v2387, %v2391
      %v2393 = vshrl.u32 %v2259, 16
      %v2395 = vor.u32 %v2393, %v2391
      %v2397 = vshll.u32 %v2260, 16
      %v2399 = vrot.slane %v2397, 1
      %v2400 = vsel %vm398, %v2395, %v2399
      %v2401 = vshrl.u32 %v2260, 16
      %v2403 = vor.u32 %v2401, %v2399
      %v2405 = vshll.u32 %v2261, 16
      %v2407 = vrot.slane %v2405, 1
      %v2408 = vsel %vm398, %v2403, %v2407
      %v2409 = vshrl.u32 %v2261, 16
      %v2411 = vor.u32 %v2409, %v2407
      %v2413 = vshll.u32 %v2262, 16
      %v2415 = vrot.slane %v2413, 1
      %v2416 = vsel %vm398, %v2411, %v2415
      %v2417 = vshrl.u32 %v2262, 16
      %v2419 = vor.u32 %v2417, %v2415
      %v2421 = vshll.u32 %v2263, 16
      %v2423 = vrot.slane %v2421, 1
      %v2424 = vsel %vm398, %v2419, %v2423
      %v2425 = vshrl.u32 %v2263, 16
      %v2427 = vor.u32 %v2425, %v2423
      %v2429 = vshll.u32 %v2264, 16
      %v2431 = vrot.slane %v2429, 1
      %v2432 = vsel %vm398, %v2427, %v2431
      %v2433 = vshrl.u32 %v2264, 16
      %v2435 = vor.u32 %v2433, %v2431
      %v2437 = vshll.u32 %v2265, 16
      %v2439 = vrot.slane %v2437, 1
      %v2440 = vsel %vm398, %v2435, %v2439
      %v2441 = vshrl.u32 %v2265, 16
      %v2443 = vor.u32 %v2441, %v2439
      %v2445 = vshll.u32 %v2266, 16
      %v2447 = vrot.slane %v2445, 1
      %v2448 = vsel %vm398, %v2443, %v2447
      %v2449 = vshrl.u32 %v2266, 16
      %v2451 = vor.u32 %v2449, %v2447
      %v2453 = vshll.u32 %v2267, 16
      %v2455 = vrot.slane %v2453, 1
      %v2456 = vsel %vm398, %v2451, %v2455
      %v2457 = vshrl.u32 %v2267, 16
      %v2459 = vor.u32 %v2457, %v2455
      %v2461 = vshll.u32 %v2268, 16
      %v2463 = vrot.slane %v2461, 1
      %v2464 = vsel %vm398, %v2459, %v2463
      %v2466 = vsel %vm595, %v2280, 0
      %v2469 = vsel %vm595, %v2288, 0
      %v2472 = vsel %vm595, %v2296, 0
      %v2475 = vsel %vm595, %v2304, 0
      %v2478 = vsel %vm595, %v2312, 0
      %v2481 = vsel %vm595, %v2320, 0
      %v2484 = vsel %vm595, %v2328, 0
      %v2487 = vsel %vm595, %v2336, 0
      %v2490 = vsel %vm595, %v2344, 0
      %v2493 = vsel %vm595, %v2352, 0
      %v2496 = vsel %vm595, %v2360, 0
      %v2499 = vsel %vm595, %v2368, 0
      %v2502 = vsel %vm595, %v2376, 0
      %v2505 = vsel %vm595, %v2384, 0
      %v2508 = vsel %vm595, %v2392, 0
      %v2511 = vsel %vm595, %v2400, 0
      %v2514 = vsel %vm595, %v2408, 0
      %v2517 = vsel %vm595, %v2416, 0
      %v2520 = vsel %vm595, %v2424, 0
      %v2523 = vsel %vm595, %v2432, 0
      %v2526 = vsel %vm595, %v2440, 0
      %v2529 = vsel %vm595, %v2448, 0
      %v2532 = vsel %vm595, %v2456, 0
      %v2535 = vsel %vm595, %v2464, 0
      %v2538 = vsel %vm668, %v2145, 0
      %2540 = vmatprep.subr.bf16.mxu0 0
      %2541 = vmatpush1.bf16.msra.mxu0 0
      %2542 = vmatprep.subr.bf16.mxu0 0
      %2543 = vmatpush1.bf16.msra.mxu0 0
      %2544 = vmatprep.subr.bf16.mxu0 0
      %2545 = vmatpush1.bf16.msra.mxu0 0
      %2546 = vmatprep.subr.bf16.mxu0 0
      %2547 = vmatpush1.bf16.msra.mxu0 0
      %2548 = vmatprep.subr.bf16.mxu0 0
      %2549 = vmatpush1.bf16.msra.mxu0 0
      %2550 = vmatprep.subr.bf16.mxu0 0
      %2551 = vmatpush1.bf16.msra.mxu0 0
      %2552 = vmatprep.subr.bf16.mxu0 0
      %2553 = vmatpush1.bf16.msra.mxu0 0
      %2554 = vmatprep.subr.bf16.mxu0 0
      %2555 = vmatpush1.bf16.msra.mxu0 %v2538
      %2556 = vmatprep.subr.bf16.mxu0 0
      %2557 = vmatpush2.bf16.msra.mxu0 0
      %2558 = vmatprep.subr.bf16.mxu0 0
      %2559 = vmatpush2.bf16.msra.mxu0 0
      %2560 = vmatprep.subr.bf16.mxu0 0
      %2561 = vmatpush2.bf16.msra.mxu0 0
      %2562 = vmatprep.subr.bf16.mxu0 0
      %2563 = vmatpush2.bf16.msra.mxu0 0
      %2564 = vmatprep.subr.bf16.mxu0 0
      %2565 = vmatpush2.bf16.msra.mxu0 0
      %2566 = vmatprep.subr.bf16.mxu0 0
      %2567 = vmatpush2.bf16.msra.mxu0 0
      %2568 = vmatprep.subr.bf16.mxu0 0
      %2569 = vmatpush2.bf16.msra.mxu0 0
      %2570 = vmatprep.subr.bf16.mxu0 0
      %2571 = vmatpush2.bf16.msra.mxu0 0
      %2572 = vmatprep.mubr.bf16.mxu0 0
      %2573 = vmatmul.mubr.bf16.gmra.mxu0 %v2466
      %v2574 = vpop.f32.mrf.mxu0
      %v2575 = vadd.f32 0.0, %v2574
      %v2576 = vpop.f32.mrf.mxu0
      %v2577 = vpop.f32.mrf.mxu0
      %v2578 = vadd.f32 0.0, %v2577
      %v2579 = vpop.f32.mrf.mxu0
      %2580 = vmatprep.mubr.bf16.mxu0 0
      %2581 = vmatmul.mubr.bf16.gmra.mxu0 %v2469
      %v2582 = vpop.f32.mrf.mxu0
      %v2583 = vadd.f32 0.0, %v2582
      %v2584 = vpop.f32.mrf.mxu0
      %v2585 = vpop.f32.mrf.mxu0
      %v2586 = vadd.f32 0.0, %v2585
      %v2587 = vpop.f32.mrf.mxu0
      %2588 = vmatprep.mubr.bf16.mxu0 0
      %2589 = vmatmul.mubr.bf16.gmra.mxu0 %v2472
      %v2590 = vpop.f32.mrf.mxu0
      %v2591 = vadd.f32 0.0, %v2590
      %v2592 = vpop.f32.mrf.mxu0
      %v2593 = vpop.f32.mrf.mxu0
      %v2594 = vadd.f32 0.0, %v2593
      %v2595 = vpop.f32.mrf.mxu0
      %2596 = vmatprep.mubr.bf16.mxu0 0
      %2597 = vmatmul.mubr.bf16.gmra.mxu0 %v2475
      %v2598 = vpop.f32.mrf.mxu0
      %v2599 = vadd.f32 0.0, %v2598
      %v2600 = vpop.f32.mrf.mxu0
      %v2601 = vpop.f32.mrf.mxu0
      %v2602 = vadd.f32 0.0, %v2601
      %v2603 = vpop.f32.mrf.mxu0
      %2604 = vmatprep.mubr.bf16.mxu0 0
      %2605 = vmatmul.mubr.bf16.gmra.mxu0 %v2478
      %v2606 = vpop.f32.mrf.mxu0
      %v2607 = vadd.f32 0.0, %v2606
      %v2608 = vpop.f32.mrf.mxu0
      %v2609 = vpop.f32.mrf.mxu0
      %v2610 = vadd.f32 0.0, %v2609
      %v2611 = vpop.f32.mrf.mxu0
      %2612 = vmatprep.mubr.bf16.mxu0 0
      %2613 = vmatmul.mubr.bf16.gmra.mxu0 %v2481
      %v2614 = vpop.f32.mrf.mxu0
      %v2615 = vadd.f32 0.0, %v2614
      %v2616 = vpop.f32.mrf.mxu0
      %v2617 = vpop.f32.mrf.mxu0
      %v2618 = vadd.f32 0.0, %v2617
      %v2619 = vpop.f32.mrf.mxu0
      %2620 = vmatprep.mubr.bf16.mxu0 0
      %2621 = vmatmul.mubr.bf16.gmra.mxu0 %v2484
      %v2622 = vpop.f32.mrf.mxu0
      %v2623 = vadd.f32 0.0, %v2622
      %v2624 = vpop.f32.mrf.mxu0
      %v2625 = vpop.f32.mrf.mxu0
      %v2626 = vadd.f32 0.0, %v2625
      %v2627 = vpop.f32.mrf.mxu0
      %2628 = vmatprep.mubr.bf16.mxu0 0
      %2629 = vmatmul.mubr.bf16.gmra.mxu0 %v2487
      %v2630 = vpop.f32.mrf.mxu0
      %v2631 = vadd.f32 0.0, %v2630
      %v2632 = vpop.f32.mrf.mxu0
      %v2633 = vpop.f32.mrf.mxu0
      %v2634 = vadd.f32 0.0, %v2633
      %v2635 = vpop.f32.mrf.mxu0
      %2636 = vmatprep.mubr.bf16.mxu0 0
      %2637 = vmatmul.mubr.bf16.gmra.mxu0 %v2490
      %v2638 = vpop.f32.mrf.mxu0
      %v2639 = vadd.f32 0.0, %v2638
      %v2640 = vpop.f32.mrf.mxu0
      %v2641 = vpop.f32.mrf.mxu0
      %v2642 = vadd.f32 0.0, %v2641
      %v2643 = vpop.f32.mrf.mxu0
      %2644 = vmatprep.mubr.bf16.mxu0 0
      %2645 = vmatmul.mubr.bf16.gmra.mxu0 %v2493
      %v2646 = vpop.f32.mrf.mxu0
      %v2647 = vadd.f32 0.0, %v2646
      %v2648 = vpop.f32.mrf.mxu0
      %v2649 = vpop.f32.mrf.mxu0
      %v2650 = vadd.f32 0.0, %v2649
      %v2651 = vpop.f32.mrf.mxu0
      %2652 = vmatprep.mubr.bf16.mxu0 0
      %2653 = vmatmul.mubr.bf16.gmra.mxu0 %v2496
      %v2654 = vpop.f32.mrf.mxu0
      %v2655 = vadd.f32 0.0, %v2654
      %v2656 = vpop.f32.mrf.mxu0
      %v2657 = vpop.f32.mrf.mxu0
      %v2658 = vadd.f32 0.0, %v2657
      %v2659 = vpop.f32.mrf.mxu0
      %2660 = vmatprep.mubr.bf16.mxu0 0
      %2661 = vmatmul.mubr.bf16.gmra.mxu0 %v2499
      %v2662 = vpop.f32.mrf.mxu0
      %v2663 = vadd.f32 0.0, %v2662
      %v2664 = vpop.f32.mrf.mxu0
      %v2665 = vpop.f32.mrf.mxu0
      %v2666 = vadd.f32 0.0, %v2665
      %v2667 = vpop.f32.mrf.mxu0
      %2668 = vmatprep.mubr.bf16.mxu0 0
      %2669 = vmatmul.mubr.bf16.gmra.mxu0 %v2502
      %v2670 = vpop.f32.mrf.mxu0
      %v2671 = vadd.f32 0.0, %v2670
      %v2672 = vpop.f32.mrf.mxu0
      %v2673 = vpop.f32.mrf.mxu0
      %v2674 = vadd.f32 0.0, %v2673
      %v2675 = vpop.f32.mrf.mxu0
      %2676 = vmatprep.mubr.bf16.mxu0 0
      %2677 = vmatmul.mubr.bf16.gmra.mxu0 %v2505
      %v2678 = vpop.f32.mrf.mxu0
      %v2679 = vadd.f32 0.0, %v2678
      %v2680 = vpop.f32.mrf.mxu0
      %v2681 = vpop.f32.mrf.mxu0
      %v2682 = vadd.f32 0.0, %v2681
      %v2683 = vpop.f32.mrf.mxu0
      %2684 = vmatprep.mubr.bf16.mxu0 0
      %2685 = vmatmul.mubr.bf16.gmra.mxu0 %v2508
      %v2686 = vpop.f32.mrf.mxu0
      %v2687 = vadd.f32 0.0, %v2686
      %v2688 = vpop.f32.mrf.mxu0
      %v2689 = vpop.f32.mrf.mxu0
      %v2690 = vadd.f32 0.0, %v2689
      %v2691 = vpop.f32.mrf.mxu0
      %2692 = vmatprep.mubr.bf16.mxu0 0
      %2693 = vmatmul.mubr.bf16.gmra.mxu0 %v2511
      %v2694 = vpop.f32.mrf.mxu0
      %v2695 = vadd.f32 0.0, %v2694
      %v2696 = vpop.f32.mrf.mxu0
      %v2697 = vpop.f32.mrf.mxu0
      %v2698 = vadd.f32 0.0, %v2697
      %v2699 = vpop.f32.mrf.mxu0
      %2700 = vmatprep.mubr.bf16.mxu0 0
      %2701 = vmatmul.mubr.bf16.gmra.mxu0 %v2514
      %v2702 = vpop.f32.mrf.mxu0
      %v2703 = vadd.f32 0.0, %v2702
      %v2704 = vpop.f32.mrf.mxu0
      %v2705 = vpop.f32.mrf.mxu0
      %v2706 = vadd.f32 0.0, %v2705
      %v2707 = vpop.f32.mrf.mxu0
      %2708 = vmatprep.mubr.bf16.mxu0 0
      %2709 = vmatmul.mubr.bf16.gmra.mxu0 %v2517
      %v2710 = vpop.f32.mrf.mxu0
      %v2711 = vadd.f32 0.0, %v2710
      %v2712 = vpop.f32.mrf.mxu0
      %v2713 = vpop.f32.mrf.mxu0
      %v2714 = vadd.f32 0.0, %v2713
      %v2715 = vpop.f32.mrf.mxu0
      %2716 = vmatprep.mubr.bf16.mxu0 0
      %2717 = vmatmul.mubr.bf16.gmra.mxu0 %v2520
      %v2718 = vpop.f32.mrf.mxu0
      %v2719 = vadd.f32 0.0, %v2718
      %v2720 = vpop.f32.mrf.mxu0
      %v2721 = vpop.f32.mrf.mxu0
      %v2722 = vadd.f32 0.0, %v2721
      %v2723 = vpop.f32.mrf.mxu0
      %2724 = vmatprep.mubr.bf16.mxu0 0
      %2725 = vmatmul.mubr.bf16.gmra.mxu0 %v2523
      %v2726 = vpop.f32.mrf.mxu0
      %v2727 = vadd.f32 0.0, %v2726
      %v2728 = vpop.f32.mrf.mxu0
      %v2729 = vpop.f32.mrf.mxu0
      %v2730 = vadd.f32 0.0, %v2729
      %v2731 = vpop.f32.mrf.mxu0
      %2732 = vmatprep.mubr.bf16.mxu0 0
      %2733 = vmatmul.mubr.bf16.gmra.mxu0 %v2526
      %v2734 = vpop.f32.mrf.mxu0
      %v2735 = vadd.f32 0.0, %v2734
      %v2736 = vpop.f32.mrf.mxu0
      %v2737 = vpop.f32.mrf.mxu0
      %v2738 = vadd.f32 0.0, %v2737
      %v2739 = vpop.f32.mrf.mxu0
      %2740 = vmatprep.mubr.bf16.mxu0 0
      %2741 = vmatmul.mubr.bf16.gmra.mxu0 %v2529
      %v2742 = vpop.f32.mrf.mxu0
      %v2743 = vadd.f32 0.0, %v2742
      %v2744 = vpop.f32.mrf.mxu0
      %v2745 = vpop.f32.mrf.mxu0
      %v2746 = vadd.f32 0.0, %v2745
      %v2747 = vpop.f32.mrf.mxu0
      %2748 = vmatprep.mubr.bf16.mxu0 0
      %2749 = vmatmul.mubr.bf16.gmra.mxu0 %v2532
      %v2750 = vpop.f32.mrf.mxu0
      %v2751 = vadd.f32 0.0, %v2750
      %v2752 = vpop.f32.mrf.mxu0
      %v2753 = vpop.f32.mrf.mxu0
      %v2754 = vadd.f32 0.0, %v2753
      %v2755 = vpop.f32.mrf.mxu0
      %2756 = vmatprep.mubr.bf16.mxu0 0
      %2757 = vmatmul.mubr.bf16.gmra.mxu0 %v2535
      %v2758 = vpop.f32.mrf.mxu0
      %v2759 = vadd.f32 0.0, %v2758
      %v2760 = vpop.f32.mrf.mxu0
      %v2761 = vpop.f32.mrf.mxu0
      %v2762 = vadd.f32 0.0, %v2761
      %v2763 = vpop.f32.mrf.mxu0
      %2764 = vdwg.mxu0
      %v2765 = vadd.f32 %v2047, %v2575
      %v2766 = vadd.f32 %v2048, %v2578
      %v2767 = vadd.f32 %v2049, %v2583
      %v2768 = vadd.f32 %v2050, %v2586
      %v2769 = vadd.f32 %v2051, %v2591
      %v2770 = vadd.f32 %v2052, %v2594
      %v2771 = vadd.f32 %v2053, %v2599
      %v2772 = vadd.f32 %v2054, %v2602
      %v2773 = vadd.f32 %v2055, %v2607
      %v2774 = vadd.f32 %v2056, %v2610
      %v2775 = vadd.f32 %v2057, %v2615
      %v2776 = vadd.f32 %v2058, %v2618
      %v2777 = vadd.f32 %v2059, %v2623
      %v2778 = vadd.f32 %v2060, %v2626
      %v2779 = vadd.f32 %v2061, %v2631
      %v2780 = vadd.f32 %v2062, %v2634
      %v2781 = vadd.f32 %v2063, %v2639
      %v2782 = vadd.f32 %v2064, %v2642
      %v2783 = vadd.f32 %v2065, %v2647
      %v2784 = vadd.f32 %v2066, %v2650
      %v2785 = vadd.f32 %v2067, %v2655
      %v2786 = vadd.f32 %v2068, %v2658
      %v2787 = vadd.f32 %v2069, %v2663
      %v2788 = vadd.f32 %v2070, %v2666
      %v2789 = vadd.f32 %v2071, %v2671
      %v2790 = vadd.f32 %v2072, %v2674
      %v2791 = vadd.f32 %v2073, %v2679
      %v2792 = vadd.f32 %v2074, %v2682
      %v2793 = vadd.f32 %v2075, %v2687
      %v2794 = vadd.f32 %v2076, %v2690
      %v2795 = vadd.f32 %v2077, %v2695
      %v2796 = vadd.f32 %v2078, %v2698
      %v2797 = vadd.f32 %v2079, %v2703
      %v2798 = vadd.f32 %v2080, %v2706
      %v2799 = vadd.f32 %v2081, %v2711
      %v2800 = vadd.f32 %v2082, %v2714
      %v2801 = vadd.f32 %v2083, %v2719
      %v2802 = vadd.f32 %v2084, %v2722
      %v2803 = vadd.f32 %v2085, %v2727
      %v2804 = vadd.f32 %v2086, %v2730
      %v2805 = vadd.f32 %v2087, %v2735
      %v2806 = vadd.f32 %v2088, %v2738
      %v2807 = vadd.f32 %v2089, %v2743
      %v2808 = vadd.f32 %v2090, %v2746
      %v2809 = vadd.f32 %v2091, %v2751
      %v2810 = vadd.f32 %v2092, %v2754
      %v2811 = vadd.f32 %v2093, %v2759
      %v2812 = vadd.f32 %v2094, %v2762
      %v2813 = vld [vmem:[%s206 + $0xc] sm:$0xe]
      %s2814 = scalar_lea.vmem %s210, 20
      %v2815 = vld [vmem:[%s2814] sm:$0xf]
      %v2817 = vunpack.c.l.b16 %v2813
      %v2818 = vpack.c.b16 %v2196, %v2817
      %v2819 = vrot.slane %v2818, 1
      %v2820 = vrot.slane %v2245, 1
      %v2821 = vsel %vm1179, %v2819, %v2820
      %v2822 = vrot.slane %v2246, 1
      %v2823 = vsel %vm1179, %v2820, %v2822
      %v2824 = vrot.slane %v2247, 1
      %v2825 = vsel %vm1179, %v2822, %v2824
      %v2826 = vrot.slane %v2248, 1
      %v2827 = vsel %vm1179, %v2824, %v2826
      %v2828 = vrot.slane %v2249, 1
      %v2829 = vsel %vm1179, %v2826, %v2828
      %v2830 = vrot.slane %v2250, 1
      %v2831 = vsel %vm1179, %v2828, %v2830
      %v2832 = vrot.slane %v2251, 1
      %v2833 = vsel %vm1179, %v2830, %v2832
      %v2834 = vrot.slane %v2252, 1
      %v2835 = vsel %vm1179, %v2832, %v2834
      %v2836 = vrot.slane %v2253, 1
      %v2837 = vsel %vm1179, %v2834, %v2836
      %v2838 = vrot.slane %v2254, 1
      %v2839 = vsel %vm1179, %v2836, %v2838
      %v2840 = vrot.slane %v2255, 1
      %v2841 = vsel %vm1179, %v2838, %v2840
      %v2842 = vrot.slane %v2256, 1
      %v2843 = vsel %vm1179, %v2840, %v2842
      %v2844 = vrot.slane %v2257, 1
      %v2845 = vsel %vm1179, %v2842, %v2844
      %v2846 = vrot.slane %v2258, 1
      %v2847 = vsel %vm1179, %v2844, %v2846
      %v2848 = vrot.slane %v2259, 1
      %v2849 = vsel %vm1179, %v2846, %v2848
      %v2850 = vrot.slane %v2260, 1
      %v2851 = vsel %vm1179, %v2848, %v2850
      %v2852 = vrot.slane %v2261, 1
      %v2853 = vsel %vm1179, %v2850, %v2852
      %v2854 = vrot.slane %v2262, 1
      %v2855 = vsel %vm1179, %v2852, %v2854
      %v2856 = vrot.slane %v2263, 1
      %v2857 = vsel %vm1179, %v2854, %v2856
      %v2858 = vrot.slane %v2264, 1
      %v2859 = vsel %vm1179, %v2856, %v2858
      %v2860 = vrot.slane %v2265, 1
      %v2861 = vsel %vm1179, %v2858, %v2860
      %v2862 = vrot.slane %v2266, 1
      %v2863 = vsel %vm1179, %v2860, %v2862
      %v2864 = vrot.slane %v2267, 1
      %v2865 = vsel %vm1179, %v2862, %v2864
      %v2866 = vrot.slane %v2268, 1
      %v2867 = vsel %vm1179, %v2864, %v2866
      %v2869 = vsel %vm595, %v2821, 0
      %v2872 = vsel %vm595, %v2823, 0
      %v2875 = vsel %vm595, %v2825, 0
      %v2878 = vsel %vm595, %v2827, 0
      %v2881 = vsel %vm595, %v2829, 0
      %v2884 = vsel %vm595, %v2831, 0
      %v2887 = vsel %vm595, %v2833, 0
      %v2890 = vsel %vm595, %v2835, 0
      %v2893 = vsel %vm595, %v2837, 0
      %v2896 = vsel %vm595, %v2839, 0
      %v2899 = vsel %vm595, %v2841, 0
      %v2902 = vsel %vm595, %v2843, 0
      %v2905 = vsel %vm595, %v2845, 0
      %v2908 = vsel %vm595, %v2847, 0
      %v2911 = vsel %vm595, %v2849, 0
      %v2914 = vsel %vm595, %v2851, 0
      %v2917 = vsel %vm595, %v2853, 0
      %v2920 = vsel %vm595, %v2855, 0
      %v2923 = vsel %vm595, %v2857, 0
      %v2926 = vsel %vm595, %v2859, 0
      %v2929 = vsel %vm595, %v2861, 0
      %v2932 = vsel %vm595, %v2863, 0
      %v2935 = vsel %vm595, %v2865, 0
      %v2938 = vsel %vm595, %v2867, 0
      %v2941 = vsel %vm668, %v2815, 0
      %2943 = vmatprep.subr.bf16.mxu0 0
      %2944 = vmatpush1.bf16.msra.mxu0 0
      %2945 = vmatprep.subr.bf16.mxu0 0
      %2946 = vmatpush1.bf16.msra.mxu0 0
      %2947 = vmatprep.subr.bf16.mxu0 0
      %2948 = vmatpush1.bf16.msra.mxu0 0
      %2949 = vmatprep.subr.bf16.mxu0 0
      %2950 = vmatpush1.bf16.msra.mxu0 0
      %2951 = vmatprep.subr.bf16.mxu0 0
      %2952 = vmatpush1.bf16.msra.mxu0 0
      %2953 = vmatprep.subr.bf16.mxu0 0
      %2954 = vmatpush1.bf16.msra.mxu0 0
      %2955 = vmatprep.subr.bf16.mxu0 0
      %2956 = vmatpush1.bf16.msra.mxu0 0
      %2957 = vmatprep.subr.bf16.mxu0 0
      %2958 = vmatpush1.bf16.msra.mxu0 %v2941
      %2959 = vmatprep.subr.bf16.mxu0 0
      %2960 = vmatpush2.bf16.msra.mxu0 0
      %2961 = vmatprep.subr.bf16.mxu0 0
      %2962 = vmatpush2.bf16.msra.mxu0 0
      %2963 = vmatprep.subr.bf16.mxu0 0
      %2964 = vmatpush2.bf16.msra.mxu0 0
      %2965 = vmatprep.subr.bf16.mxu0 0
      %2966 = vmatpush2.bf16.msra.mxu0 0
      %2967 = vmatprep.subr.bf16.mxu0 0
      %2968 = vmatpush2.bf16.msra.mxu0 0
      %2969 = vmatprep.subr.bf16.mxu0 0
      %2970 = vmatpush2.bf16.msra.mxu0 0
      %2971 = vmatprep.subr.bf16.mxu0 0
      %2972 = vmatpush2.bf16.msra.mxu0 0
      %2973 = vmatprep.subr.bf16.mxu0 0
      %2974 = vmatpush2.bf16.msra.mxu0 0
      %2975 = vmatprep.mubr.bf16.mxu0 0
      %2976 = vmatmul.mubr.bf16.gmra.mxu0 %v2869
      %v2977 = vpop.f32.mrf.mxu0
      %v2978 = vadd.f32 0.0, %v2977
      %v2979 = vpop.f32.mrf.mxu0
      %v2980 = vpop.f32.mrf.mxu0
      %v2981 = vadd.f32 0.0, %v2980
      %v2982 = vpop.f32.mrf.mxu0
      %2983 = vmatprep.mubr.bf16.mxu0 0
      %2984 = vmatmul.mubr.bf16.gmra.mxu0 %v2872
      %v2985 = vpop.f32.mrf.mxu0
      %v2986 = vadd.f32 0.0, %v2985
      %v2987 = vpop.f32.mrf.mxu0
      %v2988 = vpop.f32.mrf.mxu0
      %v2989 = vadd.f32 0.0, %v2988
      %v2990 = vpop.f32.mrf.mxu0
      %2991 = vmatprep.mubr.bf16.mxu0 0
      %2992 = vmatmul.mubr.bf16.gmra.mxu0 %v2875
      %v2993 = vpop.f32.mrf.mxu0
      %v2994 = vadd.f32 0.0, %v2993
      %v2995 = vpop.f32.mrf.mxu0
      %v2996 = vpop.f32.mrf.mxu0
      %v2997 = vadd.f32 0.0, %v2996
      %v2998 = vpop.f32.mrf.mxu0
      %2999 = vmatprep.mubr.bf16.mxu0 0
      %3000 = vmatmul.mubr.bf16.gmra.mxu0 %v2878
      %v3001 = vpop.f32.mrf.mxu0
      %v3002 = vadd.f32 0.0, %v3001
      %v3003 = vpop.f32.mrf.mxu0
      %v3004 = vpop.f32.mrf.mxu0
      %v3005 = vadd.f32 0.0, %v3004
      %v3006 = vpop.f32.mrf.mxu0
      %3007 = vmatprep.mubr.bf16.mxu0 0
      %3008 = vmatmul.mubr.bf16.gmra.mxu0 %v2881
      %v3009 = vpop.f32.mrf.mxu0
      %v3010 = vadd.f32 0.0, %v3009
      %v3011 = vpop.f32.mrf.mxu0
      %v3012 = vpop.f32.mrf.mxu0
      %v3013 = vadd.f32 0.0, %v3012
      %v3014 = vpop.f32.mrf.mxu0
      %3015 = vmatprep.mubr.bf16.mxu0 0
      %3016 = vmatmul.mubr.bf16.gmra.mxu0 %v2884
      %v3017 = vpop.f32.mrf.mxu0
      %v3018 = vadd.f32 0.0, %v3017
      %v3019 = vpop.f32.mrf.mxu0
      %v3020 = vpop.f32.mrf.mxu0
      %v3021 = vadd.f32 0.0, %v3020
      %v3022 = vpop.f32.mrf.mxu0
      %3023 = vmatprep.mubr.bf16.mxu0 0
      %3024 = vmatmul.mubr.bf16.gmra.mxu0 %v2887
      %v3025 = vpop.f32.mrf.mxu0
      %v3026 = vadd.f32 0.0, %v3025
      %v3027 = vpop.f32.mrf.mxu0
      %v3028 = vpop.f32.mrf.mxu0
      %v3029 = vadd.f32 0.0, %v3028
      %v3030 = vpop.f32.mrf.mxu0
      %3031 = vmatprep.mubr.bf16.mxu0 0
      %3032 = vmatmul.mubr.bf16.gmra.mxu0 %v2890
      %v3033 = vpop.f32.mrf.mxu0
      %v3034 = vadd.f32 0.0, %v3033
      %v3035 = vpop.f32.mrf.mxu0
      %v3036 = vpop.f32.mrf.mxu0
      %v3037 = vadd.f32 0.0, %v3036
      %v3038 = vpop.f32.mrf.mxu0
      %3039 = vmatprep.mubr.bf16.mxu0 0
      %3040 = vmatmul.mubr.bf16.gmra.mxu0 %v2893
      %v3041 = vpop.f32.mrf.mxu0
      %v3042 = vadd.f32 0.0, %v3041
      %v3043 = vpop.f32.mrf.mxu0
      %v3044 = vpop.f32.mrf.mxu0
      %v3045 = vadd.f32 0.0, %v3044
      %v3046 = vpop.f32.mrf.mxu0
      %3047 = vmatprep.mubr.bf16.mxu0 0
      %3048 = vmatmul.mubr.bf16.gmra.mxu0 %v2896
      %v3049 = vpop.f32.mrf.mxu0
      %v3050 = vadd.f32 0.0, %v3049
      %v3051 = vpop.f32.mrf.mxu0
      %v3052 = vpop.f32.mrf.mxu0
      %v3053 = vadd.f32 0.0, %v3052
      %v3054 = vpop.f32.mrf.mxu0
      %3055 = vmatprep.mubr.bf16.mxu0 0
      %3056 = vmatmul.mubr.bf16.gmra.mxu0 %v2899
      %v3057 = vpop.f32.mrf.mxu0
      %v3058 = vadd.f32 0.0, %v3057
      %v3059 = vpop.f32.mrf.mxu0
      %v3060 = vpop.f32.mrf.mxu0
      %v3061 = vadd.f32 0.0, %v3060
      %v3062 = vpop.f32.mrf.mxu0
      %3063 = vmatprep.mubr.bf16.mxu0 0
      %3064 = vmatmul.mubr.bf16.gmra.mxu0 %v2902
      %v3065 = vpop.f32.mrf.mxu0
      %v3066 = vadd.f32 0.0, %v3065
      %v3067 = vpop.f32.mrf.mxu0
      %v3068 = vpop.f32.mrf.mxu0
      %v3069 = vadd.f32 0.0, %v3068
      %v3070 = vpop.f32.mrf.mxu0
      %3071 = vmatprep.mubr.bf16.mxu0 0
      %3072 = vmatmul.mubr.bf16.gmra.mxu0 %v2905
      %v3073 = vpop.f32.mrf.mxu0
      %v3074 = vadd.f32 0.0, %v3073
      %v3075 = vpop.f32.mrf.mxu0
      %v3076 = vpop.f32.mrf.mxu0
      %v3077 = vadd.f32 0.0, %v3076
      %v3078 = vpop.f32.mrf.mxu0
      %3079 = vmatprep.mubr.bf16.mxu0 0
      %3080 = vmatmul.mubr.bf16.gmra.mxu0 %v2908
      %v3081 = vpop.f32.mrf.mxu0
      %v3082 = vadd.f32 0.0, %v3081
      %v3083 = vpop.f32.mrf.mxu0
      %v3084 = vpop.f32.mrf.mxu0
      %v3085 = vadd.f32 0.0, %v3084
      %v3086 = vpop.f32.mrf.mxu0
      %3087 = vmatprep.mubr.bf16.mxu0 0
      %3088 = vmatmul.mubr.bf16.gmra.mxu0 %v2911
      %v3089 = vpop.f32.mrf.mxu0
      %v3090 = vadd.f32 0.0, %v3089
      %v3091 = vpop.f32.mrf.mxu0
      %v3092 = vpop.f32.mrf.mxu0
      %v3093 = vadd.f32 0.0, %v3092
      %v3094 = vpop.f32.mrf.mxu0
      %3095 = vmatprep.mubr.bf16.mxu0 0
      %3096 = vmatmul.mubr.bf16.gmra.mxu0 %v2914
      %v3097 = vpop.f32.mrf.mxu0
      %v3098 = vadd.f32 0.0, %v3097
      %v3099 = vpop.f32.mrf.mxu0
      %v3100 = vpop.f32.mrf.mxu0
      %v3101 = vadd.f32 0.0, %v3100
      %v3102 = vpop.f32.mrf.mxu0
      %3103 = vmatprep.mubr.bf16.mxu0 0
      %3104 = vmatmul.mubr.bf16.gmra.mxu0 %v2917
      %v3105 = vpop.f32.mrf.mxu0
      %v3106 = vadd.f32 0.0, %v3105
      %v3107 = vpop.f32.mrf.mxu0
      %v3108 = vpop.f32.mrf.mxu0
      %v3109 = vadd.f32 0.0, %v3108
      %v3110 = vpop.f32.mrf.mxu0
      %3111 = vmatprep.mubr.bf16.mxu0 0
      %3112 = vmatmul.mubr.bf16.gmra.mxu0 %v2920
      %v3113 = vpop.f32.mrf.mxu0
      %v3114 = vadd.f32 0.0, %v3113
      %v3115 = vpop.f32.mrf.mxu0
      %v3116 = vpop.f32.mrf.mxu0
      %v3117 = vadd.f32 0.0, %v3116
      %v3118 = vpop.f32.mrf.mxu0
      %3119 = vmatprep.mubr.bf16.mxu0 0
      %3120 = vmatmul.mubr.bf16.gmra.mxu0 %v2923
      %v3121 = vpop.f32.mrf.mxu0
      %v3122 = vadd.f32 0.0, %v3121
      %v3123 = vpop.f32.mrf.mxu0
      %v3124 = vpop.f32.mrf.mxu0
      %v3125 = vadd.f32 0.0, %v3124
      %v3126 = vpop.f32.mrf.mxu0
      %3127 = vmatprep.mubr.bf16.mxu0 0
      %3128 = vmatmul.mubr.bf16.gmra.mxu0 %v2926
      %v3129 = vpop.f32.mrf.mxu0
      %v3130 = vadd.f32 0.0, %v3129
      %v3131 = vpop.f32.mrf.mxu0
      %v3132 = vpop.f32.mrf.mxu0
      %v3133 = vadd.f32 0.0, %v3132
      %v3134 = vpop.f32.mrf.mxu0
      %3135 = vmatprep.mubr.bf16.mxu0 0
      %3136 = vmatmul.mubr.bf16.gmra.mxu0 %v2929
      %v3137 = vpop.f32.mrf.mxu0
      %v3138 = vadd.f32 0.0, %v3137
      %v3139 = vpop.f32.mrf.mxu0
      %v3140 = vpop.f32.mrf.mxu0
      %v3141 = vadd.f32 0.0, %v3140
      %v3142 = vpop.f32.mrf.mxu0
      %3143 = vmatprep.mubr.bf16.mxu0 0
      %3144 = vmatmul.mubr.bf16.gmra.mxu0 %v2932
      %v3145 = vpop.f32.mrf.mxu0
      %v3146 = vadd.f32 0.0, %v3145
      %v3147 = vpop.f32.mrf.mxu0
      %v3148 = vpop.f32.mrf.mxu0
      %v3149 = vadd.f32 0.0, %v3148
      %v3150 = vpop.f32.mrf.mxu0
      %3151 = vmatprep.mubr.bf16.mxu0 0
      %3152 = vmatmul.mubr.bf16.gmra.mxu0 %v2935
      %v3153 = vpop.f32.mrf.mxu0
      %v3154 = vadd.f32 0.0, %v3153
      %v3155 = vpop.f32.mrf.mxu0
      %v3156 = vpop.f32.mrf.mxu0
      %v3157 = vadd.f32 0.0, %v3156
      %v3158 = vpop.f32.mrf.mxu0
      %3159 = vmatprep.mubr.bf16.mxu0 0
      %3160 = vmatmul.mubr.bf16.gmra.mxu0 %v2938
      %v3161 = vpop.f32.mrf.mxu0
      %v3162 = vadd.f32 0.0, %v3161
      %v3163 = vpop.f32.mrf.mxu0
      %v3164 = vpop.f32.mrf.mxu0
      %v3165 = vadd.f32 0.0, %v3164
      %v3166 = vpop.f32.mrf.mxu0
      %3167 = vdwg.mxu0
      %v3168 = vadd.f32 %v2765, %v2978
      %v3169 = vadd.f32 %v2766, %v2981
      %v3170 = vadd.f32 %v2767, %v2986
      %v3171 = vadd.f32 %v2768, %v2989
      %v3172 = vadd.f32 %v2769, %v2994
      %v3173 = vadd.f32 %v2770, %v2997
      %v3174 = vadd.f32 %v2771, %v3002
      %v3175 = vadd.f32 %v2772, %v3005
      %v3176 = vadd.f32 %v2773, %v3010
      %v3177 = vadd.f32 %v2774, %v3013
      %v3178 = vadd.f32 %v2775, %v3018
      %v3179 = vadd.f32 %v2776, %v3021
      %v3180 = vadd.f32 %v2777, %v3026
      %v3181 = vadd.f32 %v2778, %v3029
      %v3182 = vadd.f32 %v2779, %v3034
      %v3183 = vadd.f32 %v2780, %v3037
      %v3184 = vadd.f32 %v2781, %v3042
      %v3185 = vadd.f32 %v2782, %v3045
      %v3186 = vadd.f32 %v2783, %v3050
      %v3187 = vadd.f32 %v2784, %v3053
      %v3188 = vadd.f32 %v2785, %v3058
      %v3189 = vadd.f32 %v2786, %v3061
      %v3190 = vadd.f32 %v2787, %v3066
      %v3191 = vadd.f32 %v2788, %v3069
      %v3192 = vadd.f32 %v2789, %v3074
      %v3193 = vadd.f32 %v2790, %v3077
      %v3194 = vadd.f32 %v2791, %v3082
      %v3195 = vadd.f32 %v2792, %v3085
      %v3196 = vadd.f32 %v2793, %v3090
      %v3197 = vadd.f32 %v2794, %v3093
      %v3198 = vadd.f32 %v2795, %v3098
      %v3199 = vadd.f32 %v2796, %v3101
      %v3200 = vadd.f32 %v2797, %v3106
      %v3201 = vadd.f32 %v2798, %v3109
      %v3202 = vadd.f32 %v2799, %v3114
      %v3203 = vadd.f32 %v2800, %v3117
      %v3204 = vadd.f32 %v2801, %v3122
      %v3205 = vadd.f32 %v2802, %v3125
      %v3206 = vadd.f32 %v2803, %v3130
      %v3207 = vadd.f32 %v2804, %v3133
      %v3208 = vadd.f32 %v2805, %v3138
      %v3209 = vadd.f32 %v2806, %v3141
      %v3210 = vadd.f32 %v2807, %v3146
      %v3211 = vadd.f32 %v2808, %v3149
      %v3212 = vadd.f32 %v2809, %v3154
      %v3213 = vadd.f32 %v2810, %v3157
      %v3214 = vadd.f32 %v2811, %v3162
      %v3215 = vadd.f32 %v2812, %v3165
      %v3216 = vld [vmem:[%s206 + $0x18] sm:$0xf]
      %v3217 = vld [vmem:[%s206 + $0x1c] sm:$0xf]
      %v3218 = vld [vmem:[%s206 + $0x20] sm:$0xf]
      %v3219 = vld [vmem:[%s206 + $0x24] sm:$0xf]
      %v3220 = vld [vmem:[%s206 + $0x28] sm:$0xf]
      %v3221 = vld [vmem:[%s206 + $0x2c] sm:$0xf]
      %v3222 = vld [vmem:[%s206 + $0x30] sm:$0xf]
      %v3223 = vld [vmem:[%s206 + $0x34] sm:$0xf]
      %v3224 = vld [vmem:[%s206 + $0x38] sm:$0xf]
      %v3225 = vld [vmem:[%s206 + $0x3c] sm:$0xf]
      %v3226 = vld [vmem:[%s206 + $0x40] sm:$0xf]
      %v3227 = vld [vmem:[%s206 + $0x44] sm:$0xf]
      %v3228 = vld [vmem:[%s206 + $0x48] sm:$0xf]
      %v3229 = vld [vmem:[%s206 + $0x4c] sm:$0xf]
      %v3230 = vld [vmem:[%s206 + $0x50] sm:$0xf]
      %v3231 = vld [vmem:[%s206 + $0x54] sm:$0xf]
      %v3232 = vld [vmem:[%s206 + $0x58] sm:$0xf]
      %v3233 = vld [vmem:[%s206 + $0x5c] sm:$0xf]
      %v3234 = vld [vmem:[%s206 + $0x60] sm:$0xf]
      %v3235 = vld [vmem:[%s206 + $0x64] sm:$0xf]
      %v3236 = vld [vmem:[%s206 + $0x68] sm:$0xf]
      %v3237 = vld [vmem:[%s206 + $0x6c] sm:$0xf]
      %v3238 = vld [vmem:[%s206 + $0x70] sm:$0xf]
      %v3239 = vld [vmem:[%s206 + $0x74] sm:$0xf]
      %v3240 = vld [vmem:[%s206 + $0x78] sm:$0xf]
      %v3241 = vld [vmem:[%s206 + $0x7c] sm:$0xf]
      %v3242 = vld [vmem:[%s206 + $0x80] sm:$0xf]
      %v3243 = vld [vmem:[%s206 + $0x84] sm:$0xf]
      %v3244 = vld [vmem:[%s206 + $0x88] sm:$0xf]
      %v3245 = vld [vmem:[%s206 + $0x8c] sm:$0xf]
      %v3246 = vld [vmem:[%s206 + $0x90] sm:$0xf]
      %v3247 = vld [vmem:[%s206 + $0x94] sm:$0xf]
      %v3248 = vld [vmem:[%s206 + $0x98] sm:$0xf]
      %v3249 = vld [vmem:[%s206 + $0x9c] sm:$0xf]
      %v3250 = vld [vmem:[%s206 + $0xa0] sm:$0xf]
      %v3251 = vld [vmem:[%s206 + $0xa4] sm:$0xf]
      %v3252 = vld [vmem:[%s206 + $0xa8] sm:$0xf]
      %v3253 = vld [vmem:[%s206 + $0xac] sm:$0xf]
      %v3254 = vld [vmem:[%s206 + $0xb0] sm:$0xf]
      %v3255 = vld [vmem:[%s206 + $0xb4] sm:$0xf]
      %v3256 = vld [vmem:[%s206 + $0xb8] sm:$0xf]
      %v3257 = vld [vmem:[%s206 + $0xbc] sm:$0xf]
      %v3258 = vld [vmem:[%s206 + $0xc0] sm:$0xf]
      %v3259 = vld [vmem:[%s206 + $0xc4] sm:$0xf]
      %v3260 = vld [vmem:[%s206 + $0xc8] sm:$0xf]
      %v3261 = vld [vmem:[%s206 + $0xcc] sm:$0xf]
      %v3262 = vld [vmem:[%s206 + $0xd0] sm:$0xf]
      %v3263 = vld [vmem:[%s206 + $0xd4] sm:$0xf]
      %s3264 = scalar_lea.vmem %s210, 24
      %v3265 = vld [vmem:[%s3264] sm:$0xf]
      %v3314 = vunpack.c.l.b16 %v3216
      %v3315 = vunpack.c.l.b16 %v3217
      %v3316 = vunpack.c.l.b16 %v3218
      %v3317 = vunpack.c.l.b16 %v3219
      %v3318 = vunpack.c.l.b16 %v3220
      %v3319 = vunpack.c.l.b16 %v3221
      %v3320 = vunpack.c.l.b16 %v3222
      %v3321 = vunpack.c.l.b16 %v3223
      %v3322 = vunpack.c.l.b16 %v3224
      %v3323 = vunpack.c.l.b16 %v3225
      %v3324 = vunpack.c.l.b16 %v3226
      %v3325 = vunpack.c.l.b16 %v3227
      %v3326 = vunpack.c.l.b16 %v3228
      %v3327 = vunpack.c.l.b16 %v3229
      %v3328 = vunpack.c.l.b16 %v3230
      %v3329 = vunpack.c.l.b16 %v3231
      %v3330 = vunpack.c.l.b16 %v3232
      %v3331 = vunpack.c.l.b16 %v3233
      %v3332 = vunpack.c.l.b16 %v3234
      %v3333 = vunpack.c.l.b16 %v3235
      %v3334 = vunpack.c.l.b16 %v3236
      %v3335 = vunpack.c.l.b16 %v3237
      %v3336 = vunpack.c.l.b16 %v3238
      %v3337 = vunpack.c.l.b16 %v3239
      %v3338 = vunpack.c.l.b16 %v3240
      %v3339 = vunpack.c.l.b16 %v3241
      %v3340 = vunpack.c.l.b16 %v3242
      %v3341 = vunpack.c.l.b16 %v3243
      %v3342 = vunpack.c.l.b16 %v3244
      %v3343 = vunpack.c.l.b16 %v3245
      %v3344 = vunpack.c.l.b16 %v3246
      %v3345 = vunpack.c.l.b16 %v3247
      %v3346 = vunpack.c.l.b16 %v3248
      %v3347 = vunpack.c.l.b16 %v3249
      %v3348 = vunpack.c.l.b16 %v3250
      %v3349 = vunpack.c.l.b16 %v3251
      %v3350 = vunpack.c.l.b16 %v3252
      %v3351 = vunpack.c.l.b16 %v3253
      %v3352 = vunpack.c.l.b16 %v3254
      %v3353 = vunpack.c.l.b16 %v3255
      %v3354 = vunpack.c.l.b16 %v3256
      %v3355 = vunpack.c.l.b16 %v3257
      %v3356 = vunpack.c.l.b16 %v3258
      %v3357 = vunpack.c.l.b16 %v3259
      %v3358 = vunpack.c.l.b16 %v3260
      %v3359 = vunpack.c.l.b16 %v3261
      %v3360 = vunpack.c.l.b16 %v3262
      %v3361 = vunpack.c.l.b16 %v3263
      %v3362 = vpack.c.b16 %v3315, %v3314
      %v3363 = vpack.c.b16 %v3317, %v3316
      %v3364 = vpack.c.b16 %v3319, %v3318
      %v3365 = vpack.c.b16 %v3321, %v3320
      %v3366 = vpack.c.b16 %v3323, %v3322
      %v3367 = vpack.c.b16 %v3325, %v3324
      %v3368 = vpack.c.b16 %v3327, %v3326
      %v3369 = vpack.c.b16 %v3329, %v3328
      %v3370 = vpack.c.b16 %v3331, %v3330
      %v3371 = vpack.c.b16 %v3333, %v3332
      %v3372 = vpack.c.b16 %v3335, %v3334
      %v3373 = vpack.c.b16 %v3337, %v3336
      %v3374 = vpack.c.b16 %v3339, %v3338
      %v3375 = vpack.c.b16 %v3341, %v3340
      %v3376 = vpack.c.b16 %v3343, %v3342
      %v3377 = vpack.c.b16 %v3345, %v3344
      %v3378 = vpack.c.b16 %v3347, %v3346
      %v3379 = vpack.c.b16 %v3349, %v3348
      %v3380 = vpack.c.b16 %v3351, %v3350
      %v3381 = vpack.c.b16 %v3353, %v3352
      %v3382 = vpack.c.b16 %v3355, %v3354
      %v3383 = vpack.c.b16 %v3357, %v3356
      %v3384 = vpack.c.b16 %v3359, %v3358
      %v3385 = vpack.c.b16 %v3361, %v3360
      %v3387 = vsel %vm595, %v3362, 0
      %v3390 = vsel %vm595, %v3363, 0
      %v3393 = vsel %vm595, %v3364, 0
      %v3396 = vsel %vm595, %v3365, 0
      %v3399 = vsel %vm595, %v3366, 0
      %v3402 = vsel %vm595, %v3367, 0
      %v3405 = vsel %vm595, %v3368, 0
      %v3408 = vsel %vm595, %v3369, 0
      %v3411 = vsel %vm595, %v3370, 0
      %v3414 = vsel %vm595, %v3371, 0
      %v3417 = vsel %vm595, %v3372, 0
      %v3420 = vsel %vm595, %v3373, 0
      %v3423 = vsel %vm595, %v3374, 0
      %v3426 = vsel %vm595, %v3375, 0
      %v3429 = vsel %vm595, %v3376, 0
      %v3432 = vsel %vm595, %v3377, 0
      %v3435 = vsel %vm595, %v3378, 0
      %v3438 = vsel %vm595, %v3379, 0
      %v3441 = vsel %vm595, %v3380, 0
      %v3444 = vsel %vm595, %v3381, 0
      %v3447 = vsel %vm595, %v3382, 0
      %v3450 = vsel %vm595, %v3383, 0
      %v3453 = vsel %vm595, %v3384, 0
      %v3456 = vsel %vm595, %v3385, 0
      %v3459 = vsel %vm668, %v3265, 0
      %3461 = vmatprep.subr.bf16.mxu0 0
      %3462 = vmatpush1.bf16.msra.mxu0 0
      %3463 = vmatprep.subr.bf16.mxu0 0
      %3464 = vmatpush1.bf16.msra.mxu0 0
      %3465 = vmatprep.subr.bf16.mxu0 0
      %3466 = vmatpush1.bf16.msra.mxu0 0
      %3467 = vmatprep.subr.bf16.mxu0 0
      %3468 = vmatpush1.bf16.msra.mxu0 0
      %3469 = vmatprep.subr.bf16.mxu0 0
      %3470 = vmatpush1.bf16.msra.mxu0 0
      %3471 = vmatprep.subr.bf16.mxu0 0
      %3472 = vmatpush1.bf16.msra.mxu0 0
      %3473 = vmatprep.subr.bf16.mxu0 0
      %3474 = vmatpush1.bf16.msra.mxu0 0
      %3475 = vmatprep.subr.bf16.mxu0 0
      %3476 = vmatpush1.bf16.msra.mxu0 %v3459
      %3477 = vmatprep.subr.bf16.mxu0 0
      %3478 = vmatpush2.bf16.msra.mxu0 0
      %3479 = vmatprep.subr.bf16.mxu0 0
      %3480 = vmatpush2.bf16.msra.mxu0 0
      %3481 = vmatprep.subr.bf16.mxu0 0
      %3482 = vmatpush2.bf16.msra.mxu0 0
      %3483 = vmatprep.subr.bf16.mxu0 0
      %3484 = vmatpush2.bf16.msra.mxu0 0
      %3485 = vmatprep.subr.bf16.mxu0 0
      %3486 = vmatpush2.bf16.msra.mxu0 0
      %3487 = vmatprep.subr.bf16.mxu0 0
      %3488 = vmatpush2.bf16.msra.mxu0 0
      %3489 = vmatprep.subr.bf16.mxu0 0
      %3490 = vmatpush2.bf16.msra.mxu0 0
      %3491 = vmatprep.subr.bf16.mxu0 0
      %3492 = vmatpush2.bf16.msra.mxu0 0
      %3493 = vmatprep.mubr.bf16.mxu0 0
      %3494 = vmatmul.mubr.bf16.gmra.mxu0 %v3387
      %v3495 = vpop.f32.mrf.mxu0
      %v3496 = vadd.f32 0.0, %v3495
      %v3497 = vpop.f32.mrf.mxu0
      %v3498 = vpop.f32.mrf.mxu0
      %v3499 = vadd.f32 0.0, %v3498
      %v3500 = vpop.f32.mrf.mxu0
      %3501 = vmatprep.mubr.bf16.mxu0 0
      %3502 = vmatmul.mubr.bf16.gmra.mxu0 %v3390
      %v3503 = vpop.f32.mrf.mxu0
      %v3504 = vadd.f32 0.0, %v3503
      %v3505 = vpop.f32.mrf.mxu0
      %v3506 = vpop.f32.mrf.mxu0
      %v3507 = vadd.f32 0.0, %v3506
      %v3508 = vpop.f32.mrf.mxu0
      %3509 = vmatprep.mubr.bf16.mxu0 0
      %3510 = vmatmul.mubr.bf16.gmra.mxu0 %v3393
      %v3511 = vpop.f32.mrf.mxu0
      %v3512 = vadd.f32 0.0, %v3511
      %v3513 = vpop.f32.mrf.mxu0
      %v3514 = vpop.f32.mrf.mxu0
      %v3515 = vadd.f32 0.0, %v3514
      %v3516 = vpop.f32.mrf.mxu0
      %3517 = vmatprep.mubr.bf16.mxu0 0
      %3518 = vmatmul.mubr.bf16.gmra.mxu0 %v3396
      %v3519 = vpop.f32.mrf.mxu0
      %v3520 = vadd.f32 0.0, %v3519
      %v3521 = vpop.f32.mrf.mxu0
      %v3522 = vpop.f32.mrf.mxu0
      %v3523 = vadd.f32 0.0, %v3522
      %v3524 = vpop.f32.mrf.mxu0
      %3525 = vmatprep.mubr.bf16.mxu0 0
      %3526 = vmatmul.mubr.bf16.gmra.mxu0 %v3399
      %v3527 = vpop.f32.mrf.mxu0
      %v3528 = vadd.f32 0.0, %v3527
      %v3529 = vpop.f32.mrf.mxu0
      %v3530 = vpop.f32.mrf.mxu0
      %v3531 = vadd.f32 0.0, %v3530
      %v3532 = vpop.f32.mrf.mxu0
      %3533 = vmatprep.mubr.bf16.mxu0 0
      %3534 = vmatmul.mubr.bf16.gmra.mxu0 %v3402
      %v3535 = vpop.f32.mrf.mxu0
      %v3536 = vadd.f32 0.0, %v3535
      %v3537 = vpop.f32.mrf.mxu0
      %v3538 = vpop.f32.mrf.mxu0
      %v3539 = vadd.f32 0.0, %v3538
      %v3540 = vpop.f32.mrf.mxu0
      %3541 = vmatprep.mubr.bf16.mxu0 0
      %3542 = vmatmul.mubr.bf16.gmra.mxu0 %v3405
      %v3543 = vpop.f32.mrf.mxu0
      %v3544 = vadd.f32 0.0, %v3543
      %v3545 = vpop.f32.mrf.mxu0
      %v3546 = vpop.f32.mrf.mxu0
      %v3547 = vadd.f32 0.0, %v3546
      %v3548 = vpop.f32.mrf.mxu0
      %3549 = vmatprep.mubr.bf16.mxu0 0
      %3550 = vmatmul.mubr.bf16.gmra.mxu0 %v3408
      %v3551 = vpop.f32.mrf.mxu0
      %v3552 = vadd.f32 0.0, %v3551
      %v3553 = vpop.f32.mrf.mxu0
      %v3554 = vpop.f32.mrf.mxu0
      %v3555 = vadd.f32 0.0, %v3554
      %v3556 = vpop.f32.mrf.mxu0
      %3557 = vmatprep.mubr.bf16.mxu0 0
      %3558 = vmatmul.mubr.bf16.gmra.mxu0 %v3411
      %v3559 = vpop.f32.mrf.mxu0
      %v3560 = vadd.f32 0.0, %v3559
      %v3561 = vpop.f32.mrf.mxu0
      %v3562 = vpop.f32.mrf.mxu0
      %v3563 = vadd.f32 0.0, %v3562
      %v3564 = vpop.f32.mrf.mxu0
      %3565 = vmatprep.mubr.bf16.mxu0 0
      %3566 = vmatmul.mubr.bf16.gmra.mxu0 %v3414
      %v3567 = vpop.f32.mrf.mxu0
      %v3568 = vadd.f32 0.0, %v3567
      %v3569 = vpop.f32.mrf.mxu0
      %v3570 = vpop.f32.mrf.mxu0
      %v3571 = vadd.f32 0.0, %v3570
      %v3572 = vpop.f32.mrf.mxu0
      %3573 = vmatprep.mubr.bf16.mxu0 0
      %3574 = vmatmul.mubr.bf16.gmra.mxu0 %v3417
      %v3575 = vpop.f32.mrf.mxu0
      %v3576 = vadd.f32 0.0, %v3575
      %v3577 = vpop.f32.mrf.mxu0
      %v3578 = vpop.f32.mrf.mxu0
      %v3579 = vadd.f32 0.0, %v3578
      %v3580 = vpop.f32.mrf.mxu0
      %3581 = vmatprep.mubr.bf16.mxu0 0
      %3582 = vmatmul.mubr.bf16.gmra.mxu0 %v3420
      %v3583 = vpop.f32.mrf.mxu0
      %v3584 = vadd.f32 0.0, %v3583
      %v3585 = vpop.f32.mrf.mxu0
      %v3586 = vpop.f32.mrf.mxu0
      %v3587 = vadd.f32 0.0, %v3586
      %v3588 = vpop.f32.mrf.mxu0
      %3589 = vmatprep.mubr.bf16.mxu0 0
      %3590 = vmatmul.mubr.bf16.gmra.mxu0 %v3423
      %v3591 = vpop.f32.mrf.mxu0
      %v3592 = vadd.f32 0.0, %v3591
      %v3593 = vpop.f32.mrf.mxu0
      %v3594 = vpop.f32.mrf.mxu0
      %v3595 = vadd.f32 0.0, %v3594
      %v3596 = vpop.f32.mrf.mxu0
      %3597 = vmatprep.mubr.bf16.mxu0 0
      %3598 = vmatmul.mubr.bf16.gmra.mxu0 %v3426
      %v3599 = vpop.f32.mrf.mxu0
      %v3600 = vadd.f32 0.0, %v3599
      %v3601 = vpop.f32.mrf.mxu0
      %v3602 = vpop.f32.mrf.mxu0
      %v3603 = vadd.f32 0.0, %v3602
      %v3604 = vpop.f32.mrf.mxu0
      %3605 = vmatprep.mubr.bf16.mxu0 0
      %3606 = vmatmul.mubr.bf16.gmra.mxu0 %v3429
      %v3607 = vpop.f32.mrf.mxu0
      %v3608 = vadd.f32 0.0, %v3607
      %v3609 = vpop.f32.mrf.mxu0
      %v3610 = vpop.f32.mrf.mxu0
      %v3611 = vadd.f32 0.0, %v3610
      %v3612 = vpop.f32.mrf.mxu0
      %3613 = vmatprep.mubr.bf16.mxu0 0
      %3614 = vmatmul.mubr.bf16.gmra.mxu0 %v3432
      %v3615 = vpop.f32.mrf.mxu0
      %v3616 = vadd.f32 0.0, %v3615
      %v3617 = vpop.f32.mrf.mxu0
      %v3618 = vpop.f32.mrf.mxu0
      %v3619 = vadd.f32 0.0, %v3618
      %v3620 = vpop.f32.mrf.mxu0
      %3621 = vmatprep.mubr.bf16.mxu0 0
      %3622 = vmatmul.mubr.bf16.gmra.mxu0 %v3435
      %v3623 = vpop.f32.mrf.mxu0
      %v3624 = vadd.f32 0.0, %v3623
      %v3625 = vpop.f32.mrf.mxu0
      %v3626 = vpop.f32.mrf.mxu0
      %v3627 = vadd.f32 0.0, %v3626
      %v3628 = vpop.f32.mrf.mxu0
      %3629 = vmatprep.mubr.bf16.mxu0 0
      %3630 = vmatmul.mubr.bf16.gmra.mxu0 %v3438
      %v3631 = vpop.f32.mrf.mxu0
      %v3632 = vadd.f32 0.0, %v3631
      %v3633 = vpop.f32.mrf.mxu0
      %v3634 = vpop.f32.mrf.mxu0
      %v3635 = vadd.f32 0.0, %v3634
      %v3636 = vpop.f32.mrf.mxu0
      %3637 = vmatprep.mubr.bf16.mxu0 0
      %3638 = vmatmul.mubr.bf16.gmra.mxu0 %v3441
      %v3639 = vpop.f32.mrf.mxu0
      %v3640 = vadd.f32 0.0, %v3639
      %v3641 = vpop.f32.mrf.mxu0
      %v3642 = vpop.f32.mrf.mxu0
      %v3643 = vadd.f32 0.0, %v3642
      %v3644 = vpop.f32.mrf.mxu0
      %3645 = vmatprep.mubr.bf16.mxu0 0
      %3646 = vmatmul.mubr.bf16.gmra.mxu0 %v3444
      %v3647 = vpop.f32.mrf.mxu0
      %v3648 = vadd.f32 0.0, %v3647
      %v3649 = vpop.f32.mrf.mxu0
      %v3650 = vpop.f32.mrf.mxu0
      %v3651 = vadd.f32 0.0, %v3650
      %v3652 = vpop.f32.mrf.mxu0
      %3653 = vmatprep.mubr.bf16.mxu0 0
      %3654 = vmatmul.mubr.bf16.gmra.mxu0 %v3447
      %v3655 = vpop.f32.mrf.mxu0
      %v3656 = vadd.f32 0.0, %v3655
      %v3657 = vpop.f32.mrf.mxu0
      %v3658 = vpop.f32.mrf.mxu0
      %v3659 = vadd.f32 0.0, %v3658
      %v3660 = vpop.f32.mrf.mxu0
      %3661 = vmatprep.mubr.bf16.mxu0 0
      %3662 = vmatmul.mubr.bf16.gmra.mxu0 %v3450
      %v3663 = vpop.f32.mrf.mxu0
      %v3664 = vadd.f32 0.0, %v3663
      %v3665 = vpop.f32.mrf.mxu0
      %v3666 = vpop.f32.mrf.mxu0
      %v3667 = vadd.f32 0.0, %v3666
      %v3668 = vpop.f32.mrf.mxu0
      %3669 = vmatprep.mubr.bf16.mxu0 0
      %3670 = vmatmul.mubr.bf16.gmra.mxu0 %v3453
      %v3671 = vpop.f32.mrf.mxu0
      %v3672 = vadd.f32 0.0, %v3671
      %v3673 = vpop.f32.mrf.mxu0
      %v3674 = vpop.f32.mrf.mxu0
      %v3675 = vadd.f32 0.0, %v3674
      %v3676 = vpop.f32.mrf.mxu0
      %3677 = vmatprep.mubr.bf16.mxu0 0
      %3678 = vmatmul.mubr.bf16.gmra.mxu0 %v3456
      %v3679 = vpop.f32.mrf.mxu0
      %v3680 = vadd.f32 0.0, %v3679
      %v3681 = vpop.f32.mrf.mxu0
      %v3682 = vpop.f32.mrf.mxu0
      %v3683 = vadd.f32 0.0, %v3682
      %v3684 = vpop.f32.mrf.mxu0
      %3685 = vdwg.mxu0
      %v3686 = vadd.f32 %v3168, %v3496
      %v3687 = vadd.f32 %v3169, %v3499
      %v3688 = vadd.f32 %v3170, %v3504
      %v3689 = vadd.f32 %v3171, %v3507
      %v3690 = vadd.f32 %v3172, %v3512
      %v3691 = vadd.f32 %v3173, %v3515
      %v3692 = vadd.f32 %v3174, %v3520
      %v3693 = vadd.f32 %v3175, %v3523
      %v3694 = vadd.f32 %v3176, %v3528
      %v3695 = vadd.f32 %v3177, %v3531
      %v3696 = vadd.f32 %v3178, %v3536
      %v3697 = vadd.f32 %v3179, %v3539
      %v3698 = vadd.f32 %v3180, %v3544
      %v3699 = vadd.f32 %v3181, %v3547
      %v3700 = vadd.f32 %v3182, %v3552
      %v3701 = vadd.f32 %v3183, %v3555
      %v3702 = vadd.f32 %v3184, %v3560
      %v3703 = vadd.f32 %v3185, %v3563
      %v3704 = vadd.f32 %v3186, %v3568
      %v3705 = vadd.f32 %v3187, %v3571
      %v3706 = vadd.f32 %v3188, %v3576
      %v3707 = vadd.f32 %v3189, %v3579
      %v3708 = vadd.f32 %v3190, %v3584
      %v3709 = vadd.f32 %v3191, %v3587
      %v3710 = vadd.f32 %v3192, %v3592
      %v3711 = vadd.f32 %v3193, %v3595
      %v3712 = vadd.f32 %v3194, %v3600
      %v3713 = vadd.f32 %v3195, %v3603
      %v3714 = vadd.f32 %v3196, %v3608
      %v3715 = vadd.f32 %v3197, %v3611
      %v3716 = vadd.f32 %v3198, %v3616
      %v3717 = vadd.f32 %v3199, %v3619
      %v3718 = vadd.f32 %v3200, %v3624
      %v3719 = vadd.f32 %v3201, %v3627
      %v3720 = vadd.f32 %v3202, %v3632
      %v3721 = vadd.f32 %v3203, %v3635
      %v3722 = vadd.f32 %v3204, %v3640
      %v3723 = vadd.f32 %v3205, %v3643
      %v3724 = vadd.f32 %v3206, %v3648
      %v3725 = vadd.f32 %v3207, %v3651
      %v3726 = vadd.f32 %v3208, %v3656
      %v3727 = vadd.f32 %v3209, %v3659
      %v3728 = vadd.f32 %v3210, %v3664
      %v3729 = vadd.f32 %v3211, %v3667
      %v3730 = vadd.f32 %v3212, %v3672
      %v3731 = vadd.f32 %v3213, %v3675
      %v3732 = vadd.f32 %v3214, %v3680
      %v3733 = vadd.f32 %v3215, %v3683
      %v3734 = vld [vmem:[%s206 + $0x18] sm:$0xf]
      %v3735 = vld [vmem:[%s206 + $0x1c] sm:$0xf]
      %v3736 = vld [vmem:[%s206 + $0x20] sm:$0xf]
      %v3737 = vld [vmem:[%s206 + $0x24] sm:$0xf]
      %v3738 = vld [vmem:[%s206 + $0x28] sm:$0xf]
      %v3739 = vld [vmem:[%s206 + $0x2c] sm:$0xf]
      %v3740 = vld [vmem:[%s206 + $0x30] sm:$0xf]
      %v3741 = vld [vmem:[%s206 + $0x34] sm:$0xf]
      %v3742 = vld [vmem:[%s206 + $0x38] sm:$0xf]
      %v3743 = vld [vmem:[%s206 + $0x3c] sm:$0xf]
      %v3744 = vld [vmem:[%s206 + $0x40] sm:$0xf]
      %v3745 = vld [vmem:[%s206 + $0x44] sm:$0xf]
      %v3746 = vld [vmem:[%s206 + $0x48] sm:$0xf]
      %v3747 = vld [vmem:[%s206 + $0x4c] sm:$0xf]
      %v3748 = vld [vmem:[%s206 + $0x50] sm:$0xf]
      %v3749 = vld [vmem:[%s206 + $0x54] sm:$0xf]
      %v3750 = vld [vmem:[%s206 + $0x58] sm:$0xf]
      %v3751 = vld [vmem:[%s206 + $0x5c] sm:$0xf]
      %v3752 = vld [vmem:[%s206 + $0x60] sm:$0xf]
      %v3753 = vld [vmem:[%s206 + $0x64] sm:$0xf]
      %v3754 = vld [vmem:[%s206 + $0x68] sm:$0xf]
      %v3755 = vld [vmem:[%s206 + $0x6c] sm:$0xf]
      %v3756 = vld [vmem:[%s206 + $0x70] sm:$0xf]
      %v3757 = vld [vmem:[%s206 + $0x74] sm:$0xf]
      %v3758 = vld [vmem:[%s206 + $0x78] sm:$0xf]
      %v3759 = vld [vmem:[%s206 + $0x7c] sm:$0xf]
      %v3760 = vld [vmem:[%s206 + $0x80] sm:$0xf]
      %v3761 = vld [vmem:[%s206 + $0x84] sm:$0xf]
      %v3762 = vld [vmem:[%s206 + $0x88] sm:$0xf]
      %v3763 = vld [vmem:[%s206 + $0x8c] sm:$0xf]
      %v3764 = vld [vmem:[%s206 + $0x90] sm:$0xf]
      %v3765 = vld [vmem:[%s206 + $0x94] sm:$0xf]
      %v3766 = vld [vmem:[%s206 + $0x98] sm:$0xf]
      %v3767 = vld [vmem:[%s206 + $0x9c] sm:$0xf]
      %v3768 = vld [vmem:[%s206 + $0xa0] sm:$0xf]
      %v3769 = vld [vmem:[%s206 + $0xa4] sm:$0xf]
      %v3770 = vld [vmem:[%s206 + $0xa8] sm:$0xf]
      %v3771 = vld [vmem:[%s206 + $0xac] sm:$0xf]
      %v3772 = vld [vmem:[%s206 + $0xb0] sm:$0xf]
      %v3773 = vld [vmem:[%s206 + $0xb4] sm:$0xf]
      %v3774 = vld [vmem:[%s206 + $0xb8] sm:$0xf]
      %v3775 = vld [vmem:[%s206 + $0xbc] sm:$0xf]
      %v3776 = vld [vmem:[%s206 + $0xc0] sm:$0xf]
      %v3777 = vld [vmem:[%s206 + $0xc4] sm:$0xf]
      %v3778 = vld [vmem:[%s206 + $0xc8] sm:$0xf]
      %v3779 = vld [vmem:[%s206 + $0xcc] sm:$0xf]
      %v3780 = vld [vmem:[%s206 + $0xd0] sm:$0xf]
      %v3781 = vld [vmem:[%s206 + $0xd4] sm:$0xf]
      %v3782 = vld [vmem:[%s206 + $0xd8] sm:$0x1]
      %s3783 = scalar_lea.vmem %s210, 28
      %v3784 = vld [vmem:[%s3783] sm:$0xf]
      %v3834 = vunpack.c.l.b16 %v3734
      %v3835 = vunpack.c.l.b16 %v3735
      %v3836 = vunpack.c.l.b16 %v3736
      %v3837 = vunpack.c.l.b16 %v3737
      %v3838 = vunpack.c.l.b16 %v3738
      %v3839 = vunpack.c.l.b16 %v3739
      %v3840 = vunpack.c.l.b16 %v3740
      %v3841 = vunpack.c.l.b16 %v3741
      %v3842 = vunpack.c.l.b16 %v3742
      %v3843 = vunpack.c.l.b16 %v3743
      %v3844 = vunpack.c.l.b16 %v3744
      %v3845 = vunpack.c.l.b16 %v3745
      %v3846 = vunpack.c.l.b16 %v3746
      %v3847 = vunpack.c.l.b16 %v3747
      %v3848 = vunpack.c.l.b16 %v3748
      %v3849 = vunpack.c.l.b16 %v3749
      %v3850 = vunpack.c.l.b16 %v3750
      %v3851 = vunpack.c.l.b16 %v3751
      %v3852 = vunpack.c.l.b16 %v3752
      %v3853 = vunpack.c.l.b16 %v3753
      %v3854 = vunpack.c.l.b16 %v3754
      %v3855 = vunpack.c.l.b16 %v3755
      %v3856 = vunpack.c.l.b16 %v3756
      %v3857 = vunpack.c.l.b16 %v3757
      %v3858 = vunpack.c.l.b16 %v3758
      %v3859 = vunpack.c.l.b16 %v3759
      %v3860 = vunpack.c.l.b16 %v3760
      %v3861 = vunpack.c.l.b16 %v3761
      %v3862 = vunpack.c.l.b16 %v3762
      %v3863 = vunpack.c.l.b16 %v3763
      %v3864 = vunpack.c.l.b16 %v3764
      %v3865 = vunpack.c.l.b16 %v3765
      %v3866 = vunpack.c.l.b16 %v3766
      %v3867 = vunpack.c.l.b16 %v3767
      %v3868 = vunpack.c.l.b16 %v3768
      %v3869 = vunpack.c.l.b16 %v3769
      %v3870 = vunpack.c.l.b16 %v3770
      %v3871 = vunpack.c.l.b16 %v3771
      %v3872 = vunpack.c.l.b16 %v3772
      %v3873 = vunpack.c.l.b16 %v3773
      %v3874 = vunpack.c.l.b16 %v3774
      %v3875 = vunpack.c.l.b16 %v3775
      %v3876 = vunpack.c.l.b16 %v3776
      %v3877 = vunpack.c.l.b16 %v3777
      %v3878 = vunpack.c.l.b16 %v3778
      %v3879 = vunpack.c.l.b16 %v3779
      %v3880 = vunpack.c.l.b16 %v3780
      %v3881 = vunpack.c.l.b16 %v3781
      %v3882 = vunpack.c.l.b16 %v3782
      %v3883 = vpack.c.b16 %v3835, %v3834
      %v3884 = vpack.c.b16 %v3837, %v3836
      %v3885 = vpack.c.b16 %v3839, %v3838
      %v3886 = vpack.c.b16 %v3841, %v3840
      %v3887 = vpack.c.b16 %v3843, %v3842
      %v3888 = vpack.c.b16 %v3845, %v3844
      %v3889 = vpack.c.b16 %v3847, %v3846
      %v3890 = vpack.c.b16 %v3849, %v3848
      %v3891 = vpack.c.b16 %v3851, %v3850
      %v3892 = vpack.c.b16 %v3853, %v3852
      %v3893 = vpack.c.b16 %v3855, %v3854
      %v3894 = vpack.c.b16 %v3857, %v3856
      %v3895 = vpack.c.b16 %v3859, %v3858
      %v3896 = vpack.c.b16 %v3861, %v3860
      %v3897 = vpack.c.b16 %v3863, %v3862
      %v3898 = vpack.c.b16 %v3865, %v3864
      %v3899 = vpack.c.b16 %v3867, %v3866
      %v3900 = vpack.c.b16 %v3869, %v3868
      %v3901 = vpack.c.b16 %v3871, %v3870
      %v3902 = vpack.c.b16 %v3873, %v3872
      %v3903 = vpack.c.b16 %v3875, %v3874
      %v3904 = vpack.c.b16 %v3877, %v3876
      %v3905 = vpack.c.b16 %v3879, %v3878
      %v3906 = vpack.c.b16 %v3881, %v3880
      %v3907 = vpack.c.b16 %v3882, %v3882
      %v3909 = vshrl.u32 %v3883, 16
      %v3911 = vshll.u32 %v3883, 16
      %v3913 = vrot.slane %v3911, 1
      %v3914 = vor.u32 %v3909, %v3913
      %v3916 = vshll.u32 %v3884, 16
      %v3918 = vrot.slane %v3916, 1
      %v3919 = vsel %vm398, %v3914, %v3918
      %v3920 = vshrl.u32 %v3884, 16
      %v3922 = vor.u32 %v3920, %v3918
      %v3924 = vshll.u32 %v3885, 16
      %v3926 = vrot.slane %v3924, 1
      %v3927 = vsel %vm398, %v3922, %v3926
      %v3928 = vshrl.u32 %v3885, 16
      %v3930 = vor.u32 %v3928, %v3926
      %v3932 = vshll.u32 %v3886, 16
      %v3934 = vrot.slane %v3932, 1
      %v3935 = vsel %vm398, %v3930, %v3934
      %v3936 = vshrl.u32 %v3886, 16
      %v3938 = vor.u32 %v3936, %v3934
      %v3940 = vshll.u32 %v3887, 16
      %v3942 = vrot.slane %v3940, 1
      %v3943 = vsel %vm398, %v3938, %v3942
      %v3944 = vshrl.u32 %v3887, 16
      %v3946 = vor.u32 %v3944, %v3942
      %v3948 = vshll.u32 %v3888, 16
      %v3950 = vrot.slane %v3948, 1
      %v3951 = vsel %vm398, %v3946, %v3950
      %v3952 = vshrl.u32 %v3888, 16
      %v3954 = vor.u32 %v3952, %v3950
      %v3956 = vshll.u32 %v3889, 16
      %v3958 = vrot.slane %v3956, 1
      %v3959 = vsel %vm398, %v3954, %v3958
      %v3960 = vshrl.u32 %v3889, 16
      %v3962 = vor.u32 %v3960, %v3958
      %v3964 = vshll.u32 %v3890, 16
      %v3966 = vrot.slane %v3964, 1
      %v3967 = vsel %vm398, %v3962, %v3966
      %v3968 = vshrl.u32 %v3890, 16
      %v3970 = vor.u32 %v3968, %v3966
      %v3972 = vshll.u32 %v3891, 16
      %v3974 = vrot.slane %v3972, 1
      %v3975 = vsel %vm398, %v3970, %v3974
      %v3976 = vshrl.u32 %v3891, 16
      %v3978 = vor.u32 %v3976, %v3974
      %v3980 = vshll.u32 %v3892, 16
      %v3982 = vrot.slane %v3980, 1
      %v3983 = vsel %vm398, %v3978, %v3982
      %v3984 = vshrl.u32 %v3892, 16
      %v3986 = vor.u32 %v3984, %v3982
      %v3988 = vshll.u32 %v3893, 16
      %v3990 = vrot.slane %v3988, 1
      %v3991 = vsel %vm398, %v3986, %v3990
      %v3992 = vshrl.u32 %v3893, 16
      %v3994 = vor.u32 %v3992, %v3990
      %v3996 = vshll.u32 %v3894, 16
      %v3998 = vrot.slane %v3996, 1
      %v3999 = vsel %vm398, %v3994, %v3998
      %v4000 = vshrl.u32 %v3894, 16
      %v4002 = vor.u32 %v4000, %v3998
      %v4004 = vshll.u32 %v3895, 16
      %v4006 = vrot.slane %v4004, 1
      %v4007 = vsel %vm398, %v4002, %v4006
      %v4008 = vshrl.u32 %v3895, 16
      %v4010 = vor.u32 %v4008, %v4006
      %v4012 = vshll.u32 %v3896, 16
      %v4014 = vrot.slane %v4012, 1
      %v4015 = vsel %vm398, %v4010, %v4014
      %v4016 = vshrl.u32 %v3896, 16
      %v4018 = vor.u32 %v4016, %v4014
      %v4020 = vshll.u32 %v3897, 16
      %v4022 = vrot.slane %v4020, 1
      %v4023 = vsel %vm398, %v4018, %v4022
      %v4024 = vshrl.u32 %v3897, 16
      %v4026 = vor.u32 %v4024, %v4022
      %v4028 = vshll.u32 %v3898, 16
      %v4030 = vrot.slane %v4028, 1
      %v4031 = vsel %vm398, %v4026, %v4030
      %v4032 = vshrl.u32 %v3898, 16
      %v4034 = vor.u32 %v4032, %v4030
      %v4036 = vshll.u32 %v3899, 16
      %v4038 = vrot.slane %v4036, 1
      %v4039 = vsel %vm398, %v4034, %v4038
      %v4040 = vshrl.u32 %v3899, 16
      %v4042 = vor.u32 %v4040, %v4038
      %v4044 = vshll.u32 %v3900, 16
      %v4046 = vrot.slane %v4044, 1
      %v4047 = vsel %vm398, %v4042, %v4046
      %v4048 = vshrl.u32 %v3900, 16
      %v4050 = vor.u32 %v4048, %v4046
      %v4052 = vshll.u32 %v3901, 16
      %v4054 = vrot.slane %v4052, 1
      %v4055 = vsel %vm398, %v4050, %v4054
      %v4056 = vshrl.u32 %v3901, 16
      %v4058 = vor.u32 %v4056, %v4054
      %v4060 = vshll.u32 %v3902, 16
      %v4062 = vrot.slane %v4060, 1
      %v4063 = vsel %vm398, %v4058, %v4062
      %v4064 = vshrl.u32 %v3902, 16
      %v4066 = vor.u32 %v4064, %v4062
      %v4068 = vshll.u32 %v3903, 16
      %v4070 = vrot.slane %v4068, 1
      %v4071 = vsel %vm398, %v4066, %v4070
      %v4072 = vshrl.u32 %v3903, 16
      %v4074 = vor.u32 %v4072, %v4070
      %v4076 = vshll.u32 %v3904, 16
      %v4078 = vrot.slane %v4076, 1
      %v4079 = vsel %vm398, %v4074, %v4078
      %v4080 = vshrl.u32 %v3904, 16
      %v4082 = vor.u32 %v4080, %v4078
      %v4084 = vshll.u32 %v3905, 16
      %v4086 = vrot.slane %v4084, 1
      %v4087 = vsel %vm398, %v4082, %v4086
      %v4088 = vshrl.u32 %v3905, 16
      %v4090 = vor.u32 %v4088, %v4086
      %v4092 = vshll.u32 %v3906, 16
      %v4094 = vrot.slane %v4092, 1
      %v4095 = vsel %vm398, %v4090, %v4094
      %v4096 = vshrl.u32 %v3906, 16
      %v4098 = vor.u32 %v4096, %v4094
      %v4100 = vshll.u32 %v3907, 16
      %v4102 = vrot.slane %v4100, 1
      %v4103 = vsel %vm398, %v4098, %v4102
      %v4105 = vsel %vm595, %v3919, 0
      %v4108 = vsel %vm595, %v3927, 0
      %v4111 = vsel %vm595, %v3935, 0
      %v4114 = vsel %vm595, %v3943, 0
      %v4117 = vsel %vm595, %v3951, 0
      %v4120 = vsel %vm595, %v3959, 0
      %v4123 = vsel %vm595, %v3967, 0
      %v4126 = vsel %vm595, %v3975, 0
      %v4129 = vsel %vm595, %v3983, 0
      %v4132 = vsel %vm595, %v3991, 0
      %v4135 = vsel %vm595, %v3999, 0
      %v4138 = vsel %vm595, %v4007, 0
      %v4141 = vsel %vm595, %v4015, 0
      %v4144 = vsel %vm595, %v4023, 0
      %v4147 = vsel %vm595, %v4031, 0
      %v4150 = vsel %vm595, %v4039, 0
      %v4153 = vsel %vm595, %v4047, 0
      %v4156 = vsel %vm595, %v4055, 0
      %v4159 = vsel %vm595, %v4063, 0
      %v4162 = vsel %vm595, %v4071, 0
      %v4165 = vsel %vm595, %v4079, 0
      %v4168 = vsel %vm595, %v4087, 0
      %v4171 = vsel %vm595, %v4095, 0
      %v4174 = vsel %vm595, %v4103, 0
      %v4177 = vsel %vm668, %v3784, 0
      %4179 = vmatprep.subr.bf16.mxu0 0
      %4180 = vmatpush1.bf16.msra.mxu0 0
      %4181 = vmatprep.subr.bf16.mxu0 0
      %4182 = vmatpush1.bf16.msra.mxu0 0
      %4183 = vmatprep.subr.bf16.mxu0 0
      %4184 = vmatpush1.bf16.msra.mxu0 0
      %4185 = vmatprep.subr.bf16.mxu0 0
      %4186 = vmatpush1.bf16.msra.mxu0 0
      %4187 = vmatprep.subr.bf16.mxu0 0
      %4188 = vmatpush1.bf16.msra.mxu0 0
      %4189 = vmatprep.subr.bf16.mxu0 0
      %4190 = vmatpush1.bf16.msra.mxu0 0
      %4191 = vmatprep.subr.bf16.mxu0 0
      %4192 = vmatpush1.bf16.msra.mxu0 0
      %4193 = vmatprep.subr.bf16.mxu0 0
      %4194 = vmatpush1.bf16.msra.mxu0 %v4177
      %4195 = vmatprep.subr.bf16.mxu0 0
      %4196 = vmatpush2.bf16.msra.mxu0 0
      %4197 = vmatprep.subr.bf16.mxu0 0
      %4198 = vmatpush2.bf16.msra.mxu0 0
      %4199 = vmatprep.subr.bf16.mxu0 0
      %4200 = vmatpush2.bf16.msra.mxu0 0
      %4201 = vmatprep.subr.bf16.mxu0 0
      %4202 = vmatpush2.bf16.msra.mxu0 0
      %4203 = vmatprep.subr.bf16.mxu0 0
      %4204 = vmatpush2.bf16.msra.mxu0 0
      %4205 = vmatprep.subr.bf16.mxu0 0
      %4206 = vmatpush2.bf16.msra.mxu0 0
      %4207 = vmatprep.subr.bf16.mxu0 0
      %4208 = vmatpush2.bf16.msra.mxu0 0
      %4209 = vmatprep.subr.bf16.mxu0 0
      %4210 = vmatpush2.bf16.msra.mxu0 0
      %4211 = vmatprep.mubr.bf16.mxu0 0
      %4212 = vmatmul.mubr.bf16.gmra.mxu0 %v4105
      %v4213 = vpop.f32.mrf.mxu0
      %v4214 = vadd.f32 0.0, %v4213
      %v4215 = vpop.f32.mrf.mxu0
      %v4216 = vpop.f32.mrf.mxu0
      %v4217 = vadd.f32 0.0, %v4216
      %v4218 = vpop.f32.mrf.mxu0
      %4219 = vmatprep.mubr.bf16.mxu0 0
      %4220 = vmatmul.mubr.bf16.gmra.mxu0 %v4108
      %v4221 = vpop.f32.mrf.mxu0
      %v4222 = vadd.f32 0.0, %v4221
      %v4223 = vpop.f32.mrf.mxu0
      %v4224 = vpop.f32.mrf.mxu0
      %v4225 = vadd.f32 0.0, %v4224
      %v4226 = vpop.f32.mrf.mxu0
      %4227 = vmatprep.mubr.bf16.mxu0 0
      %4228 = vmatmul.mubr.bf16.gmra.mxu0 %v4111
      %v4229 = vpop.f32.mrf.mxu0
      %v4230 = vadd.f32 0.0, %v4229
      %v4231 = vpop.f32.mrf.mxu0
      %v4232 = vpop.f32.mrf.mxu0
      %v4233 = vadd.f32 0.0, %v4232
      %v4234 = vpop.f32.mrf.mxu0
      %4235 = vmatprep.mubr.bf16.mxu0 0
      %4236 = vmatmul.mubr.bf16.gmra.mxu0 %v4114
      %v4237 = vpop.f32.mrf.mxu0
      %v4238 = vadd.f32 0.0, %v4237
      %v4239 = vpop.f32.mrf.mxu0
      %v4240 = vpop.f32.mrf.mxu0
      %v4241 = vadd.f32 0.0, %v4240
      %v4242 = vpop.f32.mrf.mxu0
      %4243 = vmatprep.mubr.bf16.mxu0 0
      %4244 = vmatmul.mubr.bf16.gmra.mxu0 %v4117
      %v4245 = vpop.f32.mrf.mxu0
      %v4246 = vadd.f32 0.0, %v4245
      %v4247 = vpop.f32.mrf.mxu0
      %v4248 = vpop.f32.mrf.mxu0
      %v4249 = vadd.f32 0.0, %v4248
      %v4250 = vpop.f32.mrf.mxu0
      %4251 = vmatprep.mubr.bf16.mxu0 0
      %4252 = vmatmul.mubr.bf16.gmra.mxu0 %v4120
      %v4253 = vpop.f32.mrf.mxu0
      %v4254 = vadd.f32 0.0, %v4253
      %v4255 = vpop.f32.mrf.mxu0
      %v4256 = vpop.f32.mrf.mxu0
      %v4257 = vadd.f32 0.0, %v4256
      %v4258 = vpop.f32.mrf.mxu0
      %4259 = vmatprep.mubr.bf16.mxu0 0
      %4260 = vmatmul.mubr.bf16.gmra.mxu0 %v4123
      %v4261 = vpop.f32.mrf.mxu0
      %v4262 = vadd.f32 0.0, %v4261
      %v4263 = vpop.f32.mrf.mxu0
      %v4264 = vpop.f32.mrf.mxu0
      %v4265 = vadd.f32 0.0, %v4264
      %v4266 = vpop.f32.mrf.mxu0
      %4267 = vmatprep.mubr.bf16.mxu0 0
      %4268 = vmatmul.mubr.bf16.gmra.mxu0 %v4126
      %v4269 = vpop.f32.mrf.mxu0
      %v4270 = vadd.f32 0.0, %v4269
      %v4271 = vpop.f32.mrf.mxu0
      %v4272 = vpop.f32.mrf.mxu0
      %v4273 = vadd.f32 0.0, %v4272
      %v4274 = vpop.f32.mrf.mxu0
      %4275 = vmatprep.mubr.bf16.mxu0 0
      %4276 = vmatmul.mubr.bf16.gmra.mxu0 %v4129
      %v4277 = vpop.f32.mrf.mxu0
      %v4278 = vadd.f32 0.0, %v4277
      %v4279 = vpop.f32.mrf.mxu0
      %v4280 = vpop.f32.mrf.mxu0
      %v4281 = vadd.f32 0.0, %v4280
      %v4282 = vpop.f32.mrf.mxu0
      %4283 = vmatprep.mubr.bf16.mxu0 0
      %4284 = vmatmul.mubr.bf16.gmra.mxu0 %v4132
      %v4285 = vpop.f32.mrf.mxu0
      %v4286 = vadd.f32 0.0, %v4285
      %v4287 = vpop.f32.mrf.mxu0
      %v4288 = vpop.f32.mrf.mxu0
      %v4289 = vadd.f32 0.0, %v4288
      %v4290 = vpop.f32.mrf.mxu0
      %4291 = vmatprep.mubr.bf16.mxu0 0
      %4292 = vmatmul.mubr.bf16.gmra.mxu0 %v4135
      %v4293 = vpop.f32.mrf.mxu0
      %v4294 = vadd.f32 0.0, %v4293
      %v4295 = vpop.f32.mrf.mxu0
      %v4296 = vpop.f32.mrf.mxu0
      %v4297 = vadd.f32 0.0, %v4296
      %v4298 = vpop.f32.mrf.mxu0
      %4299 = vmatprep.mubr.bf16.mxu0 0
      %4300 = vmatmul.mubr.bf16.gmra.mxu0 %v4138
      %v4301 = vpop.f32.mrf.mxu0
      %v4302 = vadd.f32 0.0, %v4301
      %v4303 = vpop.f32.mrf.mxu0
      %v4304 = vpop.f32.mrf.mxu0
      %v4305 = vadd.f32 0.0, %v4304
      %v4306 = vpop.f32.mrf.mxu0
      %4307 = vmatprep.mubr.bf16.mxu0 0
      %4308 = vmatmul.mubr.bf16.gmra.mxu0 %v4141
      %v4309 = vpop.f32.mrf.mxu0
      %v4310 = vadd.f32 0.0, %v4309
      %v4311 = vpop.f32.mrf.mxu0
      %v4312 = vpop.f32.mrf.mxu0
      %v4313 = vadd.f32 0.0, %v4312
      %v4314 = vpop.f32.mrf.mxu0
      %4315 = vmatprep.mubr.bf16.mxu0 0
      %4316 = vmatmul.mubr.bf16.gmra.mxu0 %v4144
      %v4317 = vpop.f32.mrf.mxu0
      %v4318 = vadd.f32 0.0, %v4317
      %v4319 = vpop.f32.mrf.mxu0
      %v4320 = vpop.f32.mrf.mxu0
      %v4321 = vadd.f32 0.0, %v4320
      %v4322 = vpop.f32.mrf.mxu0
      %4323 = vmatprep.mubr.bf16.mxu0 0
      %4324 = vmatmul.mubr.bf16.gmra.mxu0 %v4147
      %v4325 = vpop.f32.mrf.mxu0
      %v4326 = vadd.f32 0.0, %v4325
      %v4327 = vpop.f32.mrf.mxu0
      %v4328 = vpop.f32.mrf.mxu0
      %v4329 = vadd.f32 0.0, %v4328
      %v4330 = vpop.f32.mrf.mxu0
      %4331 = vmatprep.mubr.bf16.mxu0 0
      %4332 = vmatmul.mubr.bf16.gmra.mxu0 %v4150
      %v4333 = vpop.f32.mrf.mxu0
      %v4334 = vadd.f32 0.0, %v4333
      %v4335 = vpop.f32.mrf.mxu0
      %v4336 = vpop.f32.mrf.mxu0
      %v4337 = vadd.f32 0.0, %v4336
      %v4338 = vpop.f32.mrf.mxu0
      %4339 = vmatprep.mubr.bf16.mxu0 0
      %4340 = vmatmul.mubr.bf16.gmra.mxu0 %v4153
      %v4341 = vpop.f32.mrf.mxu0
      %v4342 = vadd.f32 0.0, %v4341
      %v4343 = vpop.f32.mrf.mxu0
      %v4344 = vpop.f32.mrf.mxu0
      %v4345 = vadd.f32 0.0, %v4344
      %v4346 = vpop.f32.mrf.mxu0
      %4347 = vmatprep.mubr.bf16.mxu0 0
      %4348 = vmatmul.mubr.bf16.gmra.mxu0 %v4156
      %v4349 = vpop.f32.mrf.mxu0
      %v4350 = vadd.f32 0.0, %v4349
      %v4351 = vpop.f32.mrf.mxu0
      %v4352 = vpop.f32.mrf.mxu0
      %v4353 = vadd.f32 0.0, %v4352
      %v4354 = vpop.f32.mrf.mxu0
      %4355 = vmatprep.mubr.bf16.mxu0 0
      %4356 = vmatmul.mubr.bf16.gmra.mxu0 %v4159
      %v4357 = vpop.f32.mrf.mxu0
      %v4358 = vadd.f32 0.0, %v4357
      %v4359 = vpop.f32.mrf.mxu0
      %v4360 = vpop.f32.mrf.mxu0
      %v4361 = vadd.f32 0.0, %v4360
      %v4362 = vpop.f32.mrf.mxu0
      %4363 = vmatprep.mubr.bf16.mxu0 0
      %4364 = vmatmul.mubr.bf16.gmra.mxu0 %v4162
      %v4365 = vpop.f32.mrf.mxu0
      %v4366 = vadd.f32 0.0, %v4365
      %v4367 = vpop.f32.mrf.mxu0
      %v4368 = vpop.f32.mrf.mxu0
      %v4369 = vadd.f32 0.0, %v4368
      %v4370 = vpop.f32.mrf.mxu0
      %4371 = vmatprep.mubr.bf16.mxu0 0
      %4372 = vmatmul.mubr.bf16.gmra.mxu0 %v4165
      %v4373 = vpop.f32.mrf.mxu0
      %v4374 = vadd.f32 0.0, %v4373
      %v4375 = vpop.f32.mrf.mxu0
      %v4376 = vpop.f32.mrf.mxu0
      %v4377 = vadd.f32 0.0, %v4376
      %v4378 = vpop.f32.mrf.mxu0
      %4379 = vmatprep.mubr.bf16.mxu0 0
      %4380 = vmatmul.mubr.bf16.gmra.mxu0 %v4168
      %v4381 = vpop.f32.mrf.mxu0
      %v4382 = vadd.f32 0.0, %v4381
      %v4383 = vpop.f32.mrf.mxu0
      %v4384 = vpop.f32.mrf.mxu0
      %v4385 = vadd.f32 0.0, %v4384
      %v4386 = vpop.f32.mrf.mxu0
      %4387 = vmatprep.mubr.bf16.mxu0 0
      %4388 = vmatmul.mubr.bf16.gmra.mxu0 %v4171
      %v4389 = vpop.f32.mrf.mxu0
      %v4390 = vadd.f32 0.0, %v4389
      %v4391 = vpop.f32.mrf.mxu0
      %v4392 = vpop.f32.mrf.mxu0
      %v4393 = vadd.f32 0.0, %v4392
      %v4394 = vpop.f32.mrf.mxu0
      %4395 = vmatprep.mubr.bf16.mxu0 0
      %4396 = vmatmul.mubr.bf16.gmra.mxu0 %v4174
      %v4397 = vpop.f32.mrf.mxu0
      %v4398 = vadd.f32 0.0, %v4397
      %v4399 = vpop.f32.mrf.mxu0
      %v4400 = vpop.f32.mrf.mxu0
      %v4401 = vadd.f32 0.0, %v4400
      %v4402 = vpop.f32.mrf.mxu0
      %4403 = vdwg.mxu0
      %v4404 = vadd.f32 %v3686, %v4214
      %v4405 = vadd.f32 %v3687, %v4217
      %v4406 = vadd.f32 %v3688, %v4222
      %v4407 = vadd.f32 %v3689, %v4225
      %v4408 = vadd.f32 %v3690, %v4230
      %v4409 = vadd.f32 %v3691, %v4233
      %v4410 = vadd.f32 %v3692, %v4238
      %v4411 = vadd.f32 %v3693, %v4241
      %v4412 = vadd.f32 %v3694, %v4246
      %v4413 = vadd.f32 %v3695, %v4249
      %v4414 = vadd.f32 %v3696, %v4254
      %v4415 = vadd.f32 %v3697, %v4257
      %v4416 = vadd.f32 %v3698, %v4262
      %v4417 = vadd.f32 %v3699, %v4265
      %v4418 = vadd.f32 %v3700, %v4270
      %v4419 = vadd.f32 %v3701, %v4273
      %v4420 = vadd.f32 %v3702, %v4278
      %v4421 = vadd.f32 %v3703, %v4281
      %v4422 = vadd.f32 %v3704, %v4286
      %v4423 = vadd.f32 %v3705, %v4289
      %v4424 = vadd.f32 %v3706, %v4294
      %v4425 = vadd.f32 %v3707, %v4297
      %v4426 = vadd.f32 %v3708, %v4302
      %v4427 = vadd.f32 %v3709, %v4305
      %v4428 = vadd.f32 %v3710, %v4310
      %v4429 = vadd.f32 %v3711, %v4313
      %v4430 = vadd.f32 %v3712, %v4318
      %v4431 = vadd.f32 %v3713, %v4321
      %v4432 = vadd.f32 %v3714, %v4326
      %v4433 = vadd.f32 %v3715, %v4329
      %v4434 = vadd.f32 %v3716, %v4334
      %v4435 = vadd.f32 %v3717, %v4337
      %v4436 = vadd.f32 %v3718, %v4342
      %v4437 = vadd.f32 %v3719, %v4345
      %v4438 = vadd.f32 %v3720, %v4350
      %v4439 = vadd.f32 %v3721, %v4353
      %v4440 = vadd.f32 %v3722, %v4358
      %v4441 = vadd.f32 %v3723, %v4361
      %v4442 = vadd.f32 %v3724, %v4366
      %v4443 = vadd.f32 %v3725, %v4369
      %v4444 = vadd.f32 %v3726, %v4374
      %v4445 = vadd.f32 %v3727, %v4377
      %v4446 = vadd.f32 %v3728, %v4382
      %v4447 = vadd.f32 %v3729, %v4385
      %v4448 = vadd.f32 %v3730, %v4390
      %v4449 = vadd.f32 %v3731, %v4393
      %v4450 = vadd.f32 %v3732, %v4398
      %v4451 = vadd.f32 %v3733, %v4401
      %v4452 = vld [vmem:[%s206 + $0x18] sm:$0xe]
      %s4453 = scalar_lea.vmem %s210, 32
      %v4454 = vld [vmem:[%s4453] sm:$0xf]
      %v4456 = vunpack.c.l.b16 %v4452
      %v4457 = vpack.c.b16 %v3835, %v4456
      %v4458 = vrot.slane %v4457, 1
      %v4459 = vrot.slane %v3884, 1
      %v4460 = vsel %vm1179, %v4458, %v4459
      %v4461 = vrot.slane %v3885, 1
      %v4462 = vsel %vm1179, %v4459, %v4461
      %v4463 = vrot.slane %v3886, 1
      %v4464 = vsel %vm1179, %v4461, %v4463
      %v4465 = vrot.slane %v3887, 1
      %v4466 = vsel %vm1179, %v4463, %v4465
      %v4467 = vrot.slane %v3888, 1
      %v4468 = vsel %vm1179, %v4465, %v4467
      %v4469 = vrot.slane %v3889, 1
      %v4470 = vsel %vm1179, %v4467, %v4469
      %v4471 = vrot.slane %v3890, 1
      %v4472 = vsel %vm1179, %v4469, %v4471
      %v4473 = vrot.slane %v3891, 1
      %v4474 = vsel %vm1179, %v4471, %v4473
      %v4475 = vrot.slane %v3892, 1
      %v4476 = vsel %vm1179, %v4473, %v4475
      %v4477 = vrot.slane %v3893, 1
      %v4478 = vsel %vm1179, %v4475, %v4477
      %v4479 = vrot.slane %v3894, 1
      %v4480 = vsel %vm1179, %v4477, %v4479
      %v4481 = vrot.slane %v3895, 1
      %v4482 = vsel %vm1179, %v4479, %v4481
      %v4483 = vrot.slane %v3896, 1
      %v4484 = vsel %vm1179, %v4481, %v4483
      %v4485 = vrot.slane %v3897, 1
      %v4486 = vsel %vm1179, %v4483, %v4485
      %v4487 = vrot.slane %v3898, 1
      %v4488 = vsel %vm1179, %v4485, %v4487
      %v4489 = vrot.slane %v3899, 1
      %v4490 = vsel %vm1179, %v4487, %v4489
      %v4491 = vrot.slane %v3900, 1
      %v4492 = vsel %vm1179, %v4489, %v4491
      %v4493 = vrot.slane %v3901, 1
      %v4494 = vsel %vm1179, %v4491, %v4493
      %v4495 = vrot.slane %v3902, 1
      %v4496 = vsel %vm1179, %v4493, %v4495
      %v4497 = vrot.slane %v3903, 1
      %v4498 = vsel %vm1179, %v4495, %v4497
      %v4499 = vrot.slane %v3904, 1
      %v4500 = vsel %vm1179, %v4497, %v4499
      %v4501 = vrot.slane %v3905, 1
      %v4502 = vsel %vm1179, %v4499, %v4501
      %v4503 = vrot.slane %v3906, 1
      %v4504 = vsel %vm1179, %v4501, %v4503
      %v4505 = vrot.slane %v3907, 1
      %v4506 = vsel %vm1179, %v4503, %v4505
      %v4508 = vsel %vm595, %v4460, 0
      %v4511 = vsel %vm595, %v4462, 0
      %v4514 = vsel %vm595, %v4464, 0
      %v4517 = vsel %vm595, %v4466, 0
      %v4520 = vsel %vm595, %v4468, 0
      %v4523 = vsel %vm595, %v4470, 0
      %v4526 = vsel %vm595, %v4472, 0
      %v4529 = vsel %vm595, %v4474, 0
      %v4532 = vsel %vm595, %v4476, 0
      %v4535 = vsel %vm595, %v4478, 0
      %v4538 = vsel %vm595, %v4480, 0
      %v4541 = vsel %vm595, %v4482, 0
      %v4544 = vsel %vm595, %v4484, 0
      %v4547 = vsel %vm595, %v4486, 0
      %v4550 = vsel %vm595, %v4488, 0
      %v4553 = vsel %vm595, %v4490, 0
      %v4556 = vsel %vm595, %v4492, 0
      %v4559 = vsel %vm595, %v4494, 0
      %v4562 = vsel %vm595, %v4496, 0
      %v4565 = vsel %vm595, %v4498, 0
      %v4568 = vsel %vm595, %v4500, 0
      %v4571 = vsel %vm595, %v4502, 0
      %v4574 = vsel %vm595, %v4504, 0
      %v4577 = vsel %vm595, %v4506, 0
      %v4580 = vsel %vm668, %v4454, 0
      %4582 = vmatprep.subr.bf16.mxu0 0
      %4583 = vmatpush1.bf16.msra.mxu0 0
      %4584 = vmatprep.subr.bf16.mxu0 0
      %4585 = vmatpush1.bf16.msra.mxu0 0
      %4586 = vmatprep.subr.bf16.mxu0 0
      %4587 = vmatpush1.bf16.msra.mxu0 0
      %4588 = vmatprep.subr.bf16.mxu0 0
      %4589 = vmatpush1.bf16.msra.mxu0 0
      %4590 = vmatprep.subr.bf16.mxu0 0
      %4591 = vmatpush1.bf16.msra.mxu0 0
      %4592 = vmatprep.subr.bf16.mxu0 0
      %4593 = vmatpush1.bf16.msra.mxu0 0
      %4594 = vmatprep.subr.bf16.mxu0 0
      %4595 = vmatpush1.bf16.msra.mxu0 0
      %4596 = vmatprep.subr.bf16.mxu0 0
      %4597 = vmatpush1.bf16.msra.mxu0 %v4580
      %4598 = vmatprep.subr.bf16.mxu0 0
      %4599 = vmatpush2.bf16.msra.mxu0 0
      %4600 = vmatprep.subr.bf16.mxu0 0
      %4601 = vmatpush2.bf16.msra.mxu0 0
      %4602 = vmatprep.subr.bf16.mxu0 0
      %4603 = vmatpush2.bf16.msra.mxu0 0
      %4604 = vmatprep.subr.bf16.mxu0 0
      %4605 = vmatpush2.bf16.msra.mxu0 0
      %4606 = vmatprep.subr.bf16.mxu0 0
      %4607 = vmatpush2.bf16.msra.mxu0 0
      %4608 = vmatprep.subr.bf16.mxu0 0
      %4609 = vmatpush2.bf16.msra.mxu0 0
      %4610 = vmatprep.subr.bf16.mxu0 0
      %4611 = vmatpush2.bf16.msra.mxu0 0
      %4612 = vmatprep.subr.bf16.mxu0 0
      %4613 = vmatpush2.bf16.msra.mxu0 0
      %4614 = vmatprep.mubr.bf16.mxu0 0
      %4615 = vmatmul.mubr.bf16.gmra.mxu0 %v4508
      %v4616 = vpop.f32.mrf.mxu0
      %v4617 = vadd.f32 0.0, %v4616
      %v4618 = vpop.f32.mrf.mxu0
      %v4619 = vpop.f32.mrf.mxu0
      %v4620 = vadd.f32 0.0, %v4619
      %v4621 = vpop.f32.mrf.mxu0
      %4622 = vmatprep.mubr.bf16.mxu0 0
      %4623 = vmatmul.mubr.bf16.gmra.mxu0 %v4511
      %v4624 = vpop.f32.mrf.mxu0
      %v4625 = vadd.f32 0.0, %v4624
      %v4626 = vpop.f32.mrf.mxu0
      %v4627 = vpop.f32.mrf.mxu0
      %v4628 = vadd.f32 0.0, %v4627
      %v4629 = vpop.f32.mrf.mxu0
      %4630 = vmatprep.mubr.bf16.mxu0 0
      %4631 = vmatmul.mubr.bf16.gmra.mxu0 %v4514
      %v4632 = vpop.f32.mrf.mxu0
      %v4633 = vadd.f32 0.0, %v4632
      %v4634 = vpop.f32.mrf.mxu0
      %v4635 = vpop.f32.mrf.mxu0
      %v4636 = vadd.f32 0.0, %v4635
      %v4637 = vpop.f32.mrf.mxu0
      %4638 = vmatprep.mubr.bf16.mxu0 0
      %4639 = vmatmul.mubr.bf16.gmra.mxu0 %v4517
      %v4640 = vpop.f32.mrf.mxu0
      %v4641 = vadd.f32 0.0, %v4640
      %v4642 = vpop.f32.mrf.mxu0
      %v4643 = vpop.f32.mrf.mxu0
      %v4644 = vadd.f32 0.0, %v4643
      %v4645 = vpop.f32.mrf.mxu0
      %4646 = vmatprep.mubr.bf16.mxu0 0
      %4647 = vmatmul.mubr.bf16.gmra.mxu0 %v4520
      %v4648 = vpop.f32.mrf.mxu0
      %v4649 = vadd.f32 0.0, %v4648
      %v4650 = vpop.f32.mrf.mxu0
      %v4651 = vpop.f32.mrf.mxu0
      %v4652 = vadd.f32 0.0, %v4651
      %v4653 = vpop.f32.mrf.mxu0
      %4654 = vmatprep.mubr.bf16.mxu0 0
      %4655 = vmatmul.mubr.bf16.gmra.mxu0 %v4523
      %v4656 = vpop.f32.mrf.mxu0
      %v4657 = vadd.f32 0.0, %v4656
      %v4658 = vpop.f32.mrf.mxu0
      %v4659 = vpop.f32.mrf.mxu0
      %v4660 = vadd.f32 0.0, %v4659
      %v4661 = vpop.f32.mrf.mxu0
      %4662 = vmatprep.mubr.bf16.mxu0 0
      %4663 = vmatmul.mubr.bf16.gmra.mxu0 %v4526
      %v4664 = vpop.f32.mrf.mxu0
      %v4665 = vadd.f32 0.0, %v4664
      %v4666 = vpop.f32.mrf.mxu0
      %v4667 = vpop.f32.mrf.mxu0
      %v4668 = vadd.f32 0.0, %v4667
      %v4669 = vpop.f32.mrf.mxu0
      %4670 = vmatprep.mubr.bf16.mxu0 0
      %4671 = vmatmul.mubr.bf16.gmra.mxu0 %v4529
      %v4672 = vpop.f32.mrf.mxu0
      %v4673 = vadd.f32 0.0, %v4672
      %v4674 = vpop.f32.mrf.mxu0
      %v4675 = vpop.f32.mrf.mxu0
      %v4676 = vadd.f32 0.0, %v4675
      %v4677 = vpop.f32.mrf.mxu0
      %4678 = vmatprep.mubr.bf16.mxu0 0
      %4679 = vmatmul.mubr.bf16.gmra.mxu0 %v4532
      %v4680 = vpop.f32.mrf.mxu0
      %v4681 = vadd.f32 0.0, %v4680
      %v4682 = vpop.f32.mrf.mxu0
      %v4683 = vpop.f32.mrf.mxu0
      %v4684 = vadd.f32 0.0, %v4683
      %v4685 = vpop.f32.mrf.mxu0
      %4686 = vmatprep.mubr.bf16.mxu0 0
      %4687 = vmatmul.mubr.bf16.gmra.mxu0 %v4535
      %v4688 = vpop.f32.mrf.mxu0
      %v4689 = vadd.f32 0.0, %v4688
      %v4690 = vpop.f32.mrf.mxu0
      %v4691 = vpop.f32.mrf.mxu0
      %v4692 = vadd.f32 0.0, %v4691
      %v4693 = vpop.f32.mrf.mxu0
      %4694 = vmatprep.mubr.bf16.mxu0 0
      %4695 = vmatmul.mubr.bf16.gmra.mxu0 %v4538
      %v4696 = vpop.f32.mrf.mxu0
      %v4697 = vadd.f32 0.0, %v4696
      %v4698 = vpop.f32.mrf.mxu0
      %v4699 = vpop.f32.mrf.mxu0
      %v4700 = vadd.f32 0.0, %v4699
      %v4701 = vpop.f32.mrf.mxu0
      %4702 = vmatprep.mubr.bf16.mxu0 0
      %4703 = vmatmul.mubr.bf16.gmra.mxu0 %v4541
      %v4704 = vpop.f32.mrf.mxu0
      %v4705 = vadd.f32 0.0, %v4704
      %v4706 = vpop.f32.mrf.mxu0
      %v4707 = vpop.f32.mrf.mxu0
      %v4708 = vadd.f32 0.0, %v4707
      %v4709 = vpop.f32.mrf.mxu0
      %4710 = vmatprep.mubr.bf16.mxu0 0
      %4711 = vmatmul.mubr.bf16.gmra.mxu0 %v4544
      %v4712 = vpop.f32.mrf.mxu0
      %v4713 = vadd.f32 0.0, %v4712
      %v4714 = vpop.f32.mrf.mxu0
      %v4715 = vpop.f32.mrf.mxu0
      %v4716 = vadd.f32 0.0, %v4715
      %v4717 = vpop.f32.mrf.mxu0
      %4718 = vmatprep.mubr.bf16.mxu0 0
      %4719 = vmatmul.mubr.bf16.gmra.mxu0 %v4547
      %v4720 = vpop.f32.mrf.mxu0
      %v4721 = vadd.f32 0.0, %v4720
      %v4722 = vpop.f32.mrf.mxu0
      %v4723 = vpop.f32.mrf.mxu0
      %v4724 = vadd.f32 0.0, %v4723
      %v4725 = vpop.f32.mrf.mxu0
      %4726 = vmatprep.mubr.bf16.mxu0 0
      %4727 = vmatmul.mubr.bf16.gmra.mxu0 %v4550
      %v4728 = vpop.f32.mrf.mxu0
      %v4729 = vadd.f32 0.0, %v4728
      %v4730 = vpop.f32.mrf.mxu0
      %v4731 = vpop.f32.mrf.mxu0
      %v4732 = vadd.f32 0.0, %v4731
      %v4733 = vpop.f32.mrf.mxu0
      %4734 = vmatprep.mubr.bf16.mxu0 0
      %4735 = vmatmul.mubr.bf16.gmra.mxu0 %v4553
      %v4736 = vpop.f32.mrf.mxu0
      %v4737 = vadd.f32 0.0, %v4736
      %v4738 = vpop.f32.mrf.mxu0
      %v4739 = vpop.f32.mrf.mxu0
      %v4740 = vadd.f32 0.0, %v4739
      %v4741 = vpop.f32.mrf.mxu0
      %4742 = vmatprep.mubr.bf16.mxu0 0
      %4743 = vmatmul.mubr.bf16.gmra.mxu0 %v4556
      %v4744 = vpop.f32.mrf.mxu0
      %v4745 = vadd.f32 0.0, %v4744
      %v4746 = vpop.f32.mrf.mxu0
      %v4747 = vpop.f32.mrf.mxu0
      %v4748 = vadd.f32 0.0, %v4747
      %v4749 = vpop.f32.mrf.mxu0
      %4750 = vmatprep.mubr.bf16.mxu0 0
      %4751 = vmatmul.mubr.bf16.gmra.mxu0 %v4559
      %v4752 = vpop.f32.mrf.mxu0
      %v4753 = vadd.f32 0.0, %v4752
      %v4754 = vpop.f32.mrf.mxu0
      %v4755 = vpop.f32.mrf.mxu0
      %v4756 = vadd.f32 0.0, %v4755
      %v4757 = vpop.f32.mrf.mxu0
      %4758 = vmatprep.mubr.bf16.mxu0 0
      %4759 = vmatmul.mubr.bf16.gmra.mxu0 %v4562
      %v4760 = vpop.f32.mrf.mxu0
      %v4761 = vadd.f32 0.0, %v4760
      %v4762 = vpop.f32.mrf.mxu0
      %v4763 = vpop.f32.mrf.mxu0
      %v4764 = vadd.f32 0.0, %v4763
      %v4765 = vpop.f32.mrf.mxu0
      %4766 = vmatprep.mubr.bf16.mxu0 0
      %4767 = vmatmul.mubr.bf16.gmra.mxu0 %v4565
      %v4768 = vpop.f32.mrf.mxu0
      %v4769 = vadd.f32 0.0, %v4768
      %v4770 = vpop.f32.mrf.mxu0
      %v4771 = vpop.f32.mrf.mxu0
      %v4772 = vadd.f32 0.0, %v4771
      %v4773 = vpop.f32.mrf.mxu0
      %4774 = vmatprep.mubr.bf16.mxu0 0
      %4775 = vmatmul.mubr.bf16.gmra.mxu0 %v4568
      %v4776 = vpop.f32.mrf.mxu0
      %v4777 = vadd.f32 0.0, %v4776
      %v4778 = vpop.f32.mrf.mxu0
      %v4779 = vpop.f32.mrf.mxu0
      %v4780 = vadd.f32 0.0, %v4779
      %v4781 = vpop.f32.mrf.mxu0
      %4782 = vmatprep.mubr.bf16.mxu0 0
      %4783 = vmatmul.mubr.bf16.gmra.mxu0 %v4571
      %v4784 = vpop.f32.mrf.mxu0
      %v4785 = vadd.f32 0.0, %v4784
      %v4786 = vpop.f32.mrf.mxu0
      %v4787 = vpop.f32.mrf.mxu0
      %v4788 = vadd.f32 0.0, %v4787
      %v4789 = vpop.f32.mrf.mxu0
      %4790 = vmatprep.mubr.bf16.mxu0 0
      %4791 = vmatmul.mubr.bf16.gmra.mxu0 %v4574
      %v4792 = vpop.f32.mrf.mxu0
      %v4793 = vadd.f32 0.0, %v4792
      %v4794 = vpop.f32.mrf.mxu0
      %v4795 = vpop.f32.mrf.mxu0
      %v4796 = vadd.f32 0.0, %v4795
      %v4797 = vpop.f32.mrf.mxu0
      %4798 = vmatprep.mubr.bf16.mxu0 0
      %4799 = vmatmul.mubr.bf16.gmra.mxu0 %v4577
      %v4800 = vpop.f32.mrf.mxu0
      %v4801 = vadd.f32 0.0, %v4800
      %v4802 = vpop.f32.mrf.mxu0
      %v4803 = vpop.f32.mrf.mxu0
      %v4804 = vadd.f32 0.0, %v4803
      %v4805 = vpop.f32.mrf.mxu0
      %4806 = vdwg.mxu0
      %v4807 = vadd.f32 %v4404, %v4617
      %v4808 = vadd.f32 %v4405, %v4620
      %v4809 = vadd.f32 %v4406, %v4625
      %v4810 = vadd.f32 %v4407, %v4628
      %v4811 = vadd.f32 %v4408, %v4633
      %v4812 = vadd.f32 %v4409, %v4636
      %v4813 = vadd.f32 %v4410, %v4641
      %v4814 = vadd.f32 %v4411, %v4644
      %v4815 = vadd.f32 %v4412, %v4649
      %v4816 = vadd.f32 %v4413, %v4652
      %v4817 = vadd.f32 %v4414, %v4657
      %v4818 = vadd.f32 %v4415, %v4660
      %v4819 = vadd.f32 %v4416, %v4665
      %v4820 = vadd.f32 %v4417, %v4668
      %v4821 = vadd.f32 %v4418, %v4673
      %v4822 = vadd.f32 %v4419, %v4676
      %v4823 = vadd.f32 %v4420, %v4681
      %v4824 = vadd.f32 %v4421, %v4684
      %v4825 = vadd.f32 %v4422, %v4689
      %v4826 = vadd.f32 %v4423, %v4692
      %v4827 = vadd.f32 %v4424, %v4697
      %v4828 = vadd.f32 %v4425, %v4700
      %v4829 = vadd.f32 %v4426, %v4705
      %v4830 = vadd.f32 %v4427, %v4708
      %v4831 = vadd.f32 %v4428, %v4713
      %v4832 = vadd.f32 %v4429, %v4716
      %v4833 = vadd.f32 %v4430, %v4721
      %v4834 = vadd.f32 %v4431, %v4724
      %v4835 = vadd.f32 %v4432, %v4729
      %v4836 = vadd.f32 %v4433, %v4732
      %v4837 = vadd.f32 %v4434, %v4737
      %v4838 = vadd.f32 %v4435, %v4740
      %v4839 = vadd.f32 %v4436, %v4745
      %v4840 = vadd.f32 %v4437, %v4748
      %v4841 = vadd.f32 %v4438, %v4753
      %v4842 = vadd.f32 %v4439, %v4756
      %v4843 = vadd.f32 %v4440, %v4761
      %v4844 = vadd.f32 %v4441, %v4764
      %v4845 = vadd.f32 %v4442, %v4769
      %v4846 = vadd.f32 %v4443, %v4772
      %v4847 = vadd.f32 %v4444, %v4777
      %v4848 = vadd.f32 %v4445, %v4780
      %v4849 = vadd.f32 %v4446, %v4785
      %v4850 = vadd.f32 %v4447, %v4788
      %v4851 = vadd.f32 %v4448, %v4793
      %v4852 = vadd.f32 %v4449, %v4796
      %v4853 = vadd.f32 %v4450, %v4801
      %v4854 = vadd.f32 %v4451, %v4804
      %v4855 = vld [vmem:[%s213] sm:$0x1]
      %v4857 = vlaneseq
      %v4858 = vshrl.u32 %v4857, 7
      %v4859 = vsub.s32 0, %v4858
      %v4860 = vrot.slane %v4855, %v4859
      %v4862 = vadd.f32 %v4807, %v4860
      %v4863 = vadd.f32 %v4808, %v4860
      %v4864 = vadd.f32 %v4809, %v4860
      %v4865 = vadd.f32 %v4810, %v4860
      %v4866 = vadd.f32 %v4811, %v4860
      %v4867 = vadd.f32 %v4812, %v4860
      %v4868 = vadd.f32 %v4813, %v4860
      %v4869 = vadd.f32 %v4814, %v4860
      %v4870 = vadd.f32 %v4815, %v4860
      %v4871 = vadd.f32 %v4816, %v4860
      %v4872 = vadd.f32 %v4817, %v4860
      %v4873 = vadd.f32 %v4818, %v4860
      %v4874 = vadd.f32 %v4819, %v4860
      %v4875 = vadd.f32 %v4820, %v4860
      %v4876 = vadd.f32 %v4821, %v4860
      %v4877 = vadd.f32 %v4822, %v4860
      %v4878 = vadd.f32 %v4823, %v4860
      %v4879 = vadd.f32 %v4824, %v4860
      %v4880 = vadd.f32 %v4825, %v4860
      %v4881 = vadd.f32 %v4826, %v4860
      %v4882 = vadd.f32 %v4827, %v4860
      %v4883 = vadd.f32 %v4828, %v4860
      %v4884 = vadd.f32 %v4829, %v4860
      %v4885 = vadd.f32 %v4830, %v4860
      %v4886 = vadd.f32 %v4831, %v4860
      %v4887 = vadd.f32 %v4832, %v4860
      %v4888 = vadd.f32 %v4833, %v4860
      %v4889 = vadd.f32 %v4834, %v4860
      %v4890 = vadd.f32 %v4835, %v4860
      %v4891 = vadd.f32 %v4836, %v4860
      %v4892 = vadd.f32 %v4837, %v4860
      %v4893 = vadd.f32 %v4838, %v4860
      %v4894 = vadd.f32 %v4839, %v4860
      %v4895 = vadd.f32 %v4840, %v4860
      %v4896 = vadd.f32 %v4841, %v4860
      %v4897 = vadd.f32 %v4842, %v4860
      %v4898 = vadd.f32 %v4843, %v4860
      %v4899 = vadd.f32 %v4844, %v4860
      %v4900 = vadd.f32 %v4845, %v4860
      %v4901 = vadd.f32 %v4846, %v4860
      %v4902 = vadd.f32 %v4847, %v4860
      %v4903 = vadd.f32 %v4848, %v4860
      %v4904 = vadd.f32 %v4849, %v4860
      %v4905 = vadd.f32 %v4850, %v4860
      %v4906 = vadd.f32 %v4851, %v4860
      %v4907 = vadd.f32 %v4852, %v4860
      %v4908 = vadd.f32 %v4853, %v4860
      %v4909 = vadd.f32 %v4854, %v4860
      %v4910 = vmul.f32 %v4862, 0.1
      %v4911 = vmul.f32 %v4863, 0.1
      %v4912 = vmul.f32 %v4864, 0.1
      %v4913 = vmul.f32 %v4865, 0.1
      %v4914 = vmul.f32 %v4866, 0.1
      %v4915 = vmul.f32 %v4867, 0.1
      %v4916 = vmul.f32 %v4868, 0.1
      %v4917 = vmul.f32 %v4869, 0.1
      %v4918 = vmul.f32 %v4870, 0.1
      %v4919 = vmul.f32 %v4871, 0.1
      %v4920 = vmul.f32 %v4872, 0.1
      %v4921 = vmul.f32 %v4873, 0.1
      %v4922 = vmul.f32 %v4874, 0.1
      %v4923 = vmul.f32 %v4875, 0.1
      %v4924 = vmul.f32 %v4876, 0.1
      %v4925 = vmul.f32 %v4877, 0.1
      %v4926 = vmul.f32 %v4878, 0.1
      %v4927 = vmul.f32 %v4879, 0.1
      %v4928 = vmul.f32 %v4880, 0.1
      %v4929 = vmul.f32 %v4881, 0.1
      %v4930 = vmul.f32 %v4882, 0.1
      %v4931 = vmul.f32 %v4883, 0.1
      %v4932 = vmul.f32 %v4884, 0.1
      %v4933 = vmul.f32 %v4885, 0.1
      %v4934 = vmul.f32 %v4886, 0.1
      %v4935 = vmul.f32 %v4887, 0.1
      %v4936 = vmul.f32 %v4888, 0.1
      %v4937 = vmul.f32 %v4889, 0.1
      %v4938 = vmul.f32 %v4890, 0.1
      %v4939 = vmul.f32 %v4891, 0.1
      %v4940 = vmul.f32 %v4892, 0.1
      %v4941 = vmul.f32 %v4893, 0.1
      %v4942 = vmul.f32 %v4894, 0.1
      %v4943 = vmul.f32 %v4895, 0.1
      %v4944 = vmul.f32 %v4896, 0.1
      %v4945 = vmul.f32 %v4897, 0.1
      %v4946 = vmul.f32 %v4898, 0.1
      %v4947 = vmul.f32 %v4899, 0.1
      %v4948 = vmul.f32 %v4900, 0.1
      %v4949 = vmul.f32 %v4901, 0.1
      %v4950 = vmul.f32 %v4902, 0.1
      %v4951 = vmul.f32 %v4903, 0.1
      %v4952 = vmul.f32 %v4904, 0.1
      %v4953 = vmul.f32 %v4905, 0.1
      %v4954 = vmul.f32 %v4906, 0.1
      %v4955 = vmul.f32 %v4907, 0.1
      %v4956 = vmul.f32 %v4908, 0.1
      %v4957 = vmul.f32 %v4909, 0.1
      %v4958 = vmax.f32 %v4862, %v4910
      %v4959 = vmax.f32 %v4863, %v4911
      %v4960 = vmax.f32 %v4864, %v4912
      %v4961 = vmax.f32 %v4865, %v4913
      %v4962 = vmax.f32 %v4866, %v4914
      %v4963 = vmax.f32 %v4867, %v4915
      %v4964 = vmax.f32 %v4868, %v4916
      %v4965 = vmax.f32 %v4869, %v4917
      %v4966 = vmax.f32 %v4870, %v4918
      %v4967 = vmax.f32 %v4871, %v4919
      %v4968 = vmax.f32 %v4872, %v4920
      %v4969 = vmax.f32 %v4873, %v4921
      %v4970 = vmax.f32 %v4874, %v4922
      %v4971 = vmax.f32 %v4875, %v4923
      %v4972 = vmax.f32 %v4876, %v4924
      %v4973 = vmax.f32 %v4877, %v4925
      %v4974 = vmax.f32 %v4878, %v4926
      %v4975 = vmax.f32 %v4879, %v4927
      %v4976 = vmax.f32 %v4880, %v4928
      %v4977 = vmax.f32 %v4881, %v4929
      %v4978 = vmax.f32 %v4882, %v4930
      %v4979 = vmax.f32 %v4883, %v4931
      %v4980 = vmax.f32 %v4884, %v4932
      %v4981 = vmax.f32 %v4885, %v4933
      %v4982 = vmax.f32 %v4886, %v4934
      %v4983 = vmax.f32 %v4887, %v4935
      %v4984 = vmax.f32 %v4888, %v4936
      %v4985 = vmax.f32 %v4889, %v4937
      %v4986 = vmax.f32 %v4890, %v4938
      %v4987 = vmax.f32 %v4891, %v4939
      %v4988 = vmax.f32 %v4892, %v4940
      %v4989 = vmax.f32 %v4893, %v4941
      %v4990 = vmax.f32 %v4894, %v4942
      %v4991 = vmax.f32 %v4895, %v4943
      %v4992 = vmax.f32 %v4896, %v4944
      %v4993 = vmax.f32 %v4897, %v4945
      %v4994 = vmax.f32 %v4898, %v4946
      %v4995 = vmax.f32 %v4899, %v4947
      %v4996 = vmax.f32 %v4900, %v4948
      %v4997 = vmax.f32 %v4901, %v4949
      %v4998 = vmax.f32 %v4902, %v4950
      %v4999 = vmax.f32 %v4903, %v4951
      %v5000 = vmax.f32 %v4904, %v4952
      %v5001 = vmax.f32 %v4905, %v4953
      %v5002 = vmax.f32 %v4906, %v4954
      %v5003 = vmax.f32 %v4907, %v4955
      %v5004 = vmax.f32 %v4908, %v4956
      %v5005 = vmax.f32 %v4909, %v4957
      %v5006 = vpack.c.bf16 %v4959, %v4958
      %v5007 = vpack.c.bf16 %v4961, %v4960
      %v5008 = vpack.c.bf16 %v4963, %v4962
      %v5009 = vpack.c.bf16 %v4965, %v4964
      %v5010 = vpack.c.bf16 %v4967, %v4966
      %v5011 = vpack.c.bf16 %v4969, %v4968
      %v5012 = vpack.c.bf16 %v4971, %v4970
      %v5013 = vpack.c.bf16 %v4973, %v4972
      %v5014 = vpack.c.bf16 %v4975, %v4974
      %v5015 = vpack.c.bf16 %v4977, %v4976
      %v5016 = vpack.c.bf16 %v4979, %v4978
      %v5017 = vpack.c.bf16 %v4981, %v4980
      %v5018 = vpack.c.bf16 %v4983, %v4982
      %v5019 = vpack.c.bf16 %v4985, %v4984
      %v5020 = vpack.c.bf16 %v4987, %v4986
      %v5021 = vpack.c.bf16 %v4989, %v4988
      %v5022 = vpack.c.bf16 %v4991, %v4990
      %v5023 = vpack.c.bf16 %v4993, %v4992
      %v5024 = vpack.c.bf16 %v4995, %v4994
      %v5025 = vpack.c.bf16 %v4997, %v4996
      %v5026 = vpack.c.bf16 %v4999, %v4998
      %v5027 = vpack.c.bf16 %v5001, %v5000
      %v5028 = vpack.c.bf16 %v5003, %v5002
      %v5029 = vpack.c.bf16 %v5005, %v5004
      %v5054 = vunpack.c.l.b16 %v5006
      %v5055 = vunpack.c.h.b16 %v5006
      %v5056 = vunpack.c.l.b16 %v5007
      %v5057 = vunpack.c.h.b16 %v5007
      %v5058 = vunpack.c.l.b16 %v5008
      %v5059 = vunpack.c.h.b16 %v5008
      %v5060 = vunpack.c.l.b16 %v5009
      %v5061 = vunpack.c.h.b16 %v5009
      %v5062 = vunpack.c.l.b16 %v5010
      %v5063 = vunpack.c.h.b16 %v5010
      %v5064 = vunpack.c.l.b16 %v5011
      %v5065 = vunpack.c.h.b16 %v5011
      %v5066 = vunpack.c.l.b16 %v5012
      %v5067 = vunpack.c.h.b16 %v5012
      %v5068 = vunpack.c.l.b16 %v5013
      %v5069 = vunpack.c.h.b16 %v5013
      %v5070 = vunpack.c.l.b16 %v5014
      %v5071 = vunpack.c.h.b16 %v5014
      %v5072 = vunpack.c.l.b16 %v5015
      %v5073 = vunpack.c.h.b16 %v5015
      %v5074 = vunpack.c.l.b16 %v5016
      %v5075 = vunpack.c.h.b16 %v5016
      %v5076 = vunpack.c.l.b16 %v5017
      %v5077 = vunpack.c.h.b16 %v5017
      %v5078 = vunpack.c.l.b16 %v5018
      %v5079 = vunpack.c.h.b16 %v5018
      %v5080 = vunpack.c.l.b16 %v5019
      %v5081 = vunpack.c.h.b16 %v5019
      %v5082 = vunpack.c.l.b16 %v5020
      %v5083 = vunpack.c.h.b16 %v5020
      %v5084 = vunpack.c.l.b16 %v5021
      %v5085 = vunpack.c.h.b16 %v5021
      %v5086 = vunpack.c.l.b16 %v5022
      %v5087 = vunpack.c.h.b16 %v5022
      %v5088 = vunpack.c.l.b16 %v5023
      %v5089 = vunpack.c.h.b16 %v5023
      %v5090 = vunpack.c.l.b16 %v5024
      %v5091 = vunpack.c.h.b16 %v5024
      %v5092 = vunpack.c.l.b16 %v5025
      %v5093 = vunpack.c.h.b16 %v5025
      %v5094 = vunpack.c.l.b16 %v5026
      %v5095 = vunpack.c.h.b16 %v5026
      %v5096 = vunpack.c.l.b16 %v5027
      %v5097 = vunpack.c.h.b16 %v5027
      %v5098 = vunpack.c.l.b16 %v5028
      %v5099 = vunpack.c.h.b16 %v5028
      %v5100 = vunpack.c.l.b16 %v5029
      %v5101 = vunpack.c.h.b16 %v5029
      %v5102 = vpack.c.b16 %v5054, %v5054
      %v5103 = vpack.c.b16 %v5055, %v5055
      %v5104 = vpack.c.b16 %v5056, %v5056
      %v5105 = vpack.c.b16 %v5057, %v5057
      %v5106 = vpack.c.b16 %v5058, %v5058
      %v5107 = vpack.c.b16 %v5059, %v5059
      %v5108 = vpack.c.b16 %v5060, %v5060
      %v5109 = vpack.c.b16 %v5061, %v5061
      %v5110 = vpack.c.b16 %v5062, %v5062
      %v5111 = vpack.c.b16 %v5063, %v5063
      %v5112 = vpack.c.b16 %v5064, %v5064
      %v5113 = vpack.c.b16 %v5065, %v5065
      %v5114 = vpack.c.b16 %v5066, %v5066
      %v5115 = vpack.c.b16 %v5067, %v5067
      %v5116 = vpack.c.b16 %v5068, %v5068
      %v5117 = vpack.c.b16 %v5069, %v5069
      %v5118 = vpack.c.b16 %v5070, %v5070
      %v5119 = vpack.c.b16 %v5071, %v5071
      %v5120 = vpack.c.b16 %v5072, %v5072
      %v5121 = vpack.c.b16 %v5073, %v5073
      %v5122 = vpack.c.b16 %v5074, %v5074
      %v5123 = vpack.c.b16 %v5075, %v5075
      %v5124 = vpack.c.b16 %v5076, %v5076
      %v5125 = vpack.c.b16 %v5077, %v5077
      %v5126 = vpack.c.b16 %v5078, %v5078
      %v5127 = vpack.c.b16 %v5079, %v5079
      %v5128 = vpack.c.b16 %v5080, %v5080
      %v5129 = vpack.c.b16 %v5081, %v5081
      %v5130 = vpack.c.b16 %v5082, %v5082
      %v5131 = vpack.c.b16 %v5083, %v5083
      %v5132 = vpack.c.b16 %v5084, %v5084
      %v5133 = vpack.c.b16 %v5085, %v5085
      %v5134 = vpack.c.b16 %v5086, %v5086
      %v5135 = vpack.c.b16 %v5087, %v5087
      %v5136 = vpack.c.b16 %v5088, %v5088
      %v5137 = vpack.c.b16 %v5089, %v5089
      %v5138 = vpack.c.b16 %v5090, %v5090
      %v5139 = vpack.c.b16 %v5091, %v5091
      %v5140 = vpack.c.b16 %v5092, %v5092
      %v5141 = vpack.c.b16 %v5093, %v5093
      %v5142 = vpack.c.b16 %v5094, %v5094
      %v5143 = vpack.c.b16 %v5095, %v5095
      %v5144 = vpack.c.b16 %v5096, %v5096
      %v5145 = vpack.c.b16 %v5097, %v5097
      %v5146 = vpack.c.b16 %v5098, %v5098
      %v5147 = vpack.c.b16 %v5099, %v5099
      %v5148 = vpack.c.b16 %v5100, %v5100
      %v5149 = vpack.c.b16 %v5101, %v5101
      %5198 = vst [vmem:[%s221] sm:$0xf] %v5102
      %5199 = vst [vmem:[%s221 + $0x4] sm:$0xf] %v5103
      %5200 = vst [vmem:[%s221 + $0x8] sm:$0xf] %v5104
      %5201 = vst [vmem:[%s221 + $0xc] sm:$0xf] %v5105
      %5202 = vst [vmem:[%s221 + $0x10] sm:$0xf] %v5106
      %5203 = vst [vmem:[%s221 + $0x14] sm:$0xf] %v5107
      %5204 = vst [vmem:[%s221 + $0x18] sm:$0xf] %v5108
      %5205 = vst [vmem:[%s221 + $0x1c] sm:$0xf] %v5109
      %5206 = vst [vmem:[%s221 + $0x20] sm:$0xf] %v5110
      %5207 = vst [vmem:[%s221 + $0x24] sm:$0xf] %v5111
      %5208 = vst [vmem:[%s221 + $0x28] sm:$0xf] %v5112
      %5209 = vst [vmem:[%s221 + $0x2c] sm:$0xf] %v5113
      %5210 = vst [vmem:[%s221 + $0x30] sm:$0xf] %v5114
      %5211 = vst [vmem:[%s221 + $0x34] sm:$0xf] %v5115
      %5212 = vst [vmem:[%s221 + $0x38] sm:$0xf] %v5116
      %5213 = vst [vmem:[%s221 + $0x3c] sm:$0xf] %v5117
      %5214 = vst [vmem:[%s221 + $0x40] sm:$0xf] %v5118
      %5215 = vst [vmem:[%s221 + $0x44] sm:$0xf] %v5119
      %5216 = vst [vmem:[%s221 + $0x48] sm:$0xf] %v5120
      %5217 = vst [vmem:[%s221 + $0x4c] sm:$0xf] %v5121
      %5218 = vst [vmem:[%s221 + $0x50] sm:$0xf] %v5122
      %5219 = vst [vmem:[%s221 + $0x54] sm:$0xf] %v5123
      %5220 = vst [vmem:[%s221 + $0x58] sm:$0xf] %v5124
      %5221 = vst [vmem:[%s221 + $0x5c] sm:$0xf] %v5125
      %5222 = vst [vmem:[%s221 + $0x60] sm:$0xf] %v5126
      %5223 = vst [vmem:[%s221 + $0x64] sm:$0xf] %v5127
      %5224 = vst [vmem:[%s221 + $0x68] sm:$0xf] %v5128
      %5225 = vst [vmem:[%s221 + $0x6c] sm:$0xf] %v5129
      %5226 = vst [vmem:[%s221 + $0x70] sm:$0xf] %v5130
      %5227 = vst [vmem:[%s221 + $0x74] sm:$0xf] %v5131
      %5228 = vst [vmem:[%s221 + $0x78] sm:$0xf] %v5132
      %5229 = vst [vmem:[%s221 + $0x7c] sm:$0xf] %v5133
      %5230 = vst [vmem:[%s221 + $0x80] sm:$0xf] %v5134
      %5231 = vst [vmem:[%s221 + $0x84] sm:$0xf] %v5135
      %5232 = vst [vmem:[%s221 + $0x88] sm:$0xf] %v5136
      %5233 = vst [vmem:[%s221 + $0x8c] sm:$0xf] %v5137
      %5234 = vst [vmem:[%s221 + $0x90] sm:$0xf] %v5138
      %5235 = vst [vmem:[%s221 + $0x94] sm:$0xf] %v5139
      %5236 = vst [vmem:[%s221 + $0x98] sm:$0xf] %v5140
      %5237 = vst [vmem:[%s221 + $0x9c] sm:$0xf] %v5141
      %5238 = vst [vmem:[%s221 + $0xa0] sm:$0xf] %v5142
      %5239 = vst [vmem:[%s221 + $0xa4] sm:$0xf] %v5143
      %5240 = vst [vmem:[%s221 + $0xa8] sm:$0xf] %v5144
      %5241 = vst [vmem:[%s221 + $0xac] sm:$0xf] %v5145
      %5242 = vst [vmem:[%s221 + $0xb0] sm:$0xf] %v5146
      %5243 = vst [vmem:[%s221 + $0xb4] sm:$0xf] %v5147
      %5244 = vst [vmem:[%s221 + $0xb8] sm:$0xf] %v5148
      %5245 = vst [vmem:[%s221 + $0xbc] sm:$0xf] %v5149
      %p5246 = scmp.lt.s32.totalorder %s18, 1
      %s5247 = scalar_select %p5246, %s18, 1
      %p5248 = scmp.lt.s32.totalorder %s19, 0
      %s5249 = scalar_select %p5248, %s19, 0
      %s5250 = smul.addr %s5247, 48
      %s5251 = sadd.s32 %s5249, %s5250
      %s5252 = smul.addr %s5251, 4
      %s5253 = scalar_lea.vmem %s3, %s5252
      // Predicated region
      $region33: #{basic_conv_forward.1} parent=31 // pred_check
        %p5254 = pneg %p124
      $region34: #{basic_conv_forward.1} parent=31 // pred_check_branch
        %5256 = sbr.rel (%p5254) target = $region36
      $region35: #{basic_conv_forward.1} parent=31 // pred_region
        _
      $region36: #{basic_conv_forward.1} parent=31 // pred_fallthru
        _
    $region32: #{basic_conv_forward.1} parent=5 // pred_fallthru
      _
    %p5257 = scmp.le.s32.totalorder 2, %s9
    // Predicated region
    $region37: #{basic_conv_forward.1} parent=5 // pred_check
      %p5258 = pneg %p5257
    $region38: #{basic_conv_forward.1} parent=5 // pred_check_branch
      %5260 = sbr.rel (%p5258) target = $region40
    $region39: #{basic_conv_forward.1} parent=5 // pred_region
      %s5261 = ssub.s32 %s9, 2
      // Predicated region
      $region41: #{basic_conv_forward.1} parent=39 // pred_check
        %p5262 = pneg %p130
      $region42: #{basic_conv_forward.1} parent=39 // pred_check_branch
        %5264 = sbr.rel (%p5262) target = $region44
      $region43: #{basic_conv_forward.1} parent=39 // pred_region
        %p5265 = scmp.lt.s32.totalorder %s20, 1
        %s5266 = scalar_select %p5265, %s20, 1
        %p5267 = scmp.lt.s32.totalorder %s21, 0
        %s5268 = scalar_select %p5267, %s21, 0
        %s5269 = smul.addr %s5266, 48
        %s5270 = sadd.s32 %s5268, %s5269
        %s5271 = smul.addr %s5270, 4
        %s5272 = scalar_lea.vmem %s3, %s5271
      $region44: #{basic_conv_forward.1} parent=39 // pred_fallthru
        _
    $region40: #{basic_conv_forward.1} parent=5 // pred_fallthru
      _
  $region6: #{basic_conv_forward.1} parent=0 // loop_footer
    %s13 = sadd.s32 1, %s9
  $region7: #{basic_conv_forward.1} parent=0 // loop_footer_branch
    %8 = sbr.rel target = $region3
  $region8: #{basic_conv_forward.1} parent=0 // loop_exit
    _

</llo_original>
